<compile_context>
chip_gen: v7x
topology: tpu7x:2x2x1
jax: 0.10.0
libtpu: 0.0.40
codegen_flags: <defaults>
</compile_context>

<pallas_src>
import functools

import jax
import jax.numpy as jnp
from jax.experimental import pallas as pl
from jax.experimental.pallas import tpu as pltpu

# ----------------------------------------------------------------------------
# Model hyper-parameters (small, deterministic)
# ----------------------------------------------------------------------------
B = 8          # batch
T_LEN = 16     # sequence length
C_IN = 8       # raw input channels
DIM = 128      # representation dim (nn.Linear(dim, dim) in the heads)
K_QUEUE = 256  # MoCo queue size (65536 in the paper; small here)
TEMP = 0.07    # temperature
ALPHA = 0.05   # seasonal loss weight
CLUSTERING = 0

# TODO(synk): PyTorch forward draws rand_idx = np.random.randint(0, T); fixed
# to 0 here for determinism.
RAND_IDX = 0

TF_LEN = T_LEN // 2 + 1   # rfft bins for a length-16 axis -> 9

# DFT-as-matmul replacement for jnp.fft.rfft along the (length-16) time axis:
# real[f] = sum_t x[t] cos(2*pi*f*t/T),  imag[f] = -sum_t x[t] sin(2*pi*f*t/T)
_t = jnp.arange(T_LEN, dtype=jnp.float32)[:, None]
_f = jnp.arange(TF_LEN, dtype=jnp.float32)[None, :]
_ANG = 2.0 * jnp.pi * _t * _f / T_LEN
DFT_COS = jnp.cos(_ANG)        # (T, Tf)
DFT_SIN = -jnp.sin(_ANG)       # (T, Tf)


# ----------------------------------------------------------------------------
# Pallas kernels
# ----------------------------------------------------------------------------
def _encoder_moco_kernel(x_ref, xsel_ref, ws_ref, bs_ref, wt_ref, bt_ref,
                         w1_ref, b1_ref, w2_ref, b2_ref, queue_ref,
                         seas_ref, loss_ref, *, inv_t, batch):
    """Fused seasonal encoder (+L2 norm) and trend encoder -> head -> InfoNCE.

    x_ref    : (2*B*T, C_in)  all timesteps of x_q then x_k (seasonal branch)
    xsel_ref : (2B, C_in)     the RAND_IDX timestep of x_q then x_k (trend branch)
    seas_ref : (2*B*T, DIM)   row-wise L2-normalized seasonal features
    loss_ref : (1, 1) SMEM    MoCo InfoNCE loss
    """
    # ---- seasonal branch: per-timestep linear + fused F.normalize(dim=-1) ----
    seas = (jnp.dot(x_ref[...], ws_ref[...], preferred_element_type=jnp.float32)
            + bs_ref[...])
    # x / max(||x||, 1e-12) == x * rsqrt(max(||x||^2, 1e-24))
    inv_n = jax.lax.rsqrt(
        jnp.maximum(jnp.sum(seas * seas, axis=-1, keepdims=True), 1e-24))
    seas_ref[...] = seas * inv_n

    # ---- trend branch on the 2B selected rows: encoder -> MLP head -> norm ----
    t = (jnp.dot(xsel_ref[...], wt_ref[...], preferred_element_type=jnp.float32)
         + bt_ref[...])
    h = jnp.maximum(
        jnp.dot(t, w1_ref[...], preferred_element_type=jnp.float32) + b1_ref[...],
        0.0)
    y = jnp.dot(h, w2_ref[...], preferred_element_type=jnp.float32) + b2_ref[...]
    inv_y = jax.lax.rsqrt(
        jnp.maximum(jnp.sum(y * y, axis=-1, keepdims=True), 1e-24))
    yn = y * inv_y                                          # (2B, dim): [q ; k]

    # ---- MoCo InfoNCE (cross entropy with label 0) ----
    q = yn[:batch]                                          # (B, dim)
    k = yn[batch:]                                          # (B, dim)
    l_pos = jnp.sum(q * k, axis=-1, keepdims=True) * inv_t              # (B, 1)
    l_neg = jnp.dot(q, queue_ref[...],
                    preferred_element_type=jnp.float32) * inv_t         # (B, K)
    m = jnp.maximum(jnp.max(l_neg, axis=-1, keepdims=True), l_pos)
    s = jnp.exp(l_pos - m) + jnp.sum(jnp.exp(l_neg - m), axis=-1, keepdims=True)
    lse = m + jnp.log(s)
    loss_ref[0, 0] = jnp.mean(lse - l_pos)


def _icl_kernel(z_ref, loss_ref, *, batch, shift, denom):
    """Lane-dense instance-contrastive loss over all (amp|phase, freq) groups.

    z_ref: (G*2B, DIM) with G = 2*Tf groups (amp bins then phase bins); rows
    within a group are the 2B batch entries [q_0..q_{B-1}, k_0..k_{B-1}].
    One gram matmul covers every group; cross-group pairs are masked out.
    """
    z = z_ref[...]
    sim = jax.lax.dot_general(z, z, (((1,), (1,)), ((), ())),
                              preferred_element_type=jnp.float32)   # (R, R)
    row = jax.lax.broadcasted_iota(jnp.int32, sim.shape, 0)
    col = jax.lax.broadcasted_iota(jnp.int32, sim.shape, 1)
    # same (loss, freq) group <=> high bits equal (group size 2B is a power of 2)
    same_group = (row >> shift) == (col >> shift)
    # dropping the diagonal (tril(-1)+triu(+1)) == -inf mask on the diagonal
    valid = jnp.logical_and(same_group, row != col)
    masked = jnp.where(valid, sim, jnp.float32(-1e30))
    m = jnp.max(masked, axis=-1, keepdims=True)
    lse = m + jnp.log(jnp.sum(jnp.exp(masked - m), axis=-1, keepdims=True))
    # positive pair for in-group index i is (i + B) mod 2B == flat column row^B
    pos_col = row ^ batch
    pos = jnp.sum(jnp.where(col == pos_col, sim, 0.0), axis=-1, keepdims=True)
    # each of the two ICL losses is a mean over Tf*2B rows; their sum is
    # (sum over all 2*Tf*2B rows) / (Tf*2B) == sum / denom.
    loss_ref[0, 0] = jnp.sum(lse - pos) / denom


# ----------------------------------------------------------------------------
# Pallas wrappers (single-block, no grid; scalar losses through SMEM)
# ----------------------------------------------------------------------------
def pallas_encoder_moco(x_all, x_sel, p, *, temperature, batch):
    n_rows = x_all.shape[0]
    dim = p["enc_ws"].shape[1]
    seas, loss = pl.pallas_call(
        functools.partial(_encoder_moco_kernel, inv_t=1.0 / temperature,
                          batch=batch),
        out_shape=(jax.ShapeDtypeStruct((n_rows, dim), jnp.float32),
                   jax.ShapeDtypeStruct((1, 1), jnp.float32)),
        in_specs=[pl.BlockSpec(memory_space=pltpu.MemorySpace.VMEM)] * 11,
        out_specs=(pl.BlockSpec(memory_space=pltpu.MemorySpace.VMEM),
                   pl.BlockSpec(memory_space=pltpu.MemorySpace.SMEM)),
    )(x_all, x_sel, p["enc_ws"], p["enc_bs"], p["enc_wt"], p["enc_bt"],
      p["head_w1"], p["head_b1"], p["head_w2"], p["head_b2"], p["queue"])
    return seas, loss[0, 0]


def pallas_seasonal_loss(z_flat, *, batch, tf_len):
    group = 2 * batch
    assert batch & (batch - 1) == 0, "batch must be a power of two (xor/shift trick)"
    shift = group.bit_length() - 1
    out = pl.pallas_call(
        functools.partial(_icl_kernel, batch=batch, shift=shift,
                          denom=float(tf_len * group)),
        out_shape=jax.ShapeDtypeStruct((1, 1), jnp.float32),
        in_specs=[pl.BlockSpec(memory_space=pltpu.MemorySpace.VMEM)],
        out_specs=pl.BlockSpec(memory_space=pltpu.MemorySpace.SMEM),
    )(z_flat)
    return out[0, 0]


# ----------------------------------------------------------------------------
# Model glue (plain JAX)
# ----------------------------------------------------------------------------
def init_params(key):
    ks = jax.random.split(key, 8)
    scale_in = 1.0 / jnp.sqrt(C_IN)
    scale_d = 1.0 / jnp.sqrt(DIM)
    params = {
        # simple deterministic encoder: per-timestep linear -> (trend, seasonal)
        "enc_wt": jax.random.normal(ks[0], (C_IN, DIM), jnp.float32) * scale_in,
        "enc_bt": jnp.zeros((1, DIM), jnp.float32),
        "enc_ws": jax.random.normal(ks[1], (C_IN, DIM), jnp.float32) * scale_in,
        "enc_bs": jnp.zeros((1, DIM), jnp.float32),
        # head_q (== head_k: params copied at init; momentum update is then a no-op)
        "head_w1": jax.random.normal(ks[2], (DIM, DIM), jnp.float32) * scale_d,
        "head_b1": jnp.zeros((1, DIM), jnp.float32),
        "head_w2": jax.random.normal(ks[3], (DIM, DIM), jnp.float32) * scale_d,
        "head_b2": jnp.zeros((1, DIM), jnp.float32),
    }
    # queue buffer: F.normalize(randn(dim, K), dim=0)
    q = jax.random.normal(ks[4], (DIM, K_QUEUE), jnp.float32)
    q = q / jnp.maximum(jnp.sqrt(jnp.sum(q * q, axis=0, keepdims=True)), 1e-12)
    params["queue"] = q
    return params


def _cost_forward(params, x_q, x_k, cluster_labels, loss_weight_matrix,
                  clustering):
    del cluster_labels, loss_weight_matrix  # only used when clustering != 0
    assert clustering == CLUSTERING == 0

    bt = B * T_LEN

    # Seasonal branch sees every timestep of both series; the trend branch only
    # ever needs the 2B rows at RAND_IDX, so they are passed separately and the
    # trend features never leave VMEM.
    x_all = jnp.concatenate(
        [x_q.reshape(bt, C_IN), x_k.reshape(bt, C_IN)], axis=0)      # (2*B*T, C_in)
    x_sel = jnp.concatenate(
        [x_q[:, RAND_IDX], x_k[:, RAND_IDX]], axis=0)                # (2B, C_in)

    # ---- kernel 1: encoder (+seasonal normalize) fused with MoCo head+InfoNCE ----
    seas_all, loss = pallas_encoder_moco(x_all, x_sel, params,
                                         temperature=TEMP, batch=B)
    # TODO(synk): _dequeue_and_enqueue / _momentum_update only mutate buffers
    # (and are identity at init); they do not affect the returned loss, so the
    # functional version omits them.

    # ---- seasonal branch: rfft replaced by an explicit DFT matmul ----
    seas_3d = seas_all.reshape(2 * B, T_LEN, DIM)       # [q batches ; k batches]
    real = jnp.einsum("ntd,tf->fnd", seas_3d, DFT_COS)  # (Tf, 2B, DIM), freq-major
    imag = jnp.einsum("ntd,tf->fnd", seas_3d, DFT_SIN)
    eps = 1e-6
    amp = jnp.sqrt((real + eps) ** 2 + (imag + eps) ** 2)
    # TODO(synk): arctan2 has no verified Mosaic lowering, so the phase stays in XLA.
    phase = jnp.arctan2(imag, real + eps)

    # group-major (amp bins then phase bins), lane-dense (2*Tf*2B, DIM) = (288, 128)
    z_flat = jnp.concatenate([amp, phase], axis=0).reshape(2 * TF_LEN * 2 * B, DIM)

    # ---- kernel 2: one lane-dense gram-matrix ICL loss over all groups ----
    seasonal_loss = pallas_seasonal_loss(z_flat, batch=B, tf_len=TF_LEN)
    return loss + ALPHA * (seasonal_loss / 2.0)


cost_forward = jax.jit(_cost_forward, static_argnums=(5,))


# ----------------------------------------------------------------------------
# Main
# ----------------------------------------------------------------------------
if __name__ == "__main__":
    key = jax.random.PRNGKey(0)
    k_params, k_xq, k_xk = jax.random.split(key, 3)

    params = init_params(k_params)
    x_q = jax.random.normal(k_xq, (B, T_LEN, C_IN), jnp.float32)
    x_k = jax.random.normal(k_xk, (B, T_LEN, C_IN), jnp.float32)
    cluster_labels = jnp.zeros((B, T_LEN, 1), jnp.float32)      # unused (clustering=0)
    loss_weight_matrix = jnp.ones((1, 4, 4), jnp.float32)       # unused (clustering=0)

    loss = cost_forward(params, x_q, x_k, cluster_labels,
                        loss_weight_matrix, CLUSTERING)
    loss = jax.block_until_ready(loss)
    assert jnp.isfinite(loss)
    print("KERNEL_OK")
</pallas_src>

<mosaic_0001>
module attributes {stable_mosaic.version = 11 : i64} {
  func.func @_encoder_moco_kernel(%arg0: memref<256x8xf32, #tpu.memory_space<vmem>>, %arg1: memref<16x8xf32, #tpu.memory_space<vmem>>, %arg2: memref<8x128xf32, #tpu.memory_space<vmem>>, %arg3: memref<1x128xf32, #tpu.memory_space<vmem>>, %arg4: memref<8x128xf32, #tpu.memory_space<vmem>>, %arg5: memref<1x128xf32, #tpu.memory_space<vmem>>, %arg6: memref<128x128xf32, #tpu.memory_space<vmem>>, %arg7: memref<1x128xf32, #tpu.memory_space<vmem>>, %arg8: memref<128x128xf32, #tpu.memory_space<vmem>>, %arg9: memref<1x128xf32, #tpu.memory_space<vmem>>, %arg10: memref<128x256xf32, #tpu.memory_space<vmem>>, %arg11: memref<256x128xf32, #tpu.memory_space<vmem>>, %arg12: memref<1x1xf32, #tpu.memory_space<smem>>) attributes {dimension_semantics = [], scalar_prefetch = 0 : i64, scratch_operands = 0 : i64, tpu.core_type = #tpu.core_type<tc>} {
    %c0 = arith.constant 0 : index
    %c0_0 = arith.constant 0 : index
    %0 = vector.load %arg0[%c0, %c0_0] : memref<256x8xf32, #tpu.memory_space<vmem>>, vector<256x8xf32>
    %c0_1 = arith.constant 0 : index
    %c0_2 = arith.constant 0 : index
    %1 = vector.load %arg2[%c0_1, %c0_2] : memref<8x128xf32, #tpu.memory_space<vmem>>, vector<8x128xf32>
    %cst = arith.constant dense<0.000000e+00> : vector<256x128xf32>
    %2 = tpu.matmul %0, %1, %cst {dimension_numbers = #tpu.dot_dimension_numbers<[1], [0], [0], [1], [0, 0, 1, 1], [], []>} : vector<256x8xf32>, vector<8x128xf32>, vector<256x128xf32> -> vector<256x128xf32>
    %c0_3 = arith.constant 0 : index
    %c0_4 = arith.constant 0 : index
    %3 = vector.load %arg3[%c0_3, %c0_4] : memref<1x128xf32, #tpu.memory_space<vmem>>, vector<1x128xf32>
    %4 = vector.broadcast %3 : vector<1x128xf32> to vector<256x128xf32>
    %5 = arith.addf %2, %4 : vector<256x128xf32>
    %6 = arith.mulf %5, %5 : vector<256x128xf32>
    %cst_5 = arith.constant dense<0.000000e+00> : vector<256xf32>
    %7 = vector.multi_reduction <add>, %6, %cst_5 [1] : vector<256x128xf32> to vector<256xf32>
    %8 = vector.shape_cast %7 : vector<256xf32> to vector<256x1xf32>
    %cst_6 = arith.constant 1.000000e-24 : f32
    %9 = vector.broadcast %cst_6 : f32 to vector<256x1xf32>
    %10 = arith.maximumf %8, %9 : vector<256x1xf32>
    %11 = math.rsqrt %10 : vector<256x1xf32>
    %12 = vector.broadcast %11 : vector<256x1xf32> to vector<256x128xf32>
    %13 = arith.mulf %5, %12 : vector<256x128xf32>
    %c0_7 = arith.constant 0 : index
    %c0_8 = arith.constant 0 : index
    %14 = vector.load %arg11[%c0_7, %c0_8] : memref<256x128xf32, #tpu.memory_space<vmem>>, vector<256x128xf32>
    tpu.vector_store %arg11[%c0_7, %c0_8], %13 {strides = array<i32>} : memref<256x128xf32, #tpu.memory_space<vmem>>, vector<256x128xf32>,
    %c0_9 = arith.constant 0 : index
    %c0_10 = arith.constant 0 : index
    %15 = vector.load %arg1[%c0_9, %c0_10] : memref<16x8xf32, #tpu.memory_space<vmem>>, vector<16x8xf32>
    %c0_11 = arith.constant 0 : index
    %c0_12 = arith.constant 0 : index
    %16 = vector.load %arg4[%c0_11, %c0_12] : memref<8x128xf32, #tpu.memory_space<vmem>>, vector<8x128xf32>
    %cst_13 = arith.constant dense<0.000000e+00> : vector<16x128xf32>
    %17 = tpu.matmul %15, %16, %cst_13 {dimension_numbers = #tpu.dot_dimension_numbers<[1], [0], [0], [1], [0, 0, 1, 1], [], []>} : vector<16x8xf32>, vector<8x128xf32>, vector<16x128xf32> -> vector<16x128xf32>
    %c0_14 = arith.constant 0 : index
    %c0_15 = arith.constant 0 : index
    %18 = vector.load %arg5[%c0_14, %c0_15] : memref<1x128xf32, #tpu.memory_space<vmem>>, vector<1x128xf32>
    %19 = vector.broadcast %18 : vector<1x128xf32> to vector<16x128xf32>
    %20 = arith.addf %17, %19 : vector<16x128xf32>
    %c0_16 = arith.constant 0 : index
    %c0_17 = arith.constant 0 : index
    %21 = vector.load %arg6[%c0_16, %c0_17] : memref<128x128xf32, #tpu.memory_space<vmem>>, vector<128x128xf32>
    %cst_18 = arith.constant dense<0.000000e+00> : vector<16x128xf32>
    %22 = tpu.matmul %20, %21, %cst_18 {dimension_numbers = #tpu.dot_dimension_numbers<[1], [0], [0], [1], [0, 0, 1, 1], [], []>} : vector<16x128xf32>, vector<128x128xf32>, vector<16x128xf32> -> vector<16x128xf32>
    %c0_19 = arith.constant 0 : index
    %c0_20 = arith.constant 0 : index
    %23 = vector.load %arg7[%c0_19, %c0_20] : memref<1x128xf32, #tpu.memory_space<vmem>>, vector<1x128xf32>
    %24 = vector.broadcast %23 : vector<1x128xf32> to vector<16x128xf32>
    %25 = arith.addf %22, %24 : vector<16x128xf32>
    %cst_21 = arith.constant 0.000000e+00 : f32
    %26 = vector.broadcast %cst_21 : f32 to vector<16x128xf32>
    %27 = arith.maximumf %25, %26 : vector<16x128xf32>
    %c0_22 = arith.constant 0 : index
    %c0_23 = arith.constant 0 : index
    %28 = vector.load %arg8[%c0_22, %c0_23] : memref<128x128xf32, #tpu.memory_space<vmem>>, vector<128x128xf32>
    %cst_24 = arith.constant dense<0.000000e+00> : vector<16x128xf32>
    %29 = tpu.matmul %27, %28, %cst_24 {dimension_numbers = #tpu.dot_dimension_numbers<[1], [0], [0], [1], [0, 0, 1, 1], [], []>} : vector<16x128xf32>, vector<128x128xf32>, vector<16x128xf32> -> vector<16x128xf32>
    %c0_25 = arith.constant 0 : index
    %c0_26 = arith.constant 0 : index
    %30 = vector.load %arg9[%c0_25, %c0_26] : memref<1x128xf32, #tpu.memory_space<vmem>>, vector<1x128xf32>
    %31 = vector.broadcast %30 : vector<1x128xf32> to vector<16x128xf32>
    %32 = arith.addf %29, %31 : vector<16x128xf32>
    %33 = arith.mulf %32, %32 : vector<16x128xf32>
    %cst_27 = arith.constant dense<0.000000e+00> : vector<16xf32>
    %34 = vector.multi_reduction <add>, %33, %cst_27 [1] : vector<16x128xf32> to vector<16xf32>
    %35 = vector.shape_cast %34 : vector<16xf32> to vector<16x1xf32>
    %cst_28 = arith.constant 1.000000e-24 : f32
    %36 = vector.broadcast %cst_28 : f32 to vector<16x1xf32>
    %37 = arith.maximumf %35, %36 : vector<16x1xf32>
    %38 = math.rsqrt %37 : vector<16x1xf32>
    %39 = vector.broadcast %38 : vector<16x1xf32> to vector<16x128xf32>
    %40 = arith.mulf %32, %39 : vector<16x128xf32>
    %41 = vector.extract_strided_slice %40 {offsets = [0, 0], sizes = [8, 128], strides = [1, 1]} : vector<16x128xf32> to vector<8x128xf32>
    %42 = vector.extract_strided_slice %40 {offsets = [8, 0], sizes = [8, 128], strides = [1, 1]} : vector<16x128xf32> to vector<8x128xf32>
    %43 = arith.mulf %41, %42 : vector<8x128xf32>
    %cst_29 = arith.constant dense<0.000000e+00> : vector<8xf32>
    %44 = vector.multi_reduction <add>, %43, %cst_29 [1] : vector<8x128xf32> to vector<8xf32>
    %45 = vector.shape_cast %44 : vector<8xf32> to vector<8x1xf32>
    %cst_30 = arith.constant 14.2857141 : f32
    %46 = vector.broadcast %cst_30 : f32 to vector<8x1xf32>
    %47 = arith.mulf %45, %46 : vector<8x1xf32>
    %c0_31 = arith.constant 0 : index
    %c0_32 = arith.constant 0 : index
    %48 = vector.load %arg10[%c0_31, %c0_32] : memref<128x256xf32, #tpu.memory_space<vmem>>, vector<128x256xf32>
    %cst_33 = arith.constant dense<0.000000e+00> : vector<8x256xf32>
    %49 = tpu.matmul %41, %48, %cst_33 {dimension_numbers = #tpu.dot_dimension_numbers<[1], [0], [0], [1], [0, 0, 1, 1], [], []>} : vector<8x128xf32>, vector<128x256xf32>, vector<8x256xf32> -> vector<8x256xf32>
    %cst_34 = arith.constant 14.2857141 : f32
    %50 = vector.broadcast %cst_34 : f32 to vector<8x256xf32>
    %51 = arith.mulf %49, %50 : vector<8x256xf32>
    %cst_35 = arith.constant dense<0xFF800000> : vector<8xf32>
    %52 = vector.multi_reduction <maximumf>, %51, %cst_35 [1] : vector<8x256xf32> to vector<8xf32>
    %53 = vector.shape_cast %52 : vector<8xf32> to vector<8x1xf32>
    %54 = arith.maximumf %53, %47 : vector<8x1xf32>
    %55 = arith.subf %47, %54 : vector<8x1xf32>
    %56 = math.exp %55 : vector<8x1xf32>
    %57 = vector.broadcast %54 : vector<8x1xf32> to vector<8x256xf32>
    %58 = arith.subf %51, %57 : vector<8x256xf32>
    %59 = math.exp %58 : vector<8x256xf32>
    %cst_36 = arith.constant dense<0.000000e+00> : vector<8xf32>
    %60 = vector.multi_reduction <add>, %59, %cst_36 [1] : vector<8x256xf32> to vector<8xf32>
    %61 = vector.shape_cast %60 : vector<8xf32> to vector<8x1xf32>
    %62 = arith.addf %56, %61 : vector<8x1xf32>
    %63 = math.log %62 : vector<8x1xf32>
    %64 = arith.addf %54, %63 : vector<8x1xf32>
    %65 = arith.subf %64, %47 : vector<8x1xf32>
    %66 = vector.shape_cast %65 : vector<8x1xf32> to vector<1x8x1xf32>
    %cst_37 = arith.constant dense<0.000000e+00> : vector<1xf32>
    %67 = vector.multi_reduction <add>, %66, %cst_37 [1, 2] : vector<1x8x1xf32> to vector<1xf32>
    %68 = vector.shape_cast %67 : vector<1xf32> to vector<1x1x1xf32>
    %69 = vector.extract %68[0, 0, 0] : f32 from vector<1x1x1xf32>
    %cst_38 = arith.constant 8.000000e+00 : f32
    %70 = arith.divf %69, %cst_38 : f32
    %c0_39 = arith.constant 0 : index
    %c0_40 = arith.constant 0 : index
    %71 = memref.load %arg12[%c0_39, %c0_40] : memref<1x1xf32, #tpu.memory_space<smem>>
    memref.store %70, %arg12[%c0_39, %c0_40] : memref<1x1xf32, #tpu.memory_space<smem>>
    return
  }
}

module attributes {stable_mosaic.version = 11 : i64} {
  func.func @_icl_kernel(%arg0: memref<288x128xf32, #tpu.memory_space<vmem>>, %arg1: memref<1x1xf32, #tpu.memory_space<smem>>) attributes {dimension_semantics = [], scalar_prefetch = 0 : i64, scratch_operands = 0 : i64, tpu.core_type = #tpu.core_type<tc>} {
    %c0 = arith.constant 0 : index
    %c0_0 = arith.constant 0 : index
    %0 = vector.load %arg0[%c0, %c0_0] : memref<288x128xf32, #tpu.memory_space<vmem>>, vector<288x128xf32>
    %cst = arith.constant dense<0.000000e+00> : vector<288x288xf32>
    %1 = tpu.matmul %0, %0, %cst {dimension_numbers = #tpu.dot_dimension_numbers<[1], [1], [0], [0], [0, 0, 1, 0], [], []>} : vector<288x128xf32>, vector<288x128xf32>, vector<288x288xf32> -> vector<288x288xf32>
    %2 = tpu.iota {dimensions = array<i32: 0>} : vector<288x288xi32>
    %3 = tpu.iota {dimensions = array<i32: 1>} : vector<288x288xi32>
    %c4_i32 = arith.constant 4 : i32
    %4 = vector.broadcast %c4_i32 : i32 to vector<288x288xi32>
    %5 = arith.shrsi %2, %4 : vector<288x288xi32>
    %c4_i32_1 = arith.constant 4 : i32
    %6 = vector.broadcast %c4_i32_1 : i32 to vector<288x288xi32>
    %7 = arith.shrsi %3, %6 : vector<288x288xi32>
    %8 = arith.cmpi eq, %5, %7 : vector<288x288xi32>
    %9 = arith.cmpi ne, %2, %3 : vector<288x288xi32>
    %10 = arith.andi %8, %9 : vector<288x288xi1>
    %cst_2 = arith.constant -1.000000e+30 : f32
    %11 = vector.broadcast %cst_2 : f32 to vector<288x288xf32>
    %12 = arith.select %10, %1, %11 : vector<288x288xi1>, vector<288x288xf32>
    %cst_3 = arith.constant dense<0xFF800000> : vector<288xf32>
    %13 = vector.multi_reduction <maximumf>, %12, %cst_3 [1] : vector<288x288xf32> to vector<288xf32>
    %14 = vector.shape_cast %13 : vector<288xf32> to vector<288x1xf32>
    %15 = vector.broadcast %14 : vector<288x1xf32> to vector<288x288xf32>
    %16 = arith.subf %12, %15 : vector<288x288xf32>
    %17 = math.exp %16 : vector<288x288xf32>
    %cst_4 = arith.constant dense<0.000000e+00> : vector<288xf32>
    %18 = vector.multi_reduction <add>, %17, %cst_4 [1] : vector<288x288xf32> to vector<288xf32>
    %19 = vector.shape_cast %18 : vector<288xf32> to vector<288x1xf32>
    %20 = math.log %19 : vector<288x1xf32>
    %21 = arith.addf %14, %20 : vector<288x1xf32>
    %c8_i32 = arith.constant 8 : i32
    %22 = vector.broadcast %c8_i32 : i32 to vector<288x288xi32>
    %23 = arith.xori %2, %22 : vector<288x288xi32>
    %24 = arith.cmpi eq, %3, %23 : vector<288x288xi32>
    %cst_5 = arith.constant 0.000000e+00 : f32
    %25 = vector.broadcast %cst_5 : f32 to vector<288x288xf32>
    %26 = arith.select %24, %1, %25 : vector<288x288xi1>, vector<288x288xf32>
    %cst_6 = arith.constant dense<0.000000e+00> : vector<288xf32>
    %27 = vector.multi_reduction <add>, %26, %cst_6 [1] : vector<288x288xf32> to vector<288xf32>
    %28 = vector.shape_cast %27 : vector<288xf32> to vector<288x1xf32>
    %29 = arith.subf %21, %28 : vector<288x1xf32>
    %30 = vector.shape_cast %29 : vector<288x1xf32> to vector<1x288x1xf32>
    %cst_7 = arith.constant dense<0.000000e+00> : vector<1xf32>
    %31 = vector.multi_reduction <add>, %30, %cst_7 [1, 2] : vector<1x288x1xf32> to vector<1xf32>
    %32 = vector.shape_cast %31 : vector<1xf32> to vector<1x1x1xf32>
    %33 = vector.extract %32[0, 0, 0] : f32 from vector<1x1x1xf32>
    %cst_8 = arith.constant 1.440000e+02 : f32
    %34 = arith.divf %33, %cst_8 : f32
    %c0_9 = arith.constant 0 : index
    %c0_10 = arith.constant 0 : index
    %35 = memref.load %arg1[%c0_9, %c0_10] : memref<1x1xf32, #tpu.memory_space<smem>>
    memref.store %34, %arg1[%c0_9, %c0_10] : memref<1x1xf32, #tpu.memory_space<smem>>
    return
  }
}

</mosaic_0001>

<llo_original>
// kernel: _cost_forward.2
$region0: #{_cost_forward.2}
  #allocation0 [shape = 'u32[]', space=smem, size = 0x4, offset = 0x4, fixed_abs, tag = 'smem constant byte address 0x4 - core index']
  #allocation1 [shape = 'u32[144,128]{1,0:T(1,128)}', space=vmem, size = 0x12000, scoped, tag = 'internal scratch']
  %s0 = inlined_call_operand.vmem [shape: f32[256,8], index: 0, kind: input, shape index: {}]
  %s1 = inlined_call_operand.vmem [shape: f32[16,8], index: 1, kind: input, shape index: {}]
  %s2 = inlined_call_operand.vmem [shape: f32[8,128], index: 2, kind: input, shape index: {}]
  %s3 = inlined_call_operand.vmem [shape: f32[1,128], index: 3, kind: input, shape index: {}]
  %s4 = inlined_call_operand.vmem [shape: f32[8,128], index: 4, kind: input, shape index: {}]
  %s5 = inlined_call_operand.vmem [shape: f32[1,128], index: 5, kind: input, shape index: {}]
  %s6 = inlined_call_operand.vmem [shape: f32[128,128], index: 6, kind: input, shape index: {}]
  %s7 = inlined_call_operand.vmem [shape: f32[1,128], index: 7, kind: input, shape index: {}]
  %s8 = inlined_call_operand.vmem [shape: f32[128,128], index: 8, kind: input, shape index: {}]
  %s9 = inlined_call_operand.vmem [shape: f32[1,128], index: 9, kind: input, shape index: {}]
  %s10 = inlined_call_operand.vmem [shape: f32[128,256], index: 10, kind: input, shape index: {}]
  %s11 = inlined_call_operand.vmem [shape: f32[256,128], index: 11, kind: output, shape index: {0}]
  %s12 = inlined_call_operand.hbm [shape: f32[1,1], index: 12, kind: output, shape index: {1}]
  %13 = xla_tuple %s11, %s12
  %s14 = sld [smem:[#allocation0]]
  $region62: #{_cost_forward.2} parent=0
    _
  %s16 = ssub.s32 1, %s14
  %s17 = scalar_select 0, %s16, %s14
  $region1: #{_cost_forward.2} parent=0
    #allocation2 [shape = 'u8[512]{0}', space=smem, size = 0x200, scoped, tag = 'output window, operand 1, single buffered']
    #allocation3 [shape = 's32[1]{0}', space=sflag, size = 0x4, scoped, tag = 'scoped memory for _cost_forward.2']
    %18 = vsyncpa [#allocation3], 0
    // Predicated region
    $region2: #{_cost_forward.2} parent=1 // pred_check
      _
    $region3: #{_cost_forward.2} parent=1 // pred_check_branch
      %20 = sbr.rel (0) target = $region5
    $region4: #{_cost_forward.2} parent=1 // pred_region
      _
    $region5: #{_cost_forward.2} parent=1 // pred_fallthru
      _
    // Predicated region
    $region6: #{_cost_forward.2} parent=1 // pred_check
      _
    $region7: #{_cost_forward.2} parent=1 // pred_check_branch
      %22 = sbr.rel (0) target = $region9
    $region8: #{_cost_forward.2} parent=1 // pred_region
      _
    $region9: #{_cost_forward.2} parent=1 // pred_fallthru
      _
    // Predicated region
    $region10: #{_cost_forward.2} parent=1 // pred_check
      _
    $region11: #{_cost_forward.2} parent=1 // pred_check_branch
      %24 = sbr.rel (0) target = $region13
    $region12: #{_cost_forward.2} parent=1 // pred_region
      _
    $region13: #{_cost_forward.2} parent=1 // pred_fallthru
      _
    // Predicated region
    $region14: #{_cost_forward.2} parent=1 // pred_check
      _
    $region15: #{_cost_forward.2} parent=1 // pred_check_branch
      %26 = sbr.rel (0) target = $region17
    $region16: #{_cost_forward.2} parent=1 // pred_region
      _
    $region17: #{_cost_forward.2} parent=1 // pred_fallthru
      _
    // Predicated region
    $region18: #{_cost_forward.2} parent=1 // pred_check
      _
    $region19: #{_cost_forward.2} parent=1 // pred_check_branch
      %28 = sbr.rel (0) target = $region21
    $region20: #{_cost_forward.2} parent=1 // pred_region
      _
    $region21: #{_cost_forward.2} parent=1 // pred_fallthru
      _
    // Predicated region
    $region22: #{_cost_forward.2} parent=1 // pred_check
      _
    $region23: #{_cost_forward.2} parent=1 // pred_check_branch
      %30 = sbr.rel (0) target = $region25
    $region24: #{_cost_forward.2} parent=1 // pred_region
      _
    $region25: #{_cost_forward.2} parent=1 // pred_fallthru
      _
    // Predicated region
    $region26: #{_cost_forward.2} parent=1 // pred_check
      _
    $region27: #{_cost_forward.2} parent=1 // pred_check_branch
      %32 = sbr.rel (0) target = $region29
    $region28: #{_cost_forward.2} parent=1 // pred_region
      _
    $region29: #{_cost_forward.2} parent=1 // pred_fallthru
      _
    // Predicated region
    $region30: #{_cost_forward.2} parent=1 // pred_check
      _
    $region31: #{_cost_forward.2} parent=1 // pred_check_branch
      %34 = sbr.rel (0) target = $region33
    $region32: #{_cost_forward.2} parent=1 // pred_region
      _
    $region33: #{_cost_forward.2} parent=1 // pred_fallthru
      _
    // Predicated region
    $region34: #{_cost_forward.2} parent=1 // pred_check
      _
    $region35: #{_cost_forward.2} parent=1 // pred_check_branch
      %36 = sbr.rel (0) target = $region37
    $region36: #{_cost_forward.2} parent=1 // pred_region
      _
    $region37: #{_cost_forward.2} parent=1 // pred_fallthru
      _
    // Predicated region
    $region38: #{_cost_forward.2} parent=1 // pred_check
      _
    $region39: #{_cost_forward.2} parent=1 // pred_check_branch
      %38 = sbr.rel (0) target = $region41
    $region40: #{_cost_forward.2} parent=1 // pred_region
      _
    $region41: #{_cost_forward.2} parent=1 // pred_fallthru
      _
    // Predicated region
    $region42: #{_cost_forward.2} parent=1 // pred_check
      _
    $region43: #{_cost_forward.2} parent=1 // pred_check_branch
      %40 = sbr.rel (0) target = $region45
    $region44: #{_cost_forward.2} parent=1 // pred_region
      _
    $region45: #{_cost_forward.2} parent=1 // pred_fallthru
      _
    %v41 = vld [vmem:[%s0] sm:$0xff]
    %v42 = vld [vmem:[%s0 + $0x8] sm:$0xff]
    %v43 = vld [vmem:[%s0 + $0x10] sm:$0xff]
    %v44 = vld [vmem:[%s0 + $0x18] sm:$0xff]
    %v45 = vld [vmem:[%s0 + $0x20] sm:$0xff]
    %v46 = vld [vmem:[%s0 + $0x28] sm:$0xff]
    %v47 = vld [vmem:[%s0 + $0x30] sm:$0xff]
    %v48 = vld [vmem:[%s0 + $0x38] sm:$0xff]
    %v49 = vld [vmem:[%s0 + $0x40] sm:$0xff]
    %v50 = vld [vmem:[%s0 + $0x48] sm:$0xff]
    %v51 = vld [vmem:[%s0 + $0x50] sm:$0xff]
    %v52 = vld [vmem:[%s0 + $0x58] sm:$0xff]
    %v53 = vld [vmem:[%s0 + $0x60] sm:$0xff]
    %v54 = vld [vmem:[%s0 + $0x68] sm:$0xff]
    %v55 = vld [vmem:[%s0 + $0x70] sm:$0xff]
    %v56 = vld [vmem:[%s0 + $0x78] sm:$0xff]
    %v57 = vld [vmem:[%s0 + $0x80] sm:$0xff]
    %v58 = vld [vmem:[%s0 + $0x88] sm:$0xff]
    %v59 = vld [vmem:[%s0 + $0x90] sm:$0xff]
    %v60 = vld [vmem:[%s0 + $0x98] sm:$0xff]
    %v61 = vld [vmem:[%s0 + $0xa0] sm:$0xff]
    %v62 = vld [vmem:[%s0 + $0xa8] sm:$0xff]
    %v63 = vld [vmem:[%s0 + $0xb0] sm:$0xff]
    %v64 = vld [vmem:[%s0 + $0xb8] sm:$0xff]
    %v65 = vld [vmem:[%s0 + $0xc0] sm:$0xff]
    %v66 = vld [vmem:[%s0 + $0xc8] sm:$0xff]
    %v67 = vld [vmem:[%s0 + $0xd0] sm:$0xff]
    %v68 = vld [vmem:[%s0 + $0xd8] sm:$0xff]
    %v69 = vld [vmem:[%s0 + $0xe0] sm:$0xff]
    %v70 = vld [vmem:[%s0 + $0xe8] sm:$0xff]
    %v71 = vld [vmem:[%s0 + $0xf0] sm:$0xff]
    %v72 = vld [vmem:[%s0 + $0xf8] sm:$0xff]
    %v73 = vld [vmem:[%s2] sm:$0xff]
    %v74 = vld [vmem:[%s3] sm:$0x1]
    %v76 = vlaneseq
    %v77 = vshrl.u32 %v76, 7
    %v78 = vsub.s32 0, %v77
    %v79 = vrot.slane %v74, %v78
    %vm81 = vcmask 64512
    %v83 = vsel %vm81, %v41, 0
    %v86 = vsel %vm81, %v42, 0
    %v89 = vsel %vm81, %v43, 0
    %v92 = vsel %vm81, %v44, 0
    %v95 = vsel %vm81, %v45, 0
    %v98 = vsel %vm81, %v46, 0
    %v101 = vsel %vm81, %v47, 0
    %v104 = vsel %vm81, %v48, 0
    %v107 = vsel %vm81, %v49, 0
    %v110 = vsel %vm81, %v50, 0
    %v113 = vsel %vm81, %v51, 0
    %v116 = vsel %vm81, %v52, 0
    %v119 = vsel %vm81, %v53, 0
    %v122 = vsel %vm81, %v54, 0
    %v125 = vsel %vm81, %v55, 0
    %v128 = vsel %vm81, %v56, 0
    %v131 = vsel %vm81, %v57, 0
    %v134 = vsel %vm81, %v58, 0
    %v137 = vsel %vm81, %v59, 0
    %v140 = vsel %vm81, %v60, 0
    %v143 = vsel %vm81, %v61, 0
    %v146 = vsel %vm81, %v62, 0
    %v149 = vsel %vm81, %v63, 0
    %v152 = vsel %vm81, %v64, 0
    %v155 = vsel %vm81, %v65, 0
    %v158 = vsel %vm81, %v66, 0
    %v161 = vsel %vm81, %v67, 0
    %v164 = vsel %vm81, %v68, 0
    %v167 = vsel %vm81, %v69, 0
    %v170 = vsel %vm81, %v70, 0
    %v173 = vsel %vm81, %v71, 0
    %v176 = vsel %vm81, %v72, 0
    %178 = vmatprep.subr.mxu0 0.0
    %179 = vmatpush1.msra.mxu0 %v73
    %180 = vmatprep.subr.mxu0 0.0
    %181 = vmatpush1.msra.mxu0 0.0
    %182 = vmatprep.subr.mxu0 0.0
    %183 = vmatpush1.msra.mxu0 0.0
    %184 = vmatprep.subr.mxu0 0.0
    %185 = vmatpush1.msra.mxu0 0.0
    %186 = vmatprep.subr.mxu0 0.0
    %187 = vmatpush1.msra.mxu0 0.0
    %188 = vmatprep.subr.mxu0 0.0
    %189 = vmatpush1.msra.mxu0 0.0
    %190 = vmatprep.subr.mxu0 0.0
    %191 = vmatpush1.msra.mxu0 0.0
    %192 = vmatprep.subr.mxu0 0.0
    %193 = vmatpush1.msra.mxu0 0.0
    %194 = vmatprep.subr.mxu0 0.0
    %195 = vmatpush1.msra.mxu0 0.0
    %196 = vmatprep.subr.mxu0 0.0
    %197 = vmatpush1.msra.mxu0 0.0
    %198 = vmatprep.subr.mxu0 0.0
    %199 = vmatpush1.msra.mxu0 0.0
    %200 = vmatprep.subr.mxu0 0.0
    %201 = vmatpush1.msra.mxu0 0.0
    %202 = vmatprep.subr.mxu0 0.0
    %203 = vmatpush1.msra.mxu0 0.0
    %204 = vmatprep.subr.mxu0 0.0
    %205 = vmatpush1.msra.mxu0 0.0
    %206 = vmatprep.subr.mxu0 0.0
    %207 = vmatpush1.msra.mxu0 0.0
    %208 = vmatprep.subr.mxu0 0.0
    %209 = vmatpush1.msra.mxu0 0.0
    %210 = vmatprep.subr.mxu0 0.0
    %211 = vmatpush1.msra.mxu0 0.0
    %212 = vmatprep.subr.mxu0 0.0
    %213 = vmatpush1.msra.mxu0 0.0
    %214 = vmatprep.subr.mxu0 0.0
    %215 = vmatpush1.msra.mxu0 0.0
    %216 = vmatprep.subr.mxu0 0.0
    %217 = vmatpush1.msra.mxu0 0.0
    %218 = vmatprep.subr.mxu0 0.0
    %219 = vmatpush1.msra.mxu0 0.0
    %220 = vmatprep.subr.mxu0 0.0
    %221 = vmatpush1.msra.mxu0 0.0
    %222 = vmatprep.subr.mxu0 0.0
    %223 = vmatpush1.msra.mxu0 0.0
    %224 = vmatprep.subr.mxu0 0.0
    %225 = vmatpush1.msra.mxu0 0.0
    %226 = vmatprep.subr.mxu0 0.0
    %227 = vmatpush1.msra.mxu0 0.0
    %228 = vmatprep.subr.mxu0 0.0
    %229 = vmatpush1.msra.mxu0 0.0
    %230 = vmatprep.subr.mxu0 0.0
    %231 = vmatpush1.msra.mxu0 0.0
    %232 = vmatprep.subr.mxu0 0.0
    %233 = vmatpush1.msra.mxu0 0.0
    %234 = vmatprep.subr.mxu0 0.0
    %235 = vmatpush1.msra.mxu0 0.0
    %236 = vmatprep.subr.mxu0 0.0
    %237 = vmatpush1.msra.mxu0 0.0
    %238 = vmatprep.subr.mxu0 0.0
    %239 = vmatpush1.msra.mxu0 0.0
    %240 = vmatprep.subr.mxu0 0.0
    %241 = vmatpush1.msra.mxu0 0.0
    %242 = vmatprep.mubr.f32.mxu0 0.0
    %243 = vmatmul.mubr.f32.gmra.mrb[0].mxu0 %v83
    %v244 = vpop.f32.mrb[0].mxu0
    %v245 = vadd.f32 %v79, %v244
    %v246 = vpop.f32.mrb[0].mxu0
    %247 = vmatprep.mubr.f32.mxu0 0.0
    %248 = vmatmul.mubr.f32.gmra.mrb[0].mxu0 %v86
    %v249 = vpop.f32.mrb[0].mxu0
    %v250 = vadd.f32 %v79, %v249
    %v251 = vpop.f32.mrb[0].mxu0
    %252 = vmatprep.mubr.f32.mxu0 0.0
    %253 = vmatmul.mubr.f32.gmra.mrb[0].mxu0 %v89
    %v254 = vpop.f32.mrb[0].mxu0
    %v255 = vadd.f32 %v79, %v254
    %v256 = vpop.f32.mrb[0].mxu0
    %257 = vmatprep.mubr.f32.mxu0 0.0
    %258 = vmatmul.mubr.f32.gmra.mrb[0].mxu0 %v92
    %v259 = vpop.f32.mrb[0].mxu0
    %v260 = vadd.f32 %v79, %v259
    %v261 = vpop.f32.mrb[0].mxu0
    %262 = vmatprep.mubr.f32.mxu0 0.0
    %263 = vmatmul.mubr.f32.gmra.mrb[0].mxu0 %v95
    %v264 = vpop.f32.mrb[0].mxu0
    %v265 = vadd.f32 %v79, %v264
    %v266 = vpop.f32.mrb[0].mxu0
    %267 = vmatprep.mubr.f32.mxu0 0.0
    %268 = vmatmul.mubr.f32.gmra.mrb[0].mxu0 %v98
    %v269 = vpop.f32.mrb[0].mxu0
    %v270 = vadd.f32 %v79, %v269
    %v271 = vpop.f32.mrb[0].mxu0
    %272 = vmatprep.mubr.f32.mxu0 0.0
    %273 = vmatmul.mubr.f32.gmra.mrb[0].mxu0 %v101
    %v274 = vpop.f32.mrb[0].mxu0
    %v275 = vadd.f32 %v79, %v274
    %v276 = vpop.f32.mrb[0].mxu0
    %277 = vmatprep.mubr.f32.mxu0 0.0
    %278 = vmatmul.mubr.f32.gmra.mrb[0].mxu0 %v104
    %v279 = vpop.f32.mrb[0].mxu0
    %v280 = vadd.f32 %v79, %v279
    %v281 = vpop.f32.mrb[0].mxu0
    %282 = vmatprep.mubr.f32.mxu0 0.0
    %283 = vmatmul.mubr.f32.gmra.mrb[0].mxu0 %v107
    %v284 = vpop.f32.mrb[0].mxu0
    %v285 = vadd.f32 %v79, %v284
    %v286 = vpop.f32.mrb[0].mxu0
    %287 = vmatprep.mubr.f32.mxu0 0.0
    %288 = vmatmul.mubr.f32.gmra.mrb[0].mxu0 %v110
    %v289 = vpop.f32.mrb[0].mxu0
    %v290 = vadd.f32 %v79, %v289
    %v291 = vpop.f32.mrb[0].mxu0
    %292 = vmatprep.mubr.f32.mxu0 0.0
    %293 = vmatmul.mubr.f32.gmra.mrb[0].mxu0 %v113
    %v294 = vpop.f32.mrb[0].mxu0
    %v295 = vadd.f32 %v79, %v294
    %v296 = vpop.f32.mrb[0].mxu0
    %297 = vmatprep.mubr.f32.mxu0 0.0
    %298 = vmatmul.mubr.f32.gmra.mrb[0].mxu0 %v116
    %v299 = vpop.f32.mrb[0].mxu0
    %v300 = vadd.f32 %v79, %v299
    %v301 = vpop.f32.mrb[0].mxu0
    %302 = vmatprep.mubr.f32.mxu0 0.0
    %303 = vmatmul.mubr.f32.gmra.mrb[0].mxu0 %v119
    %v304 = vpop.f32.mrb[0].mxu0
    %v305 = vadd.f32 %v79, %v304
    %v306 = vpop.f32.mrb[0].mxu0
    %307 = vmatprep.mubr.f32.mxu0 0.0
    %308 = vmatmul.mubr.f32.gmra.mrb[0].mxu0 %v122
    %v309 = vpop.f32.mrb[0].mxu0
    %v310 = vadd.f32 %v79, %v309
    %v311 = vpop.f32.mrb[0].mxu0
    %312 = vmatprep.mubr.f32.mxu0 0.0
    %313 = vmatmul.mubr.f32.gmra.mrb[0].mxu0 %v125
    %v314 = vpop.f32.mrb[0].mxu0
    %v315 = vadd.f32 %v79, %v314
    %v316 = vpop.f32.mrb[0].mxu0
    %317 = vmatprep.mubr.f32.mxu0 0.0
    %318 = vmatmul.mubr.f32.gmra.mrb[0].mxu0 %v128
    %v319 = vpop.f32.mrb[0].mxu0
    %v320 = vadd.f32 %v79, %v319
    %v321 = vpop.f32.mrb[0].mxu0
    %322 = vmatprep.mubr.f32.mxu0 0.0
    %323 = vmatmul.mubr.f32.gmra.mrb[0].mxu0 %v131
    %v324 = vpop.f32.mrb[0].mxu0
    %v325 = vadd.f32 %v79, %v324
    %v326 = vpop.f32.mrb[0].mxu0
    %327 = vmatprep.mubr.f32.mxu0 0.0
    %328 = vmatmul.mubr.f32.gmra.mrb[0].mxu0 %v134
    %v329 = vpop.f32.mrb[0].mxu0
    %v330 = vadd.f32 %v79, %v329
    %v331 = vpop.f32.mrb[0].mxu0
    %332 = vmatprep.mubr.f32.mxu0 0.0
    %333 = vmatmul.mubr.f32.gmra.mrb[0].mxu0 %v137
    %v334 = vpop.f32.mrb[0].mxu0
    %v335 = vadd.f32 %v79, %v334
    %v336 = vpop.f32.mrb[0].mxu0
    %337 = vmatprep.mubr.f32.mxu0 0.0
    %338 = vmatmul.mubr.f32.gmra.mrb[0].mxu0 %v140
    %v339 = vpop.f32.mrb[0].mxu0
    %v340 = vadd.f32 %v79, %v339
    %v341 = vpop.f32.mrb[0].mxu0
    %342 = vmatprep.mubr.f32.mxu0 0.0
    %343 = vmatmul.mubr.f32.gmra.mrb[0].mxu0 %v143
    %v344 = vpop.f32.mrb[0].mxu0
    %v345 = vadd.f32 %v79, %v344
    %v346 = vpop.f32.mrb[0].mxu0
    %347 = vmatprep.mubr.f32.mxu0 0.0
    %348 = vmatmul.mubr.f32.gmra.mrb[0].mxu0 %v146
    %v349 = vpop.f32.mrb[0].mxu0
    %v350 = vadd.f32 %v79, %v349
    %v351 = vpop.f32.mrb[0].mxu0
    %352 = vmatprep.mubr.f32.mxu0 0.0
    %353 = vmatmul.mubr.f32.gmra.mrb[0].mxu0 %v149
    %v354 = vpop.f32.mrb[0].mxu0
    %v355 = vadd.f32 %v79, %v354
    %v356 = vpop.f32.mrb[0].mxu0
    %357 = vmatprep.mubr.f32.mxu0 0.0
    %358 = vmatmul.mubr.f32.gmra.mrb[0].mxu0 %v152
    %v359 = vpop.f32.mrb[0].mxu0
    %v360 = vadd.f32 %v79, %v359
    %v361 = vpop.f32.mrb[0].mxu0
    %362 = vmatprep.mubr.f32.mxu0 0.0
    %363 = vmatmul.mubr.f32.gmra.mrb[0].mxu0 %v155
    %v364 = vpop.f32.mrb[0].mxu0
    %v365 = vadd.f32 %v79, %v364
    %v366 = vpop.f32.mrb[0].mxu0
    %367 = vmatprep.mubr.f32.mxu0 0.0
    %368 = vmatmul.mubr.f32.gmra.mrb[0].mxu0 %v158
    %v369 = vpop.f32.mrb[0].mxu0
    %v370 = vadd.f32 %v79, %v369
    %v371 = vpop.f32.mrb[0].mxu0
    %372 = vmatprep.mubr.f32.mxu0 0.0
    %373 = vmatmul.mubr.f32.gmra.mrb[0].mxu0 %v161
    %v374 = vpop.f32.mrb[0].mxu0
    %v375 = vadd.f32 %v79, %v374
    %v376 = vpop.f32.mrb[0].mxu0
    %377 = vmatprep.mubr.f32.mxu0 0.0
    %378 = vmatmul.mubr.f32.gmra.mrb[0].mxu0 %v164
    %v379 = vpop.f32.mrb[0].mxu0
    %v380 = vadd.f32 %v79, %v379
    %v381 = vpop.f32.mrb[0].mxu0
    %382 = vmatprep.mubr.f32.mxu0 0.0
    %383 = vmatmul.mubr.f32.gmra.mrb[0].mxu0 %v167
    %v384 = vpop.f32.mrb[0].mxu0
    %v385 = vadd.f32 %v79, %v384
    %v386 = vpop.f32.mrb[0].mxu0
    %387 = vmatprep.mubr.f32.mxu0 0.0
    %388 = vmatmul.mubr.f32.gmra.mrb[0].mxu0 %v170
    %v389 = vpop.f32.mrb[0].mxu0
    %v390 = vadd.f32 %v79, %v389
    %v391 = vpop.f32.mrb[0].mxu0
    %392 = vmatprep.mubr.f32.mxu0 0.0
    %393 = vmatmul.mubr.f32.gmra.mrb[0].mxu0 %v173
    %v394 = vpop.f32.mrb[0].mxu0
    %v395 = vadd.f32 %v79, %v394
    %v396 = vpop.f32.mrb[0].mxu0
    %397 = vmatprep.mubr.f32.mxu0 0.0
    %398 = vmatmul.mubr.f32.gmra.mrb[0].mxu0 %v176
    %v399 = vpop.f32.mrb[0].mxu0
    %v400 = vadd.f32 %v79, %v399
    %v401 = vpop.f32.mrb[0].mxu0
    %402 = vdwg.mxu0
    %v403 = vmul.f32 %v245, %v245
    %v404 = vmul.f32 %v250, %v250
    %v405 = vmul.f32 %v255, %v255
    %v406 = vmul.f32 %v260, %v260
    %v407 = vmul.f32 %v265, %v265
    %v408 = vmul.f32 %v270, %v270
    %v409 = vmul.f32 %v275, %v275
    %v410 = vmul.f32 %v280, %v280
    %v411 = vmul.f32 %v285, %v285
    %v412 = vmul.f32 %v290, %v290
    %v413 = vmul.f32 %v295, %v295
    %v414 = vmul.f32 %v300, %v300
    %v415 = vmul.f32 %v305, %v305
    %v416 = vmul.f32 %v310, %v310
    %v417 = vmul.f32 %v315, %v315
    %v418 = vmul.f32 %v320, %v320
    %v419 = vmul.f32 %v325, %v325
    %v420 = vmul.f32 %v330, %v330
    %v421 = vmul.f32 %v335, %v335
    %v422 = vmul.f32 %v340, %v340
    %v423 = vmul.f32 %v345, %v345
    %v424 = vmul.f32 %v350, %v350
    %v425 = vmul.f32 %v355, %v355
    %v426 = vmul.f32 %v360, %v360
    %v427 = vmul.f32 %v365, %v365
    %v428 = vmul.f32 %v370, %v370
    %v429 = vmul.f32 %v375, %v375
    %v430 = vmul.f32 %v380, %v380
    %v431 = vmul.f32 %v385, %v385
    %v432 = vmul.f32 %v390, %v390
    %v433 = vmul.f32 %v395, %v395
    %v434 = vmul.f32 %v400, %v400
    %435 = vadd.xlane.f32.xlu0 %v403
    %v436 = vpop.xlane.xlu0 %435
    %437 = vadd.xlane.f32.xlu0 %v404
    %v438 = vpop.xlane.xlu0 %437
    %439 = vadd.xlane.f32.xlu0 %v405
    %v440 = vpop.xlane.xlu0 %439
    %441 = vadd.xlane.f32.xlu0 %v406
    %v442 = vpop.xlane.xlu0 %441
    %443 = vadd.xlane.f32.xlu0 %v407
    %v444 = vpop.xlane.xlu0 %443
    %445 = vadd.xlane.f32.xlu0 %v408
    %v446 = vpop.xlane.xlu0 %445
    %447 = vadd.xlane.f32.xlu0 %v409
    %v448 = vpop.xlane.xlu0 %447
    %449 = vadd.xlane.f32.xlu0 %v410
    %v450 = vpop.xlane.xlu0 %449
    %451 = vadd.xlane.f32.xlu0 %v411
    %v452 = vpop.xlane.xlu0 %451
    %453 = vadd.xlane.f32.xlu0 %v412
    %v454 = vpop.xlane.xlu0 %453
    %455 = vadd.xlane.f32.xlu0 %v413
    %v456 = vpop.xlane.xlu0 %455
    %457 = vadd.xlane.f32.xlu0 %v414
    %v458 = vpop.xlane.xlu0 %457
    %459 = vadd.xlane.f32.xlu0 %v415
    %v460 = vpop.xlane.xlu0 %459
    %461 = vadd.xlane.f32.xlu0 %v416
    %v462 = vpop.xlane.xlu0 %461
    %463 = vadd.xlane.f32.xlu0 %v417
    %v464 = vpop.xlane.xlu0 %463
    %465 = vadd.xlane.f32.xlu0 %v418
    %v466 = vpop.xlane.xlu0 %465
    %467 = vadd.xlane.f32.xlu0 %v419
    %v468 = vpop.xlane.xlu0 %467
    %469 = vadd.xlane.f32.xlu0 %v420
    %v470 = vpop.xlane.xlu0 %469
    %471 = vadd.xlane.f32.xlu0 %v421
    %v472 = vpop.xlane.xlu0 %471
    %473 = vadd.xlane.f32.xlu0 %v422
    %v474 = vpop.xlane.xlu0 %473
    %475 = vadd.xlane.f32.xlu0 %v423
    %v476 = vpop.xlane.xlu0 %475
    %477 = vadd.xlane.f32.xlu0 %v424
    %v478 = vpop.xlane.xlu0 %477
    %479 = vadd.xlane.f32.xlu0 %v425
    %v480 = vpop.xlane.xlu0 %479
    %481 = vadd.xlane.f32.xlu0 %v426
    %v482 = vpop.xlane.xlu0 %481
    %483 = vadd.xlane.f32.xlu0 %v427
    %v484 = vpop.xlane.xlu0 %483
    %485 = vadd.xlane.f32.xlu0 %v428
    %v486 = vpop.xlane.xlu0 %485
    %487 = vadd.xlane.f32.xlu0 %v429
    %v488 = vpop.xlane.xlu0 %487
    %489 = vadd.xlane.f32.xlu0 %v430
    %v490 = vpop.xlane.xlu0 %489
    %491 = vadd.xlane.f32.xlu0 %v431
    %v492 = vpop.xlane.xlu0 %491
    %493 = vadd.xlane.f32.xlu0 %v432
    %v494 = vpop.xlane.xlu0 %493
    %495 = vadd.xlane.f32.xlu0 %v433
    %v496 = vpop.xlane.xlu0 %495
    %497 = vadd.xlane.f32.xlu0 %v434
    %v498 = vpop.xlane.xlu0 %497
    %v499 = vmax.f32 %v436, 1e-24
    %v500 = vmax.f32 %v438, 1e-24
    %v501 = vmax.f32 %v440, 1e-24
    %v502 = vmax.f32 %v442, 1e-24
    %v503 = vmax.f32 %v444, 1e-24
    %v504 = vmax.f32 %v446, 1e-24
    %v505 = vmax.f32 %v448, 1e-24
    %v506 = vmax.f32 %v450, 1e-24
    %v507 = vmax.f32 %v452, 1e-24
    %v508 = vmax.f32 %v454, 1e-24
    %v509 = vmax.f32 %v456, 1e-24
    %v510 = vmax.f32 %v458, 1e-24
    %v511 = vmax.f32 %v460, 1e-24
    %v512 = vmax.f32 %v462, 1e-24
    %v513 = vmax.f32 %v464, 1e-24
    %v514 = vmax.f32 %v466, 1e-24
    %v515 = vmax.f32 %v468, 1e-24
    %v516 = vmax.f32 %v470, 1e-24
    %v517 = vmax.f32 %v472, 1e-24
    %v518 = vmax.f32 %v474, 1e-24
    %v519 = vmax.f32 %v476, 1e-24
    %v520 = vmax.f32 %v478, 1e-24
    %v521 = vmax.f32 %v480, 1e-24
    %v522 = vmax.f32 %v482, 1e-24
    %v523 = vmax.f32 %v484, 1e-24
    %v524 = vmax.f32 %v486, 1e-24
    %v525 = vmax.f32 %v488, 1e-24
    %v526 = vmax.f32 %v490, 1e-24
    %v527 = vmax.f32 %v492, 1e-24
    %v528 = vmax.f32 %v494, 1e-24
    %v529 = vmax.f32 %v496, 1e-24
    %v530 = vmax.f32 %v498, 1e-24
    %v531 = vrsqrt.pop %v499
    %v532 = vrsqrt.pop %v500
    %v533 = vrsqrt.pop %v501
    %v534 = vrsqrt.pop %v502
    %v535 = vrsqrt.pop %v503
    %v536 = vrsqrt.pop %v504
    %v537 = vrsqrt.pop %v505
    %v538 = vrsqrt.pop %v506
    %v539 = vrsqrt.pop %v507
    %v540 = vrsqrt.pop %v508
    %v541 = vrsqrt.pop %v509
    %v542 = vrsqrt.pop %v510
    %v543 = vrsqrt.pop %v511
    %v544 = vrsqrt.pop %v512
    %v545 = vrsqrt.pop %v513
    %v546 = vrsqrt.pop %v514
    %v547 = vrsqrt.pop %v515
    %v548 = vrsqrt.pop %v516
    %v549 = vrsqrt.pop %v517
    %v550 = vrsqrt.pop %v518
    %v551 = vrsqrt.pop %v519
    %v552 = vrsqrt.pop %v520
    %v553 = vrsqrt.pop %v521
    %v554 = vrsqrt.pop %v522
    %v555 = vrsqrt.pop %v523
    %v556 = vrsqrt.pop %v524
    %v557 = vrsqrt.pop %v525
    %v558 = vrsqrt.pop %v526
    %v559 = vrsqrt.pop %v527
    %v560 = vrsqrt.pop %v528
    %v561 = vrsqrt.pop %v529
    %v562 = vrsqrt.pop %v530
    %v563 = vmul.f32 %v245, %v531
    %v564 = vmul.f32 %v250, %v532
    %v565 = vmul.f32 %v255, %v533
    %v566 = vmul.f32 %v260, %v534
    %v567 = vmul.f32 %v265, %v535
    %v568 = vmul.f32 %v270, %v536
    %v569 = vmul.f32 %v275, %v537
    %v570 = vmul.f32 %v280, %v538
    %v571 = vmul.f32 %v285, %v539
    %v572 = vmul.f32 %v290, %v540
    %v573 = vmul.f32 %v295, %v541
    %v574 = vmul.f32 %v300, %v542
    %v575 = vmul.f32 %v305, %v543
    %v576 = vmul.f32 %v310, %v544
    %v577 = vmul.f32 %v315, %v545
    %v578 = vmul.f32 %v320, %v546
    %v579 = vmul.f32 %v325, %v547
    %v580 = vmul.f32 %v330, %v548
    %v581 = vmul.f32 %v335, %v549
    %v582 = vmul.f32 %v340, %v550
    %v583 = vmul.f32 %v345, %v551
    %v584 = vmul.f32 %v350, %v552
    %v585 = vmul.f32 %v355, %v553
    %v586 = vmul.f32 %v360, %v554
    %v587 = vmul.f32 %v365, %v555
    %v588 = vmul.f32 %v370, %v556
    %v589 = vmul.f32 %v375, %v557
    %v590 = vmul.f32 %v380, %v558
    %v591 = vmul.f32 %v385, %v559
    %v592 = vmul.f32 %v390, %v560
    %v593 = vmul.f32 %v395, %v561
    %v594 = vmul.f32 %v400, %v562
    %595 = vst [vmem:[%s11] sm:$0xff] %v563
    %596 = vst [vmem:[%s11 + $0x8] sm:$0xff] %v564
    %597 = vst [vmem:[%s11 + $0x10] sm:$0xff] %v565
    %598 = vst [vmem:[%s11 + $0x18] sm:$0xff] %v566
    %599 = vst [vmem:[%s11 + $0x20] sm:$0xff] %v567
    %600 = vst [vmem:[%s11 + $0x28] sm:$0xff] %v568
    %601 = vst [vmem:[%s11 + $0x30] sm:$0xff] %v569
    %602 = vst [vmem:[%s11 + $0x38] sm:$0xff] %v570
    %603 = vst [vmem:[%s11 + $0x40] sm:$0xff] %v571
    %604 = vst [vmem:[%s11 + $0x48] sm:$0xff] %v572
    %605 = vst [vmem:[%s11 + $0x50] sm:$0xff] %v573
    %606 = vst [vmem:[%s11 + $0x58] sm:$0xff] %v574
    %607 = vst [vmem:[%s11 + $0x60] sm:$0xff] %v575
    %608 = vst [vmem:[%s11 + $0x68] sm:$0xff] %v576
    %609 = vst [vmem:[%s11 + $0x70] sm:$0xff] %v577
    %610 = vst [vmem:[%s11 + $0x78] sm:$0xff] %v578
    %611 = vst [vmem:[%s11 + $0x80] sm:$0xff] %v579
    %612 = vst [vmem:[%s11 + $0x88] sm:$0xff] %v580
    %613 = vst [vmem:[%s11 + $0x90] sm:$0xff] %v581
    %614 = vst [vmem:[%s11 + $0x98] sm:$0xff] %v582
    %615 = vst [vmem:[%s11 + $0xa0] sm:$0xff] %v583
    %616 = vst [vmem:[%s11 + $0xa8] sm:$0xff] %v584
    %617 = vst [vmem:[%s11 + $0xb0] sm:$0xff] %v585
    %618 = vst [vmem:[%s11 + $0xb8] sm:$0xff] %v586
    %619 = vst [vmem:[%s11 + $0xc0] sm:$0xff] %v587
    %620 = vst [vmem:[%s11 + $0xc8] sm:$0xff] %v588
    %621 = vst [vmem:[%s11 + $0xd0] sm:$0xff] %v589
    %622 = vst [vmem:[%s11 + $0xd8] sm:$0xff] %v590
    %623 = vst [vmem:[%s11 + $0xe0] sm:$0xff] %v591
    %624 = vst [vmem:[%s11 + $0xe8] sm:$0xff] %v592
    %625 = vst [vmem:[%s11 + $0xf0] sm:$0xff] %v593
    %626 = vst [vmem:[%s11 + $0xf8] sm:$0xff] %v594
    %v627 = vld [vmem:[%s1] sm:$0xff]
    %v628 = vld [vmem:[%s1 + $0x8] sm:$0xff]
    %v629 = vld [vmem:[%s4] sm:$0xff]
    %v630 = vld [vmem:[%s5] sm:$0x1]
    %v632 = vlaneseq
    %v633 = vshrl.u32 %v632, 7
    %v634 = vsub.s32 0, %v633
    %v635 = vrot.slane %v630, %v634
    %v638 = vsel %vm81, %v627, 0
    %v641 = vsel %vm81, %v628, 0
    %643 = vmatprep.subr.mxu0 0.0
    %644 = vmatpush1.msra.mxu0 %v629
    %645 = vmatprep.subr.mxu0 0.0
    %646 = vmatpush1.msra.mxu0 0.0
    %647 = vmatprep.subr.mxu0 0.0
    %648 = vmatpush1.msra.mxu0 0.0
    %649 = vmatprep.subr.mxu0 0.0
    %650 = vmatpush1.msra.mxu0 0.0
    %651 = vmatprep.subr.mxu0 0.0
    %652 = vmatpush1.msra.mxu0 0.0
    %653 = vmatprep.subr.mxu0 0.0
    %654 = vmatpush1.msra.mxu0 0.0
    %655 = vmatprep.subr.mxu0 0.0
    %656 = vmatpush1.msra.mxu0 0.0
    %657 = vmatprep.subr.mxu0 0.0
    %658 = vmatpush1.msra.mxu0 0.0
    %659 = vmatprep.subr.mxu0 0.0
    %660 = vmatpush1.msra.mxu0 0.0
    %661 = vmatprep.subr.mxu0 0.0
    %662 = vmatpush1.msra.mxu0 0.0
    %663 = vmatprep.subr.mxu0 0.0
    %664 = vmatpush1.msra.mxu0 0.0
    %665 = vmatprep.subr.mxu0 0.0
    %666 = vmatpush1.msra.mxu0 0.0
    %667 = vmatprep.subr.mxu0 0.0
    %668 = vmatpush1.msra.mxu0 0.0
    %669 = vmatprep.subr.mxu0 0.0
    %670 = vmatpush1.msra.mxu0 0.0
    %671 = vmatprep.subr.mxu0 0.0
    %672 = vmatpush1.msra.mxu0 0.0
    %673 = vmatprep.subr.mxu0 0.0
    %674 = vmatpush1.msra.mxu0 0.0
    %675 = vmatprep.subr.mxu0 0.0
    %676 = vmatpush1.msra.mxu0 0.0
    %677 = vmatprep.subr.mxu0 0.0
    %678 = vmatpush1.msra.mxu0 0.0
    %679 = vmatprep.subr.mxu0 0.0
    %680 = vmatpush1.msra.mxu0 0.0
    %681 = vmatprep.subr.mxu0 0.0
    %682 = vmatpush1.msra.mxu0 0.0
    %683 = vmatprep.subr.mxu0 0.0
    %684 = vmatpush1.msra.mxu0 0.0
    %685 = vmatprep.subr.mxu0 0.0
    %686 = vmatpush1.msra.mxu0 0.0
    %687 = vmatprep.subr.mxu0 0.0
    %688 = vmatpush1.msra.mxu0 0.0
    %689 = vmatprep.subr.mxu0 0.0
    %690 = vmatpush1.msra.mxu0 0.0
    %691 = vmatprep.subr.mxu0 0.0
    %692 = vmatpush1.msra.mxu0 0.0
    %693 = vmatprep.subr.mxu0 0.0
    %694 = vmatpush1.msra.mxu0 0.0
    %695 = vmatprep.subr.mxu0 0.0
    %696 = vmatpush1.msra.mxu0 0.0
    %697 = vmatprep.subr.mxu0 0.0
    %698 = vmatpush1.msra.mxu0 0.0
    %699 = vmatprep.subr.mxu0 0.0
    %700 = vmatpush1.msra.mxu0 0.0
    %701 = vmatprep.subr.mxu0 0.0
    %702 = vmatpush1.msra.mxu0 0.0
    %703 = vmatprep.subr.mxu0 0.0
    %704 = vmatpush1.msra.mxu0 0.0
    %705 = vmatprep.subr.mxu0 0.0
    %706 = vmatpush1.msra.mxu0 0.0
    %707 = vmatprep.mubr.f32.mxu0 0.0
    %708 = vmatmul.mubr.f32.gmra.mrb[0].mxu0 %v638
    %v709 = vpop.f32.mrb[0].mxu0
    %v710 = vadd.f32 %v635, %v709
    %v711 = vpop.f32.mrb[0].mxu0
    %712 = vmatprep.mubr.f32.mxu0 0.0
    %713 = vmatmul.mubr.f32.gmra.mrb[0].mxu0 %v641
    %v714 = vpop.f32.mrb[0].mxu0
    %v715 = vadd.f32 %v635, %v714
    %v716 = vpop.f32.mrb[0].mxu0
    %717 = vdwg.mxu0
    %v718 = vld [vmem:[%s6] sm:$0xff]
    %v719 = vld [vmem:[%s6 + $0x8] sm:$0xff]
    %v720 = vld [vmem:[%s6 + $0x10] sm:$0xff]
    %v721 = vld [vmem:[%s6 + $0x18] sm:$0xff]
    %v722 = vld [vmem:[%s6 + $0x20] sm:$0xff]
    %v723 = vld [vmem:[%s6 + $0x28] sm:$0xff]
    %v724 = vld [vmem:[%s6 + $0x30] sm:$0xff]
    %v725 = vld [vmem:[%s6 + $0x38] sm:$0xff]
    %v726 = vld [vmem:[%s6 + $0x40] sm:$0xff]
    %v727 = vld [vmem:[%s6 + $0x48] sm:$0xff]
    %v728 = vld [vmem:[%s6 + $0x50] sm:$0xff]
    %v729 = vld [vmem:[%s6 + $0x58] sm:$0xff]
    %v730 = vld [vmem:[%s6 + $0x60] sm:$0xff]
    %v731 = vld [vmem:[%s6 + $0x68] sm:$0xff]
    %v732 = vld [vmem:[%s6 + $0x70] sm:$0xff]
    %v733 = vld [vmem:[%s6 + $0x78] sm:$0xff]
    %v734 = vld [vmem:[%s7] sm:$0x1]
    %v736 = vlaneseq
    %v737 = vshrl.u32 %v736, 7
    %v738 = vsub.s32 0, %v737
    %v739 = vrot.slane %v734, %v738
    %741 = vmatprep.subr.mxu0 0.0
    %742 = vmatpush1.msra.mxu0 %v718
    %743 = vmatprep.subr.mxu0 0.0
    %744 = vmatpush1.msra.mxu0 %v719
    %745 = vmatprep.subr.mxu0 0.0
    %746 = vmatpush1.msra.mxu0 %v720
    %747 = vmatprep.subr.mxu0 0.0
    %748 = vmatpush1.msra.mxu0 %v721
    %749 = vmatprep.subr.mxu0 0.0
    %750 = vmatpush1.msra.mxu0 %v722
    %751 = vmatprep.subr.mxu0 0.0
    %752 = vmatpush1.msra.mxu0 %v723
    %753 = vmatprep.subr.mxu0 0.0
    %754 = vmatpush1.msra.mxu0 %v724
    %755 = vmatprep.subr.mxu0 0.0
    %756 = vmatpush1.msra.mxu0 %v725
    %757 = vmatprep.subr.mxu0 0.0
    %758 = vmatpush1.msra.mxu0 %v726
    %759 = vmatprep.subr.mxu0 0.0
    %760 = vmatpush1.msra.mxu0 %v727
    %761 = vmatprep.subr.mxu0 0.0
    %762 = vmatpush1.msra.mxu0 %v728
    %763 = vmatprep.subr.mxu0 0.0
    %764 = vmatpush1.msra.mxu0 %v729
    %765 = vmatprep.subr.mxu0 0.0
    %766 = vmatpush1.msra.mxu0 %v730
    %767 = vmatprep.subr.mxu0 0.0
    %768 = vmatpush1.msra.mxu0 %v731
    %769 = vmatprep.subr.mxu0 0.0
    %770 = vmatpush1.msra.mxu0 %v732
    %771 = vmatprep.subr.mxu0 0.0
    %772 = vmatpush1.msra.mxu0 %v733
    %773 = vmatprep.subr.mxu0 0.0
    %774 = vmatpush1.msra.mxu0 0.0
    %775 = vmatprep.subr.mxu0 0.0
    %776 = vmatpush1.msra.mxu0 0.0
    %777 = vmatprep.subr.mxu0 0.0
    %778 = vmatpush1.msra.mxu0 0.0
    %779 = vmatprep.subr.mxu0 0.0
    %780 = vmatpush1.msra.mxu0 0.0
    %781 = vmatprep.subr.mxu0 0.0
    %782 = vmatpush1.msra.mxu0 0.0
    %783 = vmatprep.subr.mxu0 0.0
    %784 = vmatpush1.msra.mxu0 0.0
    %785 = vmatprep.subr.mxu0 0.0
    %786 = vmatpush1.msra.mxu0 0.0
    %787 = vmatprep.subr.mxu0 0.0
    %788 = vmatpush1.msra.mxu0 0.0
    %789 = vmatprep.subr.mxu0 0.0
    %790 = vmatpush1.msra.mxu0 0.0
    %791 = vmatprep.subr.mxu0 0.0
    %792 = vmatpush1.msra.mxu0 0.0
    %793 = vmatprep.subr.mxu0 0.0
    %794 = vmatpush1.msra.mxu0 0.0
    %795 = vmatprep.subr.mxu0 0.0
    %796 = vmatpush1.msra.mxu0 0.0
    %797 = vmatprep.subr.mxu0 0.0
    %798 = vmatpush1.msra.mxu0 0.0
    %799 = vmatprep.subr.mxu0 0.0
    %800 = vmatpush1.msra.mxu0 0.0
    %801 = vmatprep.subr.mxu0 0.0
    %802 = vmatpush1.msra.mxu0 0.0
    %803 = vmatprep.subr.mxu0 0.0
    %804 = vmatpush1.msra.mxu0 0.0
    %805 = vmatprep.mubr.f32.mxu0 0.0
    %806 = vmatmul.mubr.f32.gmra.mrb[0].mxu0 %v710
    %v807 = vpop.f32.mrb[0].mxu0
    %v808 = vadd.f32 %v739, %v807
    %v809 = vpop.f32.mrb[0].mxu0
    %810 = vmatprep.mubr.f32.mxu0 0.0
    %811 = vmatmul.mubr.f32.gmra.mrb[0].mxu0 %v715
    %v812 = vpop.f32.mrb[0].mxu0
    %v813 = vadd.f32 %v739, %v812
    %v814 = vpop.f32.mrb[0].mxu0
    %815 = vdwg.mxu0
    %v816 = vmax.f32 %v808, 0.0
    %v817 = vmax.f32 %v813, 0.0
    %v818 = vld [vmem:[%s8] sm:$0xff]
    %v819 = vld [vmem:[%s8 + $0x8] sm:$0xff]
    %v820 = vld [vmem:[%s8 + $0x10] sm:$0xff]
    %v821 = vld [vmem:[%s8 + $0x18] sm:$0xff]
    %v822 = vld [vmem:[%s8 + $0x20] sm:$0xff]
    %v823 = vld [vmem:[%s8 + $0x28] sm:$0xff]
    %v824 = vld [vmem:[%s8 + $0x30] sm:$0xff]
    %v825 = vld [vmem:[%s8 + $0x38] sm:$0xff]
    %v826 = vld [vmem:[%s8 + $0x40] sm:$0xff]
    %v827 = vld [vmem:[%s8 + $0x48] sm:$0xff]
    %v828 = vld [vmem:[%s8 + $0x50] sm:$0xff]
    %v829 = vld [vmem:[%s8 + $0x58] sm:$0xff]
    %v830 = vld [vmem:[%s8 + $0x60] sm:$0xff]
    %v831 = vld [vmem:[%s8 + $0x68] sm:$0xff]
    %v832 = vld [vmem:[%s8 + $0x70] sm:$0xff]
    %v833 = vld [vmem:[%s8 + $0x78] sm:$0xff]
    %v834 = vld [vmem:[%s9] sm:$0x1]
    %v836 = vlaneseq
    %v837 = vshrl.u32 %v836, 7
    %v838 = vsub.s32 0, %v837
    %v839 = vrot.slane %v834, %v838
    %841 = vmatprep.subr.mxu0 0.0
    %842 = vmatpush1.msra.mxu0 %v818
    %843 = vmatprep.subr.mxu0 0.0
    %844 = vmatpush1.msra.mxu0 %v819
    %845 = vmatprep.subr.mxu0 0.0
    %846 = vmatpush1.msra.mxu0 %v820
    %847 = vmatprep.subr.mxu0 0.0
    %848 = vmatpush1.msra.mxu0 %v821
    %849 = vmatprep.subr.mxu0 0.0
    %850 = vmatpush1.msra.mxu0 %v822
    %851 = vmatprep.subr.mxu0 0.0
    %852 = vmatpush1.msra.mxu0 %v823
    %853 = vmatprep.subr.mxu0 0.0
    %854 = vmatpush1.msra.mxu0 %v824
    %855 = vmatprep.subr.mxu0 0.0
    %856 = vmatpush1.msra.mxu0 %v825
    %857 = vmatprep.subr.mxu0 0.0
    %858 = vmatpush1.msra.mxu0 %v826
    %859 = vmatprep.subr.mxu0 0.0
    %860 = vmatpush1.msra.mxu0 %v827
    %861 = vmatprep.subr.mxu0 0.0
    %862 = vmatpush1.msra.mxu0 %v828
    %863 = vmatprep.subr.mxu0 0.0
    %864 = vmatpush1.msra.mxu0 %v829
    %865 = vmatprep.subr.mxu0 0.0
    %866 = vmatpush1.msra.mxu0 %v830
    %867 = vmatprep.subr.mxu0 0.0
    %868 = vmatpush1.msra.mxu0 %v831
    %869 = vmatprep.subr.mxu0 0.0
    %870 = vmatpush1.msra.mxu0 %v832
    %871 = vmatprep.subr.mxu0 0.0
    %872 = vmatpush1.msra.mxu0 %v833
    %873 = vmatprep.subr.mxu0 0.0
    %874 = vmatpush1.msra.mxu0 0.0
    %875 = vmatprep.subr.mxu0 0.0
    %876 = vmatpush1.msra.mxu0 0.0
    %877 = vmatprep.subr.mxu0 0.0
    %878 = vmatpush1.msra.mxu0 0.0
    %879 = vmatprep.subr.mxu0 0.0
    %880 = vmatpush1.msra.mxu0 0.0
    %881 = vmatprep.subr.mxu0 0.0
    %882 = vmatpush1.msra.mxu0 0.0
    %883 = vmatprep.subr.mxu0 0.0
    %884 = vmatpush1.msra.mxu0 0.0
    %885 = vmatprep.subr.mxu0 0.0
    %886 = vmatpush1.msra.mxu0 0.0
    %887 = vmatprep.subr.mxu0 0.0
    %888 = vmatpush1.msra.mxu0 0.0
    %889 = vmatprep.subr.mxu0 0.0
    %890 = vmatpush1.msra.mxu0 0.0
    %891 = vmatprep.subr.mxu0 0.0
    %892 = vmatpush1.msra.mxu0 0.0
    %893 = vmatprep.subr.mxu0 0.0
    %894 = vmatpush1.msra.mxu0 0.0
    %895 = vmatprep.subr.mxu0 0.0
    %896 = vmatpush1.msra.mxu0 0.0
    %897 = vmatprep.subr.mxu0 0.0
    %898 = vmatpush1.msra.mxu0 0.0
    %899 = vmatprep.subr.mxu0 0.0
    %900 = vmatpush1.msra.mxu0 0.0
    %901 = vmatprep.subr.mxu0 0.0
    %902 = vmatpush1.msra.mxu0 0.0
    %903 = vmatprep.subr.mxu0 0.0
    %904 = vmatpush1.msra.mxu0 0.0
    %905 = vmatprep.mubr.f32.mxu0 0.0
    %906 = vmatmul.mubr.f32.gmra.mrb[0].mxu0 %v816
    %v907 = vpop.f32.mrb[0].mxu0
    %v908 = vadd.f32 %v839, %v907
    %v909 = vpop.f32.mrb[0].mxu0
    %910 = vmatprep.mubr.f32.mxu0 0.0
    %911 = vmatmul.mubr.f32.gmra.mrb[0].mxu0 %v817
    %v912 = vpop.f32.mrb[0].mxu0
    %v913 = vadd.f32 %v839, %v912
    %v914 = vpop.f32.mrb[0].mxu0
    %915 = vdwg.mxu0
    %v916 = vmul.f32 %v908, %v908
    %v917 = vmul.f32 %v913, %v913
    %918 = vadd.xlane.f32.xlu0 %v916
    %v919 = vpop.xlane.xlu0 %918
    %920 = vadd.xlane.f32.xlu0 %v917
    %v921 = vpop.xlane.xlu0 %920
    %v922 = vmax.f32 %v919, 1e-24
    %v923 = vmax.f32 %v921, 1e-24
    %v924 = vrsqrt.pop %v922
    %v925 = vrsqrt.pop %v923
    %v926 = vmul.f32 %v908, %v924
    %v927 = vmul.f32 %v913, %v925
    %v928 = vmul.f32 %v926, %v927
    %929 = vadd.xlane.f32.xlu0 %v928
    %v930 = vpop.xlane.xlu0 %929
    %v931 = vmul.f32 %v930, 14.285714
    %v932 = vld [vmem:[%s10] sm:$0xff]
    %v933 = vld [vmem:[%s10 + $0x8] sm:$0xff]
    %v934 = vld [vmem:[%s10 + $0x10] sm:$0xff]
    %v935 = vld [vmem:[%s10 + $0x18] sm:$0xff]
    %v936 = vld [vmem:[%s10 + $0x20] sm:$0xff]
    %v937 = vld [vmem:[%s10 + $0x28] sm:$0xff]
    %v938 = vld [vmem:[%s10 + $0x30] sm:$0xff]
    %v939 = vld [vmem:[%s10 + $0x38] sm:$0xff]
    %v940 = vld [vmem:[%s10 + $0x40] sm:$0xff]
    %v941 = vld [vmem:[%s10 + $0x48] sm:$0xff]
    %v942 = vld [vmem:[%s10 + $0x50] sm:$0xff]
    %v943 = vld [vmem:[%s10 + $0x58] sm:$0xff]
    %v944 = vld [vmem:[%s10 + $0x60] sm:$0xff]
    %v945 = vld [vmem:[%s10 + $0x68] sm:$0xff]
    %v946 = vld [vmem:[%s10 + $0x70] sm:$0xff]
    %v947 = vld [vmem:[%s10 + $0x78] sm:$0xff]
    %v948 = vld [vmem:[%s10 + $0x80] sm:$0xff]
    %v949 = vld [vmem:[%s10 + $0x88] sm:$0xff]
    %v950 = vld [vmem:[%s10 + $0x90] sm:$0xff]
    %v951 = vld [vmem:[%s10 + $0x98] sm:$0xff]
    %v952 = vld [vmem:[%s10 + $0xa0] sm:$0xff]
    %v953 = vld [vmem:[%s10 + $0xa8] sm:$0xff]
    %v954 = vld [vmem:[%s10 + $0xb0] sm:$0xff]
    %v955 = vld [vmem:[%s10 + $0xb8] sm:$0xff]
    %v956 = vld [vmem:[%s10 + $0xc0] sm:$0xff]
    %v957 = vld [vmem:[%s10 + $0xc8] sm:$0xff]
    %v958 = vld [vmem:[%s10 + $0xd0] sm:$0xff]
    %v959 = vld [vmem:[%s10 + $0xd8] sm:$0xff]
    %v960 = vld [vmem:[%s10 + $0xe0] sm:$0xff]
    %v961 = vld [vmem:[%s10 + $0xe8] sm:$0xff]
    %v962 = vld [vmem:[%s10 + $0xf0] sm:$0xff]
    %v963 = vld [vmem:[%s10 + $0xf8] sm:$0xff]
    %964 = vmatprep.subr.mxu0 %v933
    %965 = vmatpush1.msra.mxu0 %v932
    %966 = vmatprep.subr.mxu0 %v935
    %967 = vmatpush1.msra.mxu0 %v934
    %968 = vmatprep.subr.mxu0 %v937
    %969 = vmatpush1.msra.mxu0 %v936
    %970 = vmatprep.subr.mxu0 %v939
    %971 = vmatpush1.msra.mxu0 %v938
    %972 = vmatprep.subr.mxu0 %v941
    %973 = vmatpush1.msra.mxu0 %v940
    %974 = vmatprep.subr.mxu0 %v943
    %975 = vmatpush1.msra.mxu0 %v942
    %976 = vmatprep.subr.mxu0 %v945
    %977 = vmatpush1.msra.mxu0 %v944
    %978 = vmatprep.subr.mxu0 %v947
    %979 = vmatpush1.msra.mxu0 %v946
    %980 = vmatprep.subr.mxu0 %v949
    %981 = vmatpush1.msra.mxu0 %v948
    %982 = vmatprep.subr.mxu0 %v951
    %983 = vmatpush1.msra.mxu0 %v950
    %984 = vmatprep.subr.mxu0 %v953
    %985 = vmatpush1.msra.mxu0 %v952
    %986 = vmatprep.subr.mxu0 %v955
    %987 = vmatpush1.msra.mxu0 %v954
    %988 = vmatprep.subr.mxu0 %v957
    %989 = vmatpush1.msra.mxu0 %v956
    %990 = vmatprep.subr.mxu0 %v959
    %991 = vmatpush1.msra.mxu0 %v958
    %992 = vmatprep.subr.mxu0 %v961
    %993 = vmatpush1.msra.mxu0 %v960
    %994 = vmatprep.subr.mxu0 %v963
    %995 = vmatpush1.msra.mxu0 %v962
    %996 = vmatprep.subr.mxu0 0.0
    %997 = vmatpush1.msra.mxu0 0.0
    %998 = vmatprep.subr.mxu0 0.0
    %999 = vmatpush1.msra.mxu0 0.0
    %1000 = vmatprep.subr.mxu0 0.0
    %1001 = vmatpush1.msra.mxu0 0.0
    %1002 = vmatprep.subr.mxu0 0.0
    %1003 = vmatpush1.msra.mxu0 0.0
    %1004 = vmatprep.subr.mxu0 0.0
    %1005 = vmatpush1.msra.mxu0 0.0
    %1006 = vmatprep.subr.mxu0 0.0
    %1007 = vmatpush1.msra.mxu0 0.0
    %1008 = vmatprep.subr.mxu0 0.0
    %1009 = vmatpush1.msra.mxu0 0.0
    %1010 = vmatprep.subr.mxu0 0.0
    %1011 = vmatpush1.msra.mxu0 0.0
    %1012 = vmatprep.subr.mxu0 0.0
    %1013 = vmatpush1.msra.mxu0 0.0
    %1014 = vmatprep.subr.mxu0 0.0
    %1015 = vmatpush1.msra.mxu0 0.0
    %1016 = vmatprep.subr.mxu0 0.0
    %1017 = vmatpush1.msra.mxu0 0.0
    %1018 = vmatprep.subr.mxu0 0.0
    %1019 = vmatpush1.msra.mxu0 0.0
    %1020 = vmatprep.subr.mxu0 0.0
    %1021 = vmatpush1.msra.mxu0 0.0
    %1022 = vmatprep.subr.mxu0 0.0
    %1023 = vmatpush1.msra.mxu0 0.0
    %1024 = vmatprep.subr.mxu0 0.0
    %1025 = vmatpush1.msra.mxu0 0.0
    %1026 = vmatprep.subr.mxu0 0.0
    %1027 = vmatpush1.msra.mxu0 0.0
    %1028 = vmatprep.mubr.f32.mxu0 0.0
    %1029 = vmatmul.mubr.f32.gmra.mrb[0].mxu0 %v926
    %v1030 = vpop.f32.mrb[0].mxu0
    %v1031 = vadd.f32 0.0, %v1030
    %v1032 = vpop.f32.mrb[0].mxu0
    %v1033 = vadd.f32 0.0, %v1032
    %1034 = vdwg.mxu0
    %v1035 = vmul.f32 %v1031, 14.285714
    %v1036 = vmul.f32 %v1033, 14.285714
    %v1037 = vmax.f32 %v1035, %v1036
    %1038 = vmax.xlane.f32.xlu0 %v1037
    %v1039 = vpop.xlane.xlu0 %1038
    %v1040 = vmax.f32 %v1039, %v931
    %v1041 = vsub.f32 %v931, %v1040
    %v1042 = vmul.f32 %v1041, 1.442695
    %v1043 = vpow.pop %v1042
    %v1044 = vsub.f32 %v1035, %v1040
    %v1045 = vsub.f32 %v1036, %v1040
    %v1046 = vmul.f32 %v1044, 1.442695
    %v1047 = vpow.pop %v1046
    %v1048 = vmul.f32 %v1045, 1.442695
    %v1049 = vpow.pop %v1048
    %v1050 = vadd.f32 %v1047, %v1049
    %1051 = vadd.xlane.f32.xlu0 %v1050
    %v1052 = vpop.xlane.xlu0 %1051
    %v1053 = vadd.f32 %v1043, %v1052
    %v1054 = vlog2.pop %v1053
    %v1055 = vmul.f32 %v1054, 0.6931472
    %v1056 = vadd.f32 %v1040, %v1055
    %v1057 = vsub.f32 %v1056, %v931
    %vm1058 = vcmask 7168
    %v1059 = vsel %vm1058, %v1057, 0.0
    %1060 = vadd.xlane.f32.xlu0 %v1059
    %v1061 = vpop.xlane.xlu0 %1060
    %v1062 = vrot.slane %v1061, 4
    %v1063 = vadd.f32 %v1061, %v1062
    %v1064 = vrot.slane %v1063, 2
    %v1065 = vadd.f32 %v1063, %v1064
    %v1066 = vrot.slane %v1065, 1
    %v1067 = vadd.f32 %v1065, %v1066
    %s1068 = vtos %v1067
    %v1069 = vrcp.pop 8.0
    %s1070 = vtos %v1069
    %s1071 = smul.f32 %s1068, %s1070
    %s1072 = scalar_lea.smem [#allocation2], 0
    %1073 = sst [smem:[%s1072]] %s1071
    // Predicated region
    $region46: #{_cost_forward.2} parent=1 // pred_check
      _
    $region47: #{_cost_forward.2} parent=1 // pred_check_branch
      %1075 = sbr.rel (0) target = $region49
    $region48: #{_cost_forward.2} parent=1 // pred_region
      _
    $region49: #{_cost_forward.2} parent=1 // pred_fallthru
      _
    // Predicated region
    $region50: #{_cost_forward.2} parent=1 // pred_check
      _
    $region51: #{_cost_forward.2} parent=1 // pred_check_branch
      %1077 = sbr.rel (0) target = $region53
    $region52: #{_cost_forward.2} parent=1 // pred_region
      %s1079 = ssub.s32 16, 16
      %1080 = vsyncadd [#allocation3], %s1079
      %1083 = dma.smem_to_hbm [#allocation2], 16, %s12, [#allocation3]
    $region53: #{_cost_forward.2} parent=1 // pred_fallthru
      _
    // Predicated region
    $region54: #{_cost_forward.2} parent=1 // pred_check
      _
    $region55: #{_cost_forward.2} parent=1 // pred_check_branch
      %1085 = sbr.rel (0) target = $region57
    $region56: #{_cost_forward.2} parent=1 // pred_region
      _
    $region57: #{_cost_forward.2} parent=1 // pred_fallthru
      _
    // Predicated region
    $region58: #{_cost_forward.2} parent=1 // pred_check
      _
    $region59: #{_cost_forward.2} parent=1 // pred_check_branch
      %1087 = sbr.rel (0) target = $region61
    $region60: #{_cost_forward.2} parent=1 // pred_region
      %1088 = dma.done [#allocation3], 16
    $region61: #{_cost_forward.2} parent=1 // pred_fallthru
      _
    %1089 = sfence
    %1090 = vsyncpa [#allocation3], 1

// kernel: _cost_forward.3
$region0: #{_cost_forward.3}
  #allocation0 [shape = 'u32[]', space=smem, size = 0x4, offset = 0x4, fixed_abs, tag = 'smem constant byte address 0x4 - core index']
  #allocation1 [shape = 'u32[144,128]{1,0:T(1,128)}', space=vmem, size = 0x12000, scoped, tag = 'internal scratch']
  %s0 = inlined_call_operand.vmem [shape: f32[288,128], index: 0, kind: input, shape index: {}]
  %s1 = inlined_call_operand.hbm [shape: f32[1,1], index: 1, kind: output, shape index: {}]
  %s2 = sld [smem:[#allocation0]]
  $region14: #{_cost_forward.3} parent=0
    _
  %s4 = ssub.s32 1, %s2
  %s5 = scalar_select 0, %s4, %s2
  $region1: #{_cost_forward.3} parent=0
    #allocation2 [shape = 'u8[512]{0}', space=smem, size = 0x200, scoped, tag = 'output window, operand 0, single buffered']
    #allocation3 [shape = 's32[1]{0}', space=sflag, size = 0x4, scoped, tag = 'scoped memory for _cost_forward.3']
    %6 = vsyncpa [#allocation3], 0
    // Predicated region
    $region2: #{_cost_forward.3} parent=1 // pred_check
      _
    $region3: #{_cost_forward.3} parent=1 // pred_check_branch
      %8 = sbr.rel (0) target = $region5
    $region4: #{_cost_forward.3} parent=1 // pred_region
      _
    $region5: #{_cost_forward.3} parent=1 // pred_fallthru
      _
    %v9 = vld [vmem:[%s0] sm:$0xff]
    %v10 = vld [vmem:[%s0 + $0x8] sm:$0xff]
    %v11 = vld [vmem:[%s0 + $0x10] sm:$0xff]
    %v12 = vld [vmem:[%s0 + $0x18] sm:$0xff]
    %v13 = vld [vmem:[%s0 + $0x20] sm:$0xff]
    %v14 = vld [vmem:[%s0 + $0x28] sm:$0xff]
    %v15 = vld [vmem:[%s0 + $0x30] sm:$0xff]
    %v16 = vld [vmem:[%s0 + $0x38] sm:$0xff]
    %v17 = vld [vmem:[%s0 + $0x40] sm:$0xff]
    %v18 = vld [vmem:[%s0 + $0x48] sm:$0xff]
    %v19 = vld [vmem:[%s0 + $0x50] sm:$0xff]
    %v20 = vld [vmem:[%s0 + $0x58] sm:$0xff]
    %v21 = vld [vmem:[%s0 + $0x60] sm:$0xff]
    %v22 = vld [vmem:[%s0 + $0x68] sm:$0xff]
    %v23 = vld [vmem:[%s0 + $0x70] sm:$0xff]
    %v24 = vld [vmem:[%s0 + $0x78] sm:$0xff]
    %v25 = vld [vmem:[%s0 + $0x80] sm:$0xff]
    %v26 = vld [vmem:[%s0 + $0x88] sm:$0xff]
    %v27 = vld [vmem:[%s0 + $0x90] sm:$0xff]
    %v28 = vld [vmem:[%s0 + $0x98] sm:$0xff]
    %v29 = vld [vmem:[%s0 + $0xa0] sm:$0xff]
    %v30 = vld [vmem:[%s0 + $0xa8] sm:$0xff]
    %v31 = vld [vmem:[%s0 + $0xb0] sm:$0xff]
    %v32 = vld [vmem:[%s0 + $0xb8] sm:$0xff]
    %v33 = vld [vmem:[%s0 + $0xc0] sm:$0xff]
    %v34 = vld [vmem:[%s0 + $0xc8] sm:$0xff]
    %v35 = vld [vmem:[%s0 + $0xd0] sm:$0xff]
    %v36 = vld [vmem:[%s0 + $0xd8] sm:$0xff]
    %v37 = vld [vmem:[%s0 + $0xe0] sm:$0xff]
    %v38 = vld [vmem:[%s0 + $0xe8] sm:$0xff]
    %v39 = vld [vmem:[%s0 + $0xf0] sm:$0xff]
    %v40 = vld [vmem:[%s0 + $0xf8] sm:$0xff]
    %v41 = vld [vmem:[%s0 + $0x100] sm:$0xff]
    %v42 = vld [vmem:[%s0 + $0x108] sm:$0xff]
    %v43 = vld [vmem:[%s0 + $0x110] sm:$0xff]
    %v44 = vld [vmem:[%s0 + $0x118] sm:$0xff]
    %45 = vmatprep.subr.mxu0 0.0
    %46 = vmatpush1.xpose.msra.mxu0 %v9
    %47 = vmatprep.subr.mxu0 0.0
    %48 = vmatpush1.xpose.msra.mxu0 %v10
    %49 = vmatprep.subr.mxu0 0.0
    %50 = vmatpush1.xpose.msra.mxu0 %v11
    %51 = vmatprep.subr.mxu0 0.0
    %52 = vmatpush1.xpose.msra.mxu0 %v12
    %53 = vmatprep.subr.mxu0 0.0
    %54 = vmatpush1.xpose.msra.mxu0 %v13
    %55 = vmatprep.subr.mxu0 0.0
    %56 = vmatpush1.xpose.msra.mxu0 %v14
    %57 = vmatprep.subr.mxu0 0.0
    %58 = vmatpush1.xpose.msra.mxu0 %v15
    %59 = vmatprep.subr.mxu0 0.0
    %60 = vmatpush1.xpose.msra.mxu0 %v16
    %61 = vmatprep.subr.mxu0 0.0
    %62 = vmatpush1.xpose.msra.mxu0 %v17
    %63 = vmatprep.subr.mxu0 0.0
    %64 = vmatpush1.xpose.msra.mxu0 %v18
    %65 = vmatprep.subr.mxu0 0.0
    %66 = vmatpush1.xpose.msra.mxu0 %v19
    %67 = vmatprep.subr.mxu0 0.0
    %68 = vmatpush1.xpose.msra.mxu0 %v20
    %69 = vmatprep.subr.mxu0 0.0
    %70 = vmatpush1.xpose.msra.mxu0 %v21
    %71 = vmatprep.subr.mxu0 0.0
    %72 = vmatpush1.xpose.msra.mxu0 %v22
    %73 = vmatprep.subr.mxu0 0.0
    %74 = vmatpush1.xpose.msra.mxu0 %v23
    %75 = vmatprep.subr.mxu0 0.0
    %76 = vmatpush1.xpose.msra.mxu0 %v24
    %77 = vmatprep.subr.mxu0 0.0
    %78 = vmatpush1.xpose.msra.mxu0 %v25
    %79 = vmatprep.subr.mxu0 0.0
    %80 = vmatpush1.xpose.msra.mxu0 %v26
    %81 = vmatprep.subr.mxu0 0.0
    %82 = vmatpush1.xpose.msra.mxu0 %v27
    %83 = vmatprep.subr.mxu0 0.0
    %84 = vmatpush1.xpose.msra.mxu0 %v28
    %85 = vmatprep.subr.mxu0 0.0
    %86 = vmatpush1.xpose.msra.mxu0 %v29
    %87 = vmatprep.subr.mxu0 0.0
    %88 = vmatpush1.xpose.msra.mxu0 %v30
    %89 = vmatprep.subr.mxu0 0.0
    %90 = vmatpush1.xpose.msra.mxu0 %v31
    %91 = vmatprep.subr.mxu0 0.0
    %92 = vmatpush1.xpose.msra.mxu0 %v32
    %93 = vmatprep.subr.mxu0 0.0
    %94 = vmatpush1.xpose.msra.mxu0 %v33
    %95 = vmatprep.subr.mxu0 0.0
    %96 = vmatpush1.xpose.msra.mxu0 %v34
    %97 = vmatprep.subr.mxu0 0.0
    %98 = vmatpush1.xpose.msra.mxu0 %v35
    %99 = vmatprep.subr.mxu0 0.0
    %100 = vmatpush1.xpose.msra.mxu0 %v36
    %101 = vmatprep.subr.mxu0 0.0
    %102 = vmatpush1.xpose.msra.mxu0 %v37
    %103 = vmatprep.subr.mxu0 0.0
    %104 = vmatpush1.xpose.msra.mxu0 %v38
    %105 = vmatprep.subr.mxu0 0.0
    %106 = vmatpush1.xpose.msra.mxu0 %v39
    %107 = vmatprep.subr.mxu0 0.0
    %108 = vmatpush1.xpose.msra.mxu0 %v40
    %109 = vmatprep.mubr.f32.mxu0 0.0
    %110 = vmatmul.mubr.f32.gmra.mrb[0].mxu0 %v9
    %v111 = vpop.f32.mrb[0].mxu0
    %v112 = vadd.f32 0.0, %v111
    %v113 = vpop.f32.mrb[0].mxu0
    %v114 = vadd.f32 0.0, %v113
    %115 = vmatprep.mubr.f32.mxu0 0.0
    %116 = vmatmul.mubr.f32.gmra.mrb[0].mxu0 %v10
    %v117 = vpop.f32.mrb[0].mxu0
    %v118 = vadd.f32 0.0, %v117
    %v119 = vpop.f32.mrb[0].mxu0
    %v120 = vadd.f32 0.0, %v119
    %121 = vmatprep.mubr.f32.mxu0 0.0
    %122 = vmatmul.mubr.f32.gmra.mrb[0].mxu0 %v11
    %v123 = vpop.f32.mrb[0].mxu0
    %v124 = vadd.f32 0.0, %v123
    %v125 = vpop.f32.mrb[0].mxu0
    %v126 = vadd.f32 0.0, %v125
    %127 = vmatprep.mubr.f32.mxu0 0.0
    %128 = vmatmul.mubr.f32.gmra.mrb[0].mxu0 %v12
    %v129 = vpop.f32.mrb[0].mxu0
    %v130 = vadd.f32 0.0, %v129
    %v131 = vpop.f32.mrb[0].mxu0
    %v132 = vadd.f32 0.0, %v131
    %133 = vmatprep.mubr.f32.mxu0 0.0
    %134 = vmatmul.mubr.f32.gmra.mrb[0].mxu0 %v13
    %v135 = vpop.f32.mrb[0].mxu0
    %v136 = vadd.f32 0.0, %v135
    %v137 = vpop.f32.mrb[0].mxu0
    %v138 = vadd.f32 0.0, %v137
    %139 = vmatprep.mubr.f32.mxu0 0.0
    %140 = vmatmul.mubr.f32.gmra.mrb[0].mxu0 %v14
    %v141 = vpop.f32.mrb[0].mxu0
    %v142 = vadd.f32 0.0, %v141
    %v143 = vpop.f32.mrb[0].mxu0
    %v144 = vadd.f32 0.0, %v143
    %145 = vmatprep.mubr.f32.mxu0 0.0
    %146 = vmatmul.mubr.f32.gmra.mrb[0].mxu0 %v15
    %v147 = vpop.f32.mrb[0].mxu0
    %v148 = vadd.f32 0.0, %v147
    %v149 = vpop.f32.mrb[0].mxu0
    %v150 = vadd.f32 0.0, %v149
    %151 = vmatprep.mubr.f32.mxu0 0.0
    %152 = vmatmul.mubr.f32.gmra.mrb[0].mxu0 %v16
    %v153 = vpop.f32.mrb[0].mxu0
    %v154 = vadd.f32 0.0, %v153
    %v155 = vpop.f32.mrb[0].mxu0
    %v156 = vadd.f32 0.0, %v155
    %157 = vmatprep.mubr.f32.mxu0 0.0
    %158 = vmatmul.mubr.f32.gmra.mrb[0].mxu0 %v17
    %v159 = vpop.f32.mrb[0].mxu0
    %v160 = vadd.f32 0.0, %v159
    %v161 = vpop.f32.mrb[0].mxu0
    %v162 = vadd.f32 0.0, %v161
    %163 = vmatprep.mubr.f32.mxu0 0.0
    %164 = vmatmul.mubr.f32.gmra.mrb[0].mxu0 %v18
    %v165 = vpop.f32.mrb[0].mxu0
    %v166 = vadd.f32 0.0, %v165
    %v167 = vpop.f32.mrb[0].mxu0
    %v168 = vadd.f32 0.0, %v167
    %169 = vmatprep.mubr.f32.mxu0 0.0
    %170 = vmatmul.mubr.f32.gmra.mrb[0].mxu0 %v19
    %v171 = vpop.f32.mrb[0].mxu0
    %v172 = vadd.f32 0.0, %v171
    %v173 = vpop.f32.mrb[0].mxu0
    %v174 = vadd.f32 0.0, %v173
    %175 = vmatprep.mubr.f32.mxu0 0.0
    %176 = vmatmul.mubr.f32.gmra.mrb[0].mxu0 %v20
    %v177 = vpop.f32.mrb[0].mxu0
    %v178 = vadd.f32 0.0, %v177
    %v179 = vpop.f32.mrb[0].mxu0
    %v180 = vadd.f32 0.0, %v179
    %181 = vmatprep.mubr.f32.mxu0 0.0
    %182 = vmatmul.mubr.f32.gmra.mrb[0].mxu0 %v21
    %v183 = vpop.f32.mrb[0].mxu0
    %v184 = vadd.f32 0.0, %v183
    %v185 = vpop.f32.mrb[0].mxu0
    %v186 = vadd.f32 0.0, %v185
    %187 = vmatprep.mubr.f32.mxu0 0.0
    %188 = vmatmul.mubr.f32.gmra.mrb[0].mxu0 %v22
    %v189 = vpop.f32.mrb[0].mxu0
    %v190 = vadd.f32 0.0, %v189
    %v191 = vpop.f32.mrb[0].mxu0
    %v192 = vadd.f32 0.0, %v191
    %193 = vmatprep.mubr.f32.mxu0 0.0
    %194 = vmatmul.mubr.f32.gmra.mrb[0].mxu0 %v23
    %v195 = vpop.f32.mrb[0].mxu0
    %v196 = vadd.f32 0.0, %v195
    %v197 = vpop.f32.mrb[0].mxu0
    %v198 = vadd.f32 0.0, %v197
    %199 = vmatprep.mubr.f32.mxu0 0.0
    %200 = vmatmul.mubr.f32.gmra.mrb[0].mxu0 %v24
    %v201 = vpop.f32.mrb[0].mxu0
    %v202 = vadd.f32 0.0, %v201
    %v203 = vpop.f32.mrb[0].mxu0
    %v204 = vadd.f32 0.0, %v203
    %205 = vmatprep.mubr.f32.mxu0 0.0
    %206 = vmatmul.mubr.f32.gmra.mrb[0].mxu0 %v25
    %v207 = vpop.f32.mrb[0].mxu0
    %v208 = vadd.f32 0.0, %v207
    %v209 = vpop.f32.mrb[0].mxu0
    %v210 = vadd.f32 0.0, %v209
    %211 = vmatprep.mubr.f32.mxu0 0.0
    %212 = vmatmul.mubr.f32.gmra.mrb[0].mxu0 %v26
    %v213 = vpop.f32.mrb[0].mxu0
    %v214 = vadd.f32 0.0, %v213
    %v215 = vpop.f32.mrb[0].mxu0
    %v216 = vadd.f32 0.0, %v215
    %217 = vmatprep.mubr.f32.mxu0 0.0
    %218 = vmatmul.mubr.f32.gmra.mrb[0].mxu0 %v27
    %v219 = vpop.f32.mrb[0].mxu0
    %v220 = vadd.f32 0.0, %v219
    %v221 = vpop.f32.mrb[0].mxu0
    %v222 = vadd.f32 0.0, %v221
    %223 = vmatprep.mubr.f32.mxu0 0.0
    %224 = vmatmul.mubr.f32.gmra.mrb[0].mxu0 %v28
    %v225 = vpop.f32.mrb[0].mxu0
    %v226 = vadd.f32 0.0, %v225
    %v227 = vpop.f32.mrb[0].mxu0
    %v228 = vadd.f32 0.0, %v227
    %229 = vmatprep.mubr.f32.mxu0 0.0
    %230 = vmatmul.mubr.f32.gmra.mrb[0].mxu0 %v29
    %v231 = vpop.f32.mrb[0].mxu0
    %v232 = vadd.f32 0.0, %v231
    %v233 = vpop.f32.mrb[0].mxu0
    %v234 = vadd.f32 0.0, %v233
    %235 = vmatprep.mubr.f32.mxu0 0.0
    %236 = vmatmul.mubr.f32.gmra.mrb[0].mxu0 %v30
    %v237 = vpop.f32.mrb[0].mxu0
    %v238 = vadd.f32 0.0, %v237
    %v239 = vpop.f32.mrb[0].mxu0
    %v240 = vadd.f32 0.0, %v239
    %241 = vmatprep.mubr.f32.mxu0 0.0
    %242 = vmatmul.mubr.f32.gmra.mrb[0].mxu0 %v31
    %v243 = vpop.f32.mrb[0].mxu0
    %v244 = vadd.f32 0.0, %v243
    %v245 = vpop.f32.mrb[0].mxu0
    %v246 = vadd.f32 0.0, %v245
    %247 = vmatprep.mubr.f32.mxu0 0.0
    %248 = vmatmul.mubr.f32.gmra.mrb[0].mxu0 %v32
    %v249 = vpop.f32.mrb[0].mxu0
    %v250 = vadd.f32 0.0, %v249
    %v251 = vpop.f32.mrb[0].mxu0
    %v252 = vadd.f32 0.0, %v251
    %253 = vmatprep.mubr.f32.mxu0 0.0
    %254 = vmatmul.mubr.f32.gmra.mrb[0].mxu0 %v33
    %v255 = vpop.f32.mrb[0].mxu0
    %v256 = vadd.f32 0.0, %v255
    %v257 = vpop.f32.mrb[0].mxu0
    %v258 = vadd.f32 0.0, %v257
    %259 = vmatprep.mubr.f32.mxu0 0.0
    %260 = vmatmul.mubr.f32.gmra.mrb[0].mxu0 %v34
    %v261 = vpop.f32.mrb[0].mxu0
    %v262 = vadd.f32 0.0, %v261
    %v263 = vpop.f32.mrb[0].mxu0
    %v264 = vadd.f32 0.0, %v263
    %265 = vmatprep.mubr.f32.mxu0 0.0
    %266 = vmatmul.mubr.f32.gmra.mrb[0].mxu0 %v35
    %v267 = vpop.f32.mrb[0].mxu0
    %v268 = vadd.f32 0.0, %v267
    %v269 = vpop.f32.mrb[0].mxu0
    %v270 = vadd.f32 0.0, %v269
    %271 = vmatprep.mubr.f32.mxu0 0.0
    %272 = vmatmul.mubr.f32.gmra.mrb[0].mxu0 %v36
    %v273 = vpop.f32.mrb[0].mxu0
    %v274 = vadd.f32 0.0, %v273
    %v275 = vpop.f32.mrb[0].mxu0
    %v276 = vadd.f32 0.0, %v275
    %277 = vmatprep.mubr.f32.mxu0 0.0
    %278 = vmatmul.mubr.f32.gmra.mrb[0].mxu0 %v37
    %v279 = vpop.f32.mrb[0].mxu0
    %v280 = vadd.f32 0.0, %v279
    %v281 = vpop.f32.mrb[0].mxu0
    %v282 = vadd.f32 0.0, %v281
    %283 = vmatprep.mubr.f32.mxu0 0.0
    %284 = vmatmul.mubr.f32.gmra.mrb[0].mxu0 %v38
    %v285 = vpop.f32.mrb[0].mxu0
    %v286 = vadd.f32 0.0, %v285
    %v287 = vpop.f32.mrb[0].mxu0
    %v288 = vadd.f32 0.0, %v287
    %289 = vmatprep.mubr.f32.mxu0 0.0
    %290 = vmatmul.mubr.f32.gmra.mrb[0].mxu0 %v39
    %v291 = vpop.f32.mrb[0].mxu0
    %v292 = vadd.f32 0.0, %v291
    %v293 = vpop.f32.mrb[0].mxu0
    %v294 = vadd.f32 0.0, %v293
    %295 = vmatprep.mubr.f32.mxu0 0.0
    %296 = vmatmul.mubr.f32.gmra.mrb[0].mxu0 %v40
    %v297 = vpop.f32.mrb[0].mxu0
    %v298 = vadd.f32 0.0, %v297
    %v299 = vpop.f32.mrb[0].mxu0
    %v300 = vadd.f32 0.0, %v299
    %301 = vmatprep.mubr.f32.mxu0 0.0
    %302 = vmatmul.mubr.f32.gmra.mrb[0].mxu0 %v41
    %v303 = vpop.f32.mrb[0].mxu0
    %v304 = vadd.f32 0.0, %v303
    %v305 = vpop.f32.mrb[0].mxu0
    %v306 = vadd.f32 0.0, %v305
    %307 = vmatprep.mubr.f32.mxu0 0.0
    %308 = vmatmul.mubr.f32.gmra.mrb[0].mxu0 %v42
    %v309 = vpop.f32.mrb[0].mxu0
    %v310 = vadd.f32 0.0, %v309
    %v311 = vpop.f32.mrb[0].mxu0
    %v312 = vadd.f32 0.0, %v311
    %313 = vmatprep.mubr.f32.mxu0 0.0
    %314 = vmatmul.mubr.f32.gmra.mrb[0].mxu0 %v43
    %v315 = vpop.f32.mrb[0].mxu0
    %v316 = vadd.f32 0.0, %v315
    %v317 = vpop.f32.mrb[0].mxu0
    %v318 = vadd.f32 0.0, %v317
    %319 = vmatprep.mubr.f32.mxu0 0.0
    %320 = vmatmul.mubr.f32.gmra.mrb[0].mxu0 %v44
    %v321 = vpop.f32.mrb[0].mxu0
    %v322 = vadd.f32 0.0, %v321
    %v323 = vpop.f32.mrb[0].mxu0
    %v324 = vadd.f32 0.0, %v323
    %325 = vdwg.mxu0
    %326 = vmatprep.subr.mxu0 0.0
    %327 = vmatpush1.xpose.msra.mxu0 %v41
    %328 = vmatprep.subr.mxu0 0.0
    %329 = vmatpush1.xpose.msra.mxu0 %v42
    %330 = vmatprep.subr.mxu0 0.0
    %331 = vmatpush1.xpose.msra.mxu0 %v43
    %332 = vmatprep.subr.mxu0 0.0
    %333 = vmatpush1.xpose.msra.mxu0 %v44
    %334 = vmatprep.subr.mxu0 0.0
    %335 = vmatpush1.xpose.msra.mxu0 0.0
    %336 = vmatprep.subr.mxu0 0.0
    %337 = vmatpush1.xpose.msra.mxu0 0.0
    %338 = vmatprep.subr.mxu0 0.0
    %339 = vmatpush1.xpose.msra.mxu0 0.0
    %340 = vmatprep.subr.mxu0 0.0
    %341 = vmatpush1.xpose.msra.mxu0 0.0
    %342 = vmatprep.subr.mxu0 0.0
    %343 = vmatpush1.xpose.msra.mxu0 0.0
    %344 = vmatprep.subr.mxu0 0.0
    %345 = vmatpush1.xpose.msra.mxu0 0.0
    %346 = vmatprep.subr.mxu0 0.0
    %347 = vmatpush1.xpose.msra.mxu0 0.0
    %348 = vmatprep.subr.mxu0 0.0
    %349 = vmatpush1.xpose.msra.mxu0 0.0
    %350 = vmatprep.subr.mxu0 0.0
    %351 = vmatpush1.xpose.msra.mxu0 0.0
    %352 = vmatprep.subr.mxu0 0.0
    %353 = vmatpush1.xpose.msra.mxu0 0.0
    %354 = vmatprep.subr.mxu0 0.0
    %355 = vmatpush1.xpose.msra.mxu0 0.0
    %356 = vmatprep.subr.mxu0 0.0
    %357 = vmatpush1.xpose.msra.mxu0 0.0
    %358 = vmatprep.subr.mxu0 0.0
    %359 = vmatpush1.xpose.msra.mxu0 0.0
    %360 = vmatprep.subr.mxu0 0.0
    %361 = vmatpush1.xpose.msra.mxu0 0.0
    %362 = vmatprep.subr.mxu0 0.0
    %363 = vmatpush1.xpose.msra.mxu0 0.0
    %364 = vmatprep.subr.mxu0 0.0
    %365 = vmatpush1.xpose.msra.mxu0 0.0
    %366 = vmatprep.subr.mxu0 0.0
    %367 = vmatpush1.xpose.msra.mxu0 0.0
    %368 = vmatprep.subr.mxu0 0.0
    %369 = vmatpush1.xpose.msra.mxu0 0.0
    %370 = vmatprep.subr.mxu0 0.0
    %371 = vmatpush1.xpose.msra.mxu0 0.0
    %372 = vmatprep.subr.mxu0 0.0
    %373 = vmatpush1.xpose.msra.mxu0 0.0
    %374 = vmatprep.subr.mxu0 0.0
    %375 = vmatpush1.xpose.msra.mxu0 0.0
    %376 = vmatprep.subr.mxu0 0.0
    %377 = vmatpush1.xpose.msra.mxu0 0.0
    %378 = vmatprep.subr.mxu0 0.0
    %379 = vmatpush1.xpose.msra.mxu0 0.0
    %380 = vmatprep.subr.mxu0 0.0
    %381 = vmatpush1.xpose.msra.mxu0 0.0
    %382 = vmatprep.subr.mxu0 0.0
    %383 = vmatpush1.xpose.msra.mxu0 0.0
    %384 = vmatprep.subr.mxu0 0.0
    %385 = vmatpush1.xpose.msra.mxu0 0.0
    %386 = vmatprep.subr.mxu0 0.0
    %387 = vmatpush1.xpose.msra.mxu0 0.0
    %388 = vmatprep.subr.mxu0 0.0
    %389 = vmatpush1.xpose.msra.mxu0 0.0
    %390 = vmatprep.mubr.f32.mxu0 0.0
    %391 = vmatmul.mubr.f32.gmra.mrb[0].mxu0 %v9
    %v392 = vpop.f32.mrb[0].mxu0
    %v393 = vadd.f32 0.0, %v392
    %v394 = vpop.f32.mrb[0].mxu0
    %395 = vmatprep.mubr.f32.mxu0 0.0
    %396 = vmatmul.mubr.f32.gmra.mrb[0].mxu0 %v10
    %v397 = vpop.f32.mrb[0].mxu0
    %v398 = vadd.f32 0.0, %v397
    %v399 = vpop.f32.mrb[0].mxu0
    %400 = vmatprep.mubr.f32.mxu0 0.0
    %401 = vmatmul.mubr.f32.gmra.mrb[0].mxu0 %v11
    %v402 = vpop.f32.mrb[0].mxu0
    %v403 = vadd.f32 0.0, %v402
    %v404 = vpop.f32.mrb[0].mxu0
    %405 = vmatprep.mubr.f32.mxu0 0.0
    %406 = vmatmul.mubr.f32.gmra.mrb[0].mxu0 %v12
    %v407 = vpop.f32.mrb[0].mxu0
    %v408 = vadd.f32 0.0, %v407
    %v409 = vpop.f32.mrb[0].mxu0
    %410 = vmatprep.mubr.f32.mxu0 0.0
    %411 = vmatmul.mubr.f32.gmra.mrb[0].mxu0 %v13
    %v412 = vpop.f32.mrb[0].mxu0
    %v413 = vadd.f32 0.0, %v412
    %v414 = vpop.f32.mrb[0].mxu0
    %415 = vmatprep.mubr.f32.mxu0 0.0
    %416 = vmatmul.mubr.f32.gmra.mrb[0].mxu0 %v14
    %v417 = vpop.f32.mrb[0].mxu0
    %v418 = vadd.f32 0.0, %v417
    %v419 = vpop.f32.mrb[0].mxu0
    %420 = vmatprep.mubr.f32.mxu0 0.0
    %421 = vmatmul.mubr.f32.gmra.mrb[0].mxu0 %v15
    %v422 = vpop.f32.mrb[0].mxu0
    %v423 = vadd.f32 0.0, %v422
    %v424 = vpop.f32.mrb[0].mxu0
    %425 = vmatprep.mubr.f32.mxu0 0.0
    %426 = vmatmul.mubr.f32.gmra.mrb[0].mxu0 %v16
    %v427 = vpop.f32.mrb[0].mxu0
    %v428 = vadd.f32 0.0, %v427
    %v429 = vpop.f32.mrb[0].mxu0
    %430 = vmatprep.mubr.f32.mxu0 0.0
    %431 = vmatmul.mubr.f32.gmra.mrb[0].mxu0 %v17
    %v432 = vpop.f32.mrb[0].mxu0
    %v433 = vadd.f32 0.0, %v432
    %v434 = vpop.f32.mrb[0].mxu0
    %435 = vmatprep.mubr.f32.mxu0 0.0
    %436 = vmatmul.mubr.f32.gmra.mrb[0].mxu0 %v18
    %v437 = vpop.f32.mrb[0].mxu0
    %v438 = vadd.f32 0.0, %v437
    %v439 = vpop.f32.mrb[0].mxu0
    %440 = vmatprep.mubr.f32.mxu0 0.0
    %441 = vmatmul.mubr.f32.gmra.mrb[0].mxu0 %v19
    %v442 = vpop.f32.mrb[0].mxu0
    %v443 = vadd.f32 0.0, %v442
    %v444 = vpop.f32.mrb[0].mxu0
    %445 = vmatprep.mubr.f32.mxu0 0.0
    %446 = vmatmul.mubr.f32.gmra.mrb[0].mxu0 %v20
    %v447 = vpop.f32.mrb[0].mxu0
    %v448 = vadd.f32 0.0, %v447
    %v449 = vpop.f32.mrb[0].mxu0
    %450 = vmatprep.mubr.f32.mxu0 0.0
    %451 = vmatmul.mubr.f32.gmra.mrb[0].mxu0 %v21
    %v452 = vpop.f32.mrb[0].mxu0
    %v453 = vadd.f32 0.0, %v452
    %v454 = vpop.f32.mrb[0].mxu0
    %455 = vmatprep.mubr.f32.mxu0 0.0
    %456 = vmatmul.mubr.f32.gmra.mrb[0].mxu0 %v22
    %v457 = vpop.f32.mrb[0].mxu0
    %v458 = vadd.f32 0.0, %v457
    %v459 = vpop.f32.mrb[0].mxu0
    %460 = vmatprep.mubr.f32.mxu0 0.0
    %461 = vmatmul.mubr.f32.gmra.mrb[0].mxu0 %v23
    %v462 = vpop.f32.mrb[0].mxu0
    %v463 = vadd.f32 0.0, %v462
    %v464 = vpop.f32.mrb[0].mxu0
    %465 = vmatprep.mubr.f32.mxu0 0.0
    %466 = vmatmul.mubr.f32.gmra.mrb[0].mxu0 %v24
    %v467 = vpop.f32.mrb[0].mxu0
    %v468 = vadd.f32 0.0, %v467
    %v469 = vpop.f32.mrb[0].mxu0
    %470 = vmatprep.mubr.f32.mxu0 0.0
    %471 = vmatmul.mubr.f32.gmra.mrb[0].mxu0 %v25
    %v472 = vpop.f32.mrb[0].mxu0
    %v473 = vadd.f32 0.0, %v472
    %v474 = vpop.f32.mrb[0].mxu0
    %475 = vmatprep.mubr.f32.mxu0 0.0
    %476 = vmatmul.mubr.f32.gmra.mrb[0].mxu0 %v26
    %v477 = vpop.f32.mrb[0].mxu0
    %v478 = vadd.f32 0.0, %v477
    %v479 = vpop.f32.mrb[0].mxu0
    %480 = vmatprep.mubr.f32.mxu0 0.0
    %481 = vmatmul.mubr.f32.gmra.mrb[0].mxu0 %v27
    %v482 = vpop.f32.mrb[0].mxu0
    %v483 = vadd.f32 0.0, %v482
    %v484 = vpop.f32.mrb[0].mxu0
    %485 = vmatprep.mubr.f32.mxu0 0.0
    %486 = vmatmul.mubr.f32.gmra.mrb[0].mxu0 %v28
    %v487 = vpop.f32.mrb[0].mxu0
    %v488 = vadd.f32 0.0, %v487
    %v489 = vpop.f32.mrb[0].mxu0
    %490 = vmatprep.mubr.f32.mxu0 0.0
    %491 = vmatmul.mubr.f32.gmra.mrb[0].mxu0 %v29
    %v492 = vpop.f32.mrb[0].mxu0
    %v493 = vadd.f32 0.0, %v492
    %v494 = vpop.f32.mrb[0].mxu0
    %495 = vmatprep.mubr.f32.mxu0 0.0
    %496 = vmatmul.mubr.f32.gmra.mrb[0].mxu0 %v30
    %v497 = vpop.f32.mrb[0].mxu0
    %v498 = vadd.f32 0.0, %v497
    %v499 = vpop.f32.mrb[0].mxu0
    %500 = vmatprep.mubr.f32.mxu0 0.0
    %501 = vmatmul.mubr.f32.gmra.mrb[0].mxu0 %v31
    %v502 = vpop.f32.mrb[0].mxu0
    %v503 = vadd.f32 0.0, %v502
    %v504 = vpop.f32.mrb[0].mxu0
    %505 = vmatprep.mubr.f32.mxu0 0.0
    %506 = vmatmul.mubr.f32.gmra.mrb[0].mxu0 %v32
    %v507 = vpop.f32.mrb[0].mxu0
    %v508 = vadd.f32 0.0, %v507
    %v509 = vpop.f32.mrb[0].mxu0
    %510 = vmatprep.mubr.f32.mxu0 0.0
    %511 = vmatmul.mubr.f32.gmra.mrb[0].mxu0 %v33
    %v512 = vpop.f32.mrb[0].mxu0
    %v513 = vadd.f32 0.0, %v512
    %v514 = vpop.f32.mrb[0].mxu0
    %515 = vmatprep.mubr.f32.mxu0 0.0
    %516 = vmatmul.mubr.f32.gmra.mrb[0].mxu0 %v34
    %v517 = vpop.f32.mrb[0].mxu0
    %v518 = vadd.f32 0.0, %v517
    %v519 = vpop.f32.mrb[0].mxu0
    %520 = vmatprep.mubr.f32.mxu0 0.0
    %521 = vmatmul.mubr.f32.gmra.mrb[0].mxu0 %v35
    %v522 = vpop.f32.mrb[0].mxu0
    %v523 = vadd.f32 0.0, %v522
    %v524 = vpop.f32.mrb[0].mxu0
    %525 = vmatprep.mubr.f32.mxu0 0.0
    %526 = vmatmul.mubr.f32.gmra.mrb[0].mxu0 %v36
    %v527 = vpop.f32.mrb[0].mxu0
    %v528 = vadd.f32 0.0, %v527
    %v529 = vpop.f32.mrb[0].mxu0
    %530 = vmatprep.mubr.f32.mxu0 0.0
    %531 = vmatmul.mubr.f32.gmra.mrb[0].mxu0 %v37
    %v532 = vpop.f32.mrb[0].mxu0
    %v533 = vadd.f32 0.0, %v532
    %v534 = vpop.f32.mrb[0].mxu0
    %535 = vmatprep.mubr.f32.mxu0 0.0
    %536 = vmatmul.mubr.f32.gmra.mrb[0].mxu0 %v38
    %v537 = vpop.f32.mrb[0].mxu0
    %v538 = vadd.f32 0.0, %v537
    %v539 = vpop.f32.mrb[0].mxu0
    %540 = vmatprep.mubr.f32.mxu0 0.0
    %541 = vmatmul.mubr.f32.gmra.mrb[0].mxu0 %v39
    %v542 = vpop.f32.mrb[0].mxu0
    %v543 = vadd.f32 0.0, %v542
    %v544 = vpop.f32.mrb[0].mxu0
    %545 = vmatprep.mubr.f32.mxu0 0.0
    %546 = vmatmul.mubr.f32.gmra.mrb[0].mxu0 %v40
    %v547 = vpop.f32.mrb[0].mxu0
    %v548 = vadd.f32 0.0, %v547
    %v549 = vpop.f32.mrb[0].mxu0
    %550 = vmatprep.mubr.f32.mxu0 0.0
    %551 = vmatmul.mubr.f32.gmra.mrb[0].mxu0 %v41
    %v552 = vpop.f32.mrb[0].mxu0
    %v553 = vadd.f32 0.0, %v552
    %v554 = vpop.f32.mrb[0].mxu0
    %555 = vmatprep.mubr.f32.mxu0 0.0
    %556 = vmatmul.mubr.f32.gmra.mrb[0].mxu0 %v42
    %v557 = vpop.f32.mrb[0].mxu0
    %v558 = vadd.f32 0.0, %v557
    %v559 = vpop.f32.mrb[0].mxu0
    %560 = vmatprep.mubr.f32.mxu0 0.0
    %561 = vmatmul.mubr.f32.gmra.mrb[0].mxu0 %v43
    %v562 = vpop.f32.mrb[0].mxu0
    %v563 = vadd.f32 0.0, %v562
    %v564 = vpop.f32.mrb[0].mxu0
    %565 = vmatprep.mubr.f32.mxu0 0.0
    %566 = vmatmul.mubr.f32.gmra.mrb[0].mxu0 %v44
    %v567 = vpop.f32.mrb[0].mxu0
    %v568 = vadd.f32 0.0, %v567
    %v569 = vpop.f32.mrb[0].mxu0
    %570 = vdwg.mxu0
    %v571 = vlaneseq
    %v572 = vshrl.u32 %v571, 7
    %v573 = vadd.s32 %v572, 8
    %v574 = vadd.s32 %v572, 16
    %v575 = vadd.s32 %v572, 24
    %v576 = vadd.s32 %v572, 32
    %v577 = vadd.s32 %v572, 40
    %v578 = vadd.s32 %v572, 48
    %v579 = vadd.s32 %v572, 56
    %v580 = vadd.s32 %v572, 64
    %v581 = vadd.s32 %v572, 72
    %v582 = vadd.s32 %v572, 80
    %v583 = vadd.s32 %v572, 88
    %v584 = vadd.s32 %v572, 96
    %v585 = vadd.s32 %v572, 104
    %v586 = vadd.s32 %v572, 112
    %v587 = vadd.s32 %v572, 120
    %v588 = vadd.s32 %v572, 128
    %v589 = vadd.s32 %v572, 136
    %v590 = vadd.s32 %v572, 144
    %v591 = vadd.s32 %v572, 152
    %v592 = vadd.s32 %v572, 160
    %v593 = vadd.s32 %v572, 168
    %v594 = vadd.s32 %v572, 176
    %v595 = vadd.s32 %v572, 184
    %v596 = vadd.s32 %v572, 192
    %v597 = vadd.s32 %v572, 200
    %v598 = vadd.s32 %v572, 208
    %v599 = vadd.s32 %v572, 216
    %v600 = vadd.s32 %v572, 224
    %v601 = vadd.s32 %v572, 232
    %v602 = vadd.s32 %v572, 240
    %v603 = vadd.s32 %v572, 248
    %v604 = vadd.s32 %v572, 256
    %v605 = vadd.s32 %v572, 264
    %v606 = vadd.s32 %v572, 272
    %v607 = vadd.s32 %v572, 280
    %v608 = vlaneseq
    %v609 = vand.u32 %v608, 127
    %v610 = vadd.s32 %v609, 128
    %v611 = vadd.s32 %v609, 256
    %v612 = vshra.s32 %v572, 4
    %v613 = vshra.s32 %v573, 4
    %v614 = vshra.s32 %v574, 4
    %v615 = vshra.s32 %v575, 4
    %v616 = vshra.s32 %v576, 4
    %v617 = vshra.s32 %v577, 4
    %v618 = vshra.s32 %v578, 4
    %v619 = vshra.s32 %v579, 4
    %v620 = vshra.s32 %v580, 4
    %v621 = vshra.s32 %v581, 4
    %v622 = vshra.s32 %v582, 4
    %v623 = vshra.s32 %v583, 4
    %v624 = vshra.s32 %v584, 4
    %v625 = vshra.s32 %v585, 4
    %v626 = vshra.s32 %v586, 4
    %v627 = vshra.s32 %v587, 4
    %v628 = vshra.s32 %v588, 4
    %v629 = vshra.s32 %v589, 4
    %v630 = vshra.s32 %v590, 4
    %v631 = vshra.s32 %v591, 4
    %v632 = vshra.s32 %v592, 4
    %v633 = vshra.s32 %v593, 4
    %v634 = vshra.s32 %v594, 4
    %v635 = vshra.s32 %v595, 4
    %v636 = vshra.s32 %v596, 4
    %v637 = vshra.s32 %v597, 4
    %v638 = vshra.s32 %v598, 4
    %v639 = vshra.s32 %v599, 4
    %v640 = vshra.s32 %v600, 4
    %v641 = vshra.s32 %v601, 4
    %v642 = vshra.s32 %v602, 4
    %v643 = vshra.s32 %v603, 4
    %v644 = vshra.s32 %v604, 4
    %v645 = vshra.s32 %v605, 4
    %v646 = vshra.s32 %v606, 4
    %v647 = vshra.s32 %v607, 4
    %v648 = vshra.s32 %v609, 4
    %v649 = vshra.s32 %v610, 4
    %v650 = vshra.s32 %v611, 4
    %vm651 = vcmp.eq.s32.totalorder %v612, %v648
    %vm652 = vcmp.eq.s32.totalorder %v612, %v649
    %vm653 = vcmp.eq.s32.totalorder %v612, %v650
    %vm654 = vcmp.eq.s32.totalorder %v613, %v648
    %vm655 = vcmp.eq.s32.totalorder %v613, %v649
    %vm656 = vcmp.eq.s32.totalorder %v613, %v650
    %vm657 = vcmp.eq.s32.totalorder %v614, %v648
    %vm658 = vcmp.eq.s32.totalorder %v614, %v649
    %vm659 = vcmp.eq.s32.totalorder %v614, %v650
    %vm660 = vcmp.eq.s32.totalorder %v615, %v648
    %vm661 = vcmp.eq.s32.totalorder %v615, %v649
    %vm662 = vcmp.eq.s32.totalorder %v615, %v650
    %vm663 = vcmp.eq.s32.totalorder %v616, %v648
    %vm664 = vcmp.eq.s32.totalorder %v616, %v649
    %vm665 = vcmp.eq.s32.totalorder %v616, %v650
    %vm666 = vcmp.eq.s32.totalorder %v617, %v648
    %vm667 = vcmp.eq.s32.totalorder %v617, %v649
    %vm668 = vcmp.eq.s32.totalorder %v617, %v650
    %vm669 = vcmp.eq.s32.totalorder %v618, %v648
    %vm670 = vcmp.eq.s32.totalorder %v618, %v649
    %vm671 = vcmp.eq.s32.totalorder %v618, %v650
    %vm672 = vcmp.eq.s32.totalorder %v619, %v648
    %vm673 = vcmp.eq.s32.totalorder %v619, %v649
    %vm674 = vcmp.eq.s32.totalorder %v619, %v650
    %vm675 = vcmp.eq.s32.totalorder %v620, %v648
    %vm676 = vcmp.eq.s32.totalorder %v620, %v649
    %vm677 = vcmp.eq.s32.totalorder %v620, %v650
    %vm678 = vcmp.eq.s32.totalorder %v621, %v648
    %vm679 = vcmp.eq.s32.totalorder %v621, %v649
    %vm680 = vcmp.eq.s32.totalorder %v621, %v650
    %vm681 = vcmp.eq.s32.totalorder %v622, %v648
    %vm682 = vcmp.eq.s32.totalorder %v622, %v649
    %vm683 = vcmp.eq.s32.totalorder %v622, %v650
    %vm684 = vcmp.eq.s32.totalorder %v623, %v648
    %vm685 = vcmp.eq.s32.totalorder %v623, %v649
    %vm686 = vcmp.eq.s32.totalorder %v623, %v650
    %vm687 = vcmp.eq.s32.totalorder %v624, %v648
    %vm688 = vcmp.eq.s32.totalorder %v624, %v649
    %vm689 = vcmp.eq.s32.totalorder %v624, %v650
    %vm690 = vcmp.eq.s32.totalorder %v625, %v648
    %vm691 = vcmp.eq.s32.totalorder %v625, %v649
    %vm692 = vcmp.eq.s32.totalorder %v625, %v650
    %vm693 = vcmp.eq.s32.totalorder %v626, %v648
    %vm694 = vcmp.eq.s32.totalorder %v626, %v649
    %vm695 = vcmp.eq.s32.totalorder %v626, %v650
    %vm696 = vcmp.eq.s32.totalorder %v627, %v648
    %vm697 = vcmp.eq.s32.totalorder %v627, %v649
    %vm698 = vcmp.eq.s32.totalorder %v627, %v650
    %vm699 = vcmp.eq.s32.totalorder %v628, %v648
    %vm700 = vcmp.eq.s32.totalorder %v628, %v649
    %vm701 = vcmp.eq.s32.totalorder %v628, %v650
    %vm702 = vcmp.eq.s32.totalorder %v629, %v648
    %vm703 = vcmp.eq.s32.totalorder %v629, %v649
    %vm704 = vcmp.eq.s32.totalorder %v629, %v650
    %vm705 = vcmp.eq.s32.totalorder %v630, %v648
    %vm706 = vcmp.eq.s32.totalorder %v630, %v649
    %vm707 = vcmp.eq.s32.totalorder %v630, %v650
    %vm708 = vcmp.eq.s32.totalorder %v631, %v648
    %vm709 = vcmp.eq.s32.totalorder %v631, %v649
    %vm710 = vcmp.eq.s32.totalorder %v631, %v650
    %vm711 = vcmp.eq.s32.totalorder %v632, %v648
    %vm712 = vcmp.eq.s32.totalorder %v632, %v649
    %vm713 = vcmp.eq.s32.totalorder %v632, %v650
    %vm714 = vcmp.eq.s32.totalorder %v633, %v648
    %vm715 = vcmp.eq.s32.totalorder %v633, %v649
    %vm716 = vcmp.eq.s32.totalorder %v633, %v650
    %vm717 = vcmp.eq.s32.totalorder %v634, %v648
    %vm718 = vcmp.eq.s32.totalorder %v634, %v649
    %vm719 = vcmp.eq.s32.totalorder %v634, %v650
    %vm720 = vcmp.eq.s32.totalorder %v635, %v648
    %vm721 = vcmp.eq.s32.totalorder %v635, %v649
    %vm722 = vcmp.eq.s32.totalorder %v635, %v650
    %vm723 = vcmp.eq.s32.totalorder %v636, %v648
    %vm724 = vcmp.eq.s32.totalorder %v636, %v649
    %vm725 = vcmp.eq.s32.totalorder %v636, %v650
    %vm726 = vcmp.eq.s32.totalorder %v637, %v648
    %vm727 = vcmp.eq.s32.totalorder %v637, %v649
    %vm728 = vcmp.eq.s32.totalorder %v637, %v650
    %vm729 = vcmp.eq.s32.totalorder %v638, %v648
    %vm730 = vcmp.eq.s32.totalorder %v638, %v649
    %vm731 = vcmp.eq.s32.totalorder %v638, %v650
    %vm732 = vcmp.eq.s32.totalorder %v639, %v648
    %vm733 = vcmp.eq.s32.totalorder %v639, %v649
    %vm734 = vcmp.eq.s32.totalorder %v639, %v650
    %vm735 = vcmp.eq.s32.totalorder %v640, %v648
    %vm736 = vcmp.eq.s32.totalorder %v640, %v649
    %vm737 = vcmp.eq.s32.totalorder %v640, %v650
    %vm738 = vcmp.eq.s32.totalorder %v641, %v648
    %vm739 = vcmp.eq.s32.totalorder %v641, %v649
    %vm740 = vcmp.eq.s32.totalorder %v641, %v650
    %vm741 = vcmp.eq.s32.totalorder %v642, %v648
    %vm742 = vcmp.eq.s32.totalorder %v642, %v649
    %vm743 = vcmp.eq.s32.totalorder %v642, %v650
    %vm744 = vcmp.eq.s32.totalorder %v643, %v648
    %vm745 = vcmp.eq.s32.totalorder %v643, %v649
    %vm746 = vcmp.eq.s32.totalorder %v643, %v650
    %vm747 = vcmp.eq.s32.totalorder %v644, %v648
    %vm748 = vcmp.eq.s32.totalorder %v644, %v649
    %vm749 = vcmp.eq.s32.totalorder %v644, %v650
    %vm750 = vcmp.eq.s32.totalorder %v645, %v648
    %vm751 = vcmp.eq.s32.totalorder %v645, %v649
    %vm752 = vcmp.eq.s32.totalorder %v645, %v650
    %vm753 = vcmp.eq.s32.totalorder %v646, %v648
    %vm754 = vcmp.eq.s32.totalorder %v646, %v649
    %vm755 = vcmp.eq.s32.totalorder %v646, %v650
    %vm756 = vcmp.eq.s32.totalorder %v647, %v648
    %vm757 = vcmp.eq.s32.totalorder %v647, %v649
    %vm758 = vcmp.eq.s32.totalorder %v647, %v650
    %vm759 = vcmp.ne.s32.totalorder %v572, %v609
    %vm760 = vcmp.ne.s32.totalorder %v572, %v610
    %vm761 = vcmp.ne.s32.totalorder %v572, %v611
    %vm762 = vcmp.ne.s32.totalorder %v573, %v609
    %vm763 = vcmp.ne.s32.totalorder %v573, %v610
    %vm764 = vcmp.ne.s32.totalorder %v573, %v611
    %vm765 = vcmp.ne.s32.totalorder %v574, %v609
    %vm766 = vcmp.ne.s32.totalorder %v574, %v610
    %vm767 = vcmp.ne.s32.totalorder %v574, %v611
    %vm768 = vcmp.ne.s32.totalorder %v575, %v609
    %vm769 = vcmp.ne.s32.totalorder %v575, %v610
    %vm770 = vcmp.ne.s32.totalorder %v575, %v611
    %vm771 = vcmp.ne.s32.totalorder %v576, %v609
    %vm772 = vcmp.ne.s32.totalorder %v576, %v610
    %vm773 = vcmp.ne.s32.totalorder %v576, %v611
    %vm774 = vcmp.ne.s32.totalorder %v577, %v609
    %vm775 = vcmp.ne.s32.totalorder %v577, %v610
    %vm776 = vcmp.ne.s32.totalorder %v577, %v611
    %vm777 = vcmp.ne.s32.totalorder %v578, %v609
    %vm778 = vcmp.ne.s32.totalorder %v578, %v610
    %vm779 = vcmp.ne.s32.totalorder %v578, %v611
    %vm780 = vcmp.ne.s32.totalorder %v579, %v609
    %vm781 = vcmp.ne.s32.totalorder %v579, %v610
    %vm782 = vcmp.ne.s32.totalorder %v579, %v611
    %vm783 = vcmp.ne.s32.totalorder %v580, %v609
    %vm784 = vcmp.ne.s32.totalorder %v580, %v610
    %vm785 = vcmp.ne.s32.totalorder %v580, %v611
    %vm786 = vcmp.ne.s32.totalorder %v581, %v609
    %vm787 = vcmp.ne.s32.totalorder %v581, %v610
    %vm788 = vcmp.ne.s32.totalorder %v581, %v611
    %vm789 = vcmp.ne.s32.totalorder %v582, %v609
    %vm790 = vcmp.ne.s32.totalorder %v582, %v610
    %vm791 = vcmp.ne.s32.totalorder %v582, %v611
    %vm792 = vcmp.ne.s32.totalorder %v583, %v609
    %vm793 = vcmp.ne.s32.totalorder %v583, %v610
    %vm794 = vcmp.ne.s32.totalorder %v583, %v611
    %vm795 = vcmp.ne.s32.totalorder %v584, %v609
    %vm796 = vcmp.ne.s32.totalorder %v584, %v610
    %vm797 = vcmp.ne.s32.totalorder %v584, %v611
    %vm798 = vcmp.ne.s32.totalorder %v585, %v609
    %vm799 = vcmp.ne.s32.totalorder %v585, %v610
    %vm800 = vcmp.ne.s32.totalorder %v585, %v611
    %vm801 = vcmp.ne.s32.totalorder %v586, %v609
    %vm802 = vcmp.ne.s32.totalorder %v586, %v610
    %vm803 = vcmp.ne.s32.totalorder %v586, %v611
    %vm804 = vcmp.ne.s32.totalorder %v587, %v609
    %vm805 = vcmp.ne.s32.totalorder %v587, %v610
    %vm806 = vcmp.ne.s32.totalorder %v587, %v611
    %vm807 = vcmp.ne.s32.totalorder %v588, %v609
    %vm808 = vcmp.ne.s32.totalorder %v588, %v610
    %vm809 = vcmp.ne.s32.totalorder %v588, %v611
    %vm810 = vcmp.ne.s32.totalorder %v589, %v609
    %vm811 = vcmp.ne.s32.totalorder %v589, %v610
    %vm812 = vcmp.ne.s32.totalorder %v589, %v611
    %vm813 = vcmp.ne.s32.totalorder %v590, %v609
    %vm814 = vcmp.ne.s32.totalorder %v590, %v610
    %vm815 = vcmp.ne.s32.totalorder %v590, %v611
    %vm816 = vcmp.ne.s32.totalorder %v591, %v609
    %vm817 = vcmp.ne.s32.totalorder %v591, %v610
    %vm818 = vcmp.ne.s32.totalorder %v591, %v611
    %vm819 = vcmp.ne.s32.totalorder %v592, %v609
    %vm820 = vcmp.ne.s32.totalorder %v592, %v610
    %vm821 = vcmp.ne.s32.totalorder %v592, %v611
    %vm822 = vcmp.ne.s32.totalorder %v593, %v609
    %vm823 = vcmp.ne.s32.totalorder %v593, %v610
    %vm824 = vcmp.ne.s32.totalorder %v593, %v611
    %vm825 = vcmp.ne.s32.totalorder %v594, %v609
    %vm826 = vcmp.ne.s32.totalorder %v594, %v610
    %vm827 = vcmp.ne.s32.totalorder %v594, %v611
    %vm828 = vcmp.ne.s32.totalorder %v595, %v609
    %vm829 = vcmp.ne.s32.totalorder %v595, %v610
    %vm830 = vcmp.ne.s32.totalorder %v595, %v611
    %vm831 = vcmp.ne.s32.totalorder %v596, %v609
    %vm832 = vcmp.ne.s32.totalorder %v596, %v610
    %vm833 = vcmp.ne.s32.totalorder %v596, %v611
    %vm834 = vcmp.ne.s32.totalorder %v597, %v609
    %vm835 = vcmp.ne.s32.totalorder %v597, %v610
    %vm836 = vcmp.ne.s32.totalorder %v597, %v611
    %vm837 = vcmp.ne.s32.totalorder %v598, %v609
    %vm838 = vcmp.ne.s32.totalorder %v598, %v610
    %vm839 = vcmp.ne.s32.totalorder %v598, %v611
    %vm840 = vcmp.ne.s32.totalorder %v599, %v609
    %vm841 = vcmp.ne.s32.totalorder %v599, %v610
    %vm842 = vcmp.ne.s32.totalorder %v599, %v611
    %vm843 = vcmp.ne.s32.totalorder %v600, %v609
    %vm844 = vcmp.ne.s32.totalorder %v600, %v610
    %vm845 = vcmp.ne.s32.totalorder %v600, %v611
    %vm846 = vcmp.ne.s32.totalorder %v601, %v609
    %vm847 = vcmp.ne.s32.totalorder %v601, %v610
    %vm848 = vcmp.ne.s32.totalorder %v601, %v611
    %vm849 = vcmp.ne.s32.totalorder %v602, %v609
    %vm850 = vcmp.ne.s32.totalorder %v602, %v610
    %vm851 = vcmp.ne.s32.totalorder %v602, %v611
    %vm852 = vcmp.ne.s32.totalorder %v603, %v609
    %vm853 = vcmp.ne.s32.totalorder %v603, %v610
    %vm854 = vcmp.ne.s32.totalorder %v603, %v611
    %vm855 = vcmp.ne.s32.totalorder %v604, %v609
    %vm856 = vcmp.ne.s32.totalorder %v604, %v610
    %vm857 = vcmp.ne.s32.totalorder %v604, %v611
    %vm858 = vcmp.ne.s32.totalorder %v605, %v609
    %vm859 = vcmp.ne.s32.totalorder %v605, %v610
    %vm860 = vcmp.ne.s32.totalorder %v605, %v611
    %vm861 = vcmp.ne.s32.totalorder %v606, %v609
    %vm862 = vcmp.ne.s32.totalorder %v606, %v610
    %vm863 = vcmp.ne.s32.totalorder %v606, %v611
    %vm864 = vcmp.ne.s32.totalorder %v607, %v609
    %vm865 = vcmp.ne.s32.totalorder %v607, %v610
    %vm866 = vcmp.ne.s32.totalorder %v607, %v611
    %vm867 = vmand %vm651, %vm759
    %vm868 = vmand %vm652, %vm760
    %vm869 = vmand %vm653, %vm761
    %vm870 = vmand %vm654, %vm762
    %vm871 = vmand %vm655, %vm763
    %vm872 = vmand %vm656, %vm764
    %vm873 = vmand %vm657, %vm765
    %vm874 = vmand %vm658, %vm766
    %vm875 = vmand %vm659, %vm767
    %vm876 = vmand %vm660, %vm768
    %vm877 = vmand %vm661, %vm769
    %vm878 = vmand %vm662, %vm770
    %vm879 = vmand %vm663, %vm771
    %vm880 = vmand %vm664, %vm772
    %vm881 = vmand %vm665, %vm773
    %vm882 = vmand %vm666, %vm774
    %vm883 = vmand %vm667, %vm775
    %vm884 = vmand %vm668, %vm776
    %vm885 = vmand %vm669, %vm777
    %vm886 = vmand %vm670, %vm778
    %vm887 = vmand %vm671, %vm779
    %vm888 = vmand %vm672, %vm780
    %vm889 = vmand %vm673, %vm781
    %vm890 = vmand %vm674, %vm782
    %vm891 = vmand %vm675, %vm783
    %vm892 = vmand %vm676, %vm784
    %vm893 = vmand %vm677, %vm785
    %vm894 = vmand %vm678, %vm786
    %vm895 = vmand %vm679, %vm787
    %vm896 = vmand %vm680, %vm788
    %vm897 = vmand %vm681, %vm789
    %vm898 = vmand %vm682, %vm790
    %vm899 = vmand %vm683, %vm791
    %vm900 = vmand %vm684, %vm792
    %vm901 = vmand %vm685, %vm793
    %vm902 = vmand %vm686, %vm794
    %vm903 = vmand %vm687, %vm795
    %vm904 = vmand %vm688, %vm796
    %vm905 = vmand %vm689, %vm797
    %vm906 = vmand %vm690, %vm798
    %vm907 = vmand %vm691, %vm799
    %vm908 = vmand %vm692, %vm800
    %vm909 = vmand %vm693, %vm801
    %vm910 = vmand %vm694, %vm802
    %vm911 = vmand %vm695, %vm803
    %vm912 = vmand %vm696, %vm804
    %vm913 = vmand %vm697, %vm805
    %vm914 = vmand %vm698, %vm806
    %vm915 = vmand %vm699, %vm807
    %vm916 = vmand %vm700, %vm808
    %vm917 = vmand %vm701, %vm809
    %vm918 = vmand %vm702, %vm810
    %vm919 = vmand %vm703, %vm811
    %vm920 = vmand %vm704, %vm812
    %vm921 = vmand %vm705, %vm813
    %vm922 = vmand %vm706, %vm814
    %vm923 = vmand %vm707, %vm815
    %vm924 = vmand %vm708, %vm816
    %vm925 = vmand %vm709, %vm817
    %vm926 = vmand %vm710, %vm818
    %vm927 = vmand %vm711, %vm819
    %vm928 = vmand %vm712, %vm820
    %vm929 = vmand %vm713, %vm821
    %vm930 = vmand %vm714, %vm822
    %vm931 = vmand %vm715, %vm823
    %vm932 = vmand %vm716, %vm824
    %vm933 = vmand %vm717, %vm825
    %vm934 = vmand %vm718, %vm826
    %vm935 = vmand %vm719, %vm827
    %vm936 = vmand %vm720, %vm828
    %vm937 = vmand %vm721, %vm829
    %vm938 = vmand %vm722, %vm830
    %vm939 = vmand %vm723, %vm831
    %vm940 = vmand %vm724, %vm832
    %vm941 = vmand %vm725, %vm833
    %vm942 = vmand %vm726, %vm834
    %vm943 = vmand %vm727, %vm835
    %vm944 = vmand %vm728, %vm836
    %vm945 = vmand %vm729, %vm837
    %vm946 = vmand %vm730, %vm838
    %vm947 = vmand %vm731, %vm839
    %vm948 = vmand %vm732, %vm840
    %vm949 = vmand %vm733, %vm841
    %vm950 = vmand %vm734, %vm842
    %vm951 = vmand %vm735, %vm843
    %vm952 = vmand %vm736, %vm844
    %vm953 = vmand %vm737, %vm845
    %vm954 = vmand %vm738, %vm846
    %vm955 = vmand %vm739, %vm847
    %vm956 = vmand %vm740, %vm848
    %vm957 = vmand %vm741, %vm849
    %vm958 = vmand %vm742, %vm850
    %vm959 = vmand %vm743, %vm851
    %vm960 = vmand %vm744, %vm852
    %vm961 = vmand %vm745, %vm853
    %vm962 = vmand %vm746, %vm854
    %vm963 = vmand %vm747, %vm855
    %vm964 = vmand %vm748, %vm856
    %vm965 = vmand %vm749, %vm857
    %vm966 = vmand %vm750, %vm858
    %vm967 = vmand %vm751, %vm859
    %vm968 = vmand %vm752, %vm860
    %vm969 = vmand %vm753, %vm861
    %vm970 = vmand %vm754, %vm862
    %vm971 = vmand %vm755, %vm863
    %vm972 = vmand %vm756, %vm864
    %vm973 = vmand %vm757, %vm865
    %vm974 = vmand %vm758, %vm866
    %v975 = vsel %vm867, %v112, -1e+30
    %v976 = vsel %vm868, %v114, -1e+30
    %v977 = vsel %vm869, %v393, -1e+30
    %v978 = vsel %vm870, %v118, -1e+30
    %v979 = vsel %vm871, %v120, -1e+30
    %v980 = vsel %vm872, %v398, -1e+30
    %v981 = vsel %vm873, %v124, -1e+30
    %v982 = vsel %vm874, %v126, -1e+30
    %v983 = vsel %vm875, %v403, -1e+30
    %v984 = vsel %vm876, %v130, -1e+30
    %v985 = vsel %vm877, %v132, -1e+30
    %v986 = vsel %vm878, %v408, -1e+30
    %v987 = vsel %vm879, %v136, -1e+30
    %v988 = vsel %vm880, %v138, -1e+30
    %v989 = vsel %vm881, %v413, -1e+30
    %v990 = vsel %vm882, %v142, -1e+30
    %v991 = vsel %vm883, %v144, -1e+30
    %v992 = vsel %vm884, %v418, -1e+30
    %v993 = vsel %vm885, %v148, -1e+30
    %v994 = vsel %vm886, %v150, -1e+30
    %v995 = vsel %vm887, %v423, -1e+30
    %v996 = vsel %vm888, %v154, -1e+30
    %v997 = vsel %vm889, %v156, -1e+30
    %v998 = vsel %vm890, %v428, -1e+30
    %v999 = vsel %vm891, %v160, -1e+30
    %v1000 = vsel %vm892, %v162, -1e+30
    %v1001 = vsel %vm893, %v433, -1e+30
    %v1002 = vsel %vm894, %v166, -1e+30
    %v1003 = vsel %vm895, %v168, -1e+30
    %v1004 = vsel %vm896, %v438, -1e+30
    %v1005 = vsel %vm897, %v172, -1e+30
    %v1006 = vsel %vm898, %v174, -1e+30
    %v1007 = vsel %vm899, %v443, -1e+30
    %v1008 = vsel %vm900, %v178, -1e+30
    %v1009 = vsel %vm901, %v180, -1e+30
    %v1010 = vsel %vm902, %v448, -1e+30
    %v1011 = vsel %vm903, %v184, -1e+30
    %v1012 = vsel %vm904, %v186, -1e+30
    %v1013 = vsel %vm905, %v453, -1e+30
    %v1014 = vsel %vm906, %v190, -1e+30
    %v1015 = vsel %vm907, %v192, -1e+30
    %v1016 = vsel %vm908, %v458, -1e+30
    %v1017 = vsel %vm909, %v196, -1e+30
    %v1018 = vsel %vm910, %v198, -1e+30
    %v1019 = vsel %vm911, %v463, -1e+30
    %v1020 = vsel %vm912, %v202, -1e+30
    %v1021 = vsel %vm913, %v204, -1e+30
    %v1022 = vsel %vm914, %v468, -1e+30
    %v1023 = vsel %vm915, %v208, -1e+30
    %v1024 = vsel %vm916, %v210, -1e+30
    %v1025 = vsel %vm917, %v473, -1e+30
    %v1026 = vsel %vm918, %v214, -1e+30
    %v1027 = vsel %vm919, %v216, -1e+30
    %v1028 = vsel %vm920, %v478, -1e+30
    %v1029 = vsel %vm921, %v220, -1e+30
    %v1030 = vsel %vm922, %v222, -1e+30
    %v1031 = vsel %vm923, %v483, -1e+30
    %v1032 = vsel %vm924, %v226, -1e+30
    %v1033 = vsel %vm925, %v228, -1e+30
    %v1034 = vsel %vm926, %v488, -1e+30
    %v1035 = vsel %vm927, %v232, -1e+30
    %v1036 = vsel %vm928, %v234, -1e+30
    %v1037 = vsel %vm929, %v493, -1e+30
    %v1038 = vsel %vm930, %v238, -1e+30
    %v1039 = vsel %vm931, %v240, -1e+30
    %v1040 = vsel %vm932, %v498, -1e+30
    %v1041 = vsel %vm933, %v244, -1e+30
    %v1042 = vsel %vm934, %v246, -1e+30
    %v1043 = vsel %vm935, %v503, -1e+30
    %v1044 = vsel %vm936, %v250, -1e+30
    %v1045 = vsel %vm937, %v252, -1e+30
    %v1046 = vsel %vm938, %v508, -1e+30
    %v1047 = vsel %vm939, %v256, -1e+30
    %v1048 = vsel %vm940, %v258, -1e+30
    %v1049 = vsel %vm941, %v513, -1e+30
    %v1050 = vsel %vm942, %v262, -1e+30
    %v1051 = vsel %vm943, %v264, -1e+30
    %v1052 = vsel %vm944, %v518, -1e+30
    %v1053 = vsel %vm945, %v268, -1e+30
    %v1054 = vsel %vm946, %v270, -1e+30
    %v1055 = vsel %vm947, %v523, -1e+30
    %v1056 = vsel %vm948, %v274, -1e+30
    %v1057 = vsel %vm949, %v276, -1e+30
    %v1058 = vsel %vm950, %v528, -1e+30
    %v1059 = vsel %vm951, %v280, -1e+30
    %v1060 = vsel %vm952, %v282, -1e+30
    %v1061 = vsel %vm953, %v533, -1e+30
    %v1062 = vsel %vm954, %v286, -1e+30
    %v1063 = vsel %vm955, %v288, -1e+30
    %v1064 = vsel %vm956, %v538, -1e+30
    %v1065 = vsel %vm957, %v292, -1e+30
    %v1066 = vsel %vm958, %v294, -1e+30
    %v1067 = vsel %vm959, %v543, -1e+30
    %v1068 = vsel %vm960, %v298, -1e+30
    %v1069 = vsel %vm961, %v300, -1e+30
    %v1070 = vsel %vm962, %v548, -1e+30
    %v1071 = vsel %vm963, %v304, -1e+30
    %v1072 = vsel %vm964, %v306, -1e+30
    %v1073 = vsel %vm965, %v553, -1e+30
    %v1074 = vsel %vm966, %v310, -1e+30
    %v1075 = vsel %vm967, %v312, -1e+30
    %v1076 = vsel %vm968, %v558, -1e+30
    %v1077 = vsel %vm969, %v316, -1e+30
    %v1078 = vsel %vm970, %v318, -1e+30
    %v1079 = vsel %vm971, %v563, -1e+30
    %v1080 = vsel %vm972, %v322, -1e+30
    %v1081 = vsel %vm973, %v324, -1e+30
    %v1082 = vsel %vm974, %v568, -1e+30
    %v1083 = vmax.f32 %v975, %v976
    %vm1084 = vcmask 261120
    %v1085 = vsel %vm1084, %v977, -inf
    %v1086 = vmax.f32 %v1083, %v1085
    %1087 = vmax.xlane.f32.xlu0 %v1086
    %v1088 = vpop.xlane.xlu0 %1087
    %v1089 = vmax.f32 %v978, %v979
    %v1090 = vsel %vm1084, %v980, -inf
    %v1091 = vmax.f32 %v1089, %v1090
    %1092 = vmax.xlane.f32.xlu0 %v1091
    %v1093 = vpop.xlane.xlu0 %1092
    %v1094 = vmax.f32 %v981, %v982
    %v1095 = vsel %vm1084, %v983, -inf
    %v1096 = vmax.f32 %v1094, %v1095
    %1097 = vmax.xlane.f32.xlu0 %v1096
    %v1098 = vpop.xlane.xlu0 %1097
    %v1099 = vmax.f32 %v984, %v985
    %v1100 = vsel %vm1084, %v986, -inf
    %v1101 = vmax.f32 %v1099, %v1100
    %1102 = vmax.xlane.f32.xlu0 %v1101
    %v1103 = vpop.xlane.xlu0 %1102
    %v1104 = vmax.f32 %v987, %v988
    %v1105 = vsel %vm1084, %v989, -inf
    %v1106 = vmax.f32 %v1104, %v1105
    %1107 = vmax.xlane.f32.xlu0 %v1106
    %v1108 = vpop.xlane.xlu0 %1107
    %v1109 = vmax.f32 %v990, %v991
    %v1110 = vsel %vm1084, %v992, -inf
    %v1111 = vmax.f32 %v1109, %v1110
    %1112 = vmax.xlane.f32.xlu0 %v1111
    %v1113 = vpop.xlane.xlu0 %1112
    %v1114 = vmax.f32 %v993, %v994
    %v1115 = vsel %vm1084, %v995, -inf
    %v1116 = vmax.f32 %v1114, %v1115
    %1117 = vmax.xlane.f32.xlu0 %v1116
    %v1118 = vpop.xlane.xlu0 %1117
    %v1119 = vmax.f32 %v996, %v997
    %v1120 = vsel %vm1084, %v998, -inf
    %v1121 = vmax.f32 %v1119, %v1120
    %1122 = vmax.xlane.f32.xlu0 %v1121
    %v1123 = vpop.xlane.xlu0 %1122
    %v1124 = vmax.f32 %v999, %v1000
    %v1125 = vsel %vm1084, %v1001, -inf
    %v1126 = vmax.f32 %v1124, %v1125
    %1127 = vmax.xlane.f32.xlu0 %v1126
    %v1128 = vpop.xlane.xlu0 %1127
    %v1129 = vmax.f32 %v1002, %v1003
    %v1130 = vsel %vm1084, %v1004, -inf
    %v1131 = vmax.f32 %v1129, %v1130
    %1132 = vmax.xlane.f32.xlu0 %v1131
    %v1133 = vpop.xlane.xlu0 %1132
    %v1134 = vmax.f32 %v1005, %v1006
    %v1135 = vsel %vm1084, %v1007, -inf
    %v1136 = vmax.f32 %v1134, %v1135
    %1137 = vmax.xlane.f32.xlu0 %v1136
    %v1138 = vpop.xlane.xlu0 %1137
    %v1139 = vmax.f32 %v1008, %v1009
    %v1140 = vsel %vm1084, %v1010, -inf
    %v1141 = vmax.f32 %v1139, %v1140
    %1142 = vmax.xlane.f32.xlu0 %v1141
    %v1143 = vpop.xlane.xlu0 %1142
    %v1144 = vmax.f32 %v1011, %v1012
    %v1145 = vsel %vm1084, %v1013, -inf
    %v1146 = vmax.f32 %v1144, %v1145
    %1147 = vmax.xlane.f32.xlu0 %v1146
    %v1148 = vpop.xlane.xlu0 %1147
    %v1149 = vmax.f32 %v1014, %v1015
    %v1150 = vsel %vm1084, %v1016, -inf
    %v1151 = vmax.f32 %v1149, %v1150
    %1152 = vmax.xlane.f32.xlu0 %v1151
    %v1153 = vpop.xlane.xlu0 %1152
    %v1154 = vmax.f32 %v1017, %v1018
    %v1155 = vsel %vm1084, %v1019, -inf
    %v1156 = vmax.f32 %v1154, %v1155
    %1157 = vmax.xlane.f32.xlu0 %v1156
    %v1158 = vpop.xlane.xlu0 %1157
    %v1159 = vmax.f32 %v1020, %v1021
    %v1160 = vsel %vm1084, %v1022, -inf
    %v1161 = vmax.f32 %v1159, %v1160
    %1162 = vmax.xlane.f32.xlu0 %v1161
    %v1163 = vpop.xlane.xlu0 %1162
    %v1164 = vmax.f32 %v1023, %v1024
    %v1165 = vsel %vm1084, %v1025, -inf
    %v1166 = vmax.f32 %v1164, %v1165
    %1167 = vmax.xlane.f32.xlu0 %v1166
    %v1168 = vpop.xlane.xlu0 %1167
    %v1169 = vmax.f32 %v1026, %v1027
    %v1170 = vsel %vm1084, %v1028, -inf
    %v1171 = vmax.f32 %v1169, %v1170
    %1172 = vmax.xlane.f32.xlu0 %v1171
    %v1173 = vpop.xlane.xlu0 %1172
    %v1174 = vmax.f32 %v1029, %v1030
    %v1175 = vsel %vm1084, %v1031, -inf
    %v1176 = vmax.f32 %v1174, %v1175
    %1177 = vmax.xlane.f32.xlu0 %v1176
    %v1178 = vpop.xlane.xlu0 %1177
    %v1179 = vmax.f32 %v1032, %v1033
    %v1180 = vsel %vm1084, %v1034, -inf
    %v1181 = vmax.f32 %v1179, %v1180
    %1182 = vmax.xlane.f32.xlu0 %v1181
    %v1183 = vpop.xlane.xlu0 %1182
    %v1184 = vmax.f32 %v1035, %v1036
    %v1185 = vsel %vm1084, %v1037, -inf
    %v1186 = vmax.f32 %v1184, %v1185
    %1187 = vmax.xlane.f32.xlu0 %v1186
    %v1188 = vpop.xlane.xlu0 %1187
    %v1189 = vmax.f32 %v1038, %v1039
    %v1190 = vsel %vm1084, %v1040, -inf
    %v1191 = vmax.f32 %v1189, %v1190
    %1192 = vmax.xlane.f32.xlu0 %v1191
    %v1193 = vpop.xlane.xlu0 %1192
    %v1194 = vmax.f32 %v1041, %v1042
    %v1195 = vsel %vm1084, %v1043, -inf
    %v1196 = vmax.f32 %v1194, %v1195
    %1197 = vmax.xlane.f32.xlu0 %v1196
    %v1198 = vpop.xlane.xlu0 %1197
    %v1199 = vmax.f32 %v1044, %v1045
    %v1200 = vsel %vm1084, %v1046, -inf
    %v1201 = vmax.f32 %v1199, %v1200
    %1202 = vmax.xlane.f32.xlu0 %v1201
    %v1203 = vpop.xlane.xlu0 %1202
    %v1204 = vmax.f32 %v1047, %v1048
    %v1205 = vsel %vm1084, %v1049, -inf
    %v1206 = vmax.f32 %v1204, %v1205
    %1207 = vmax.xlane.f32.xlu0 %v1206
    %v1208 = vpop.xlane.xlu0 %1207
    %v1209 = vmax.f32 %v1050, %v1051
    %v1210 = vsel %vm1084, %v1052, -inf
    %v1211 = vmax.f32 %v1209, %v1210
    %1212 = vmax.xlane.f32.xlu0 %v1211
    %v1213 = vpop.xlane.xlu0 %1212
    %v1214 = vmax.f32 %v1053, %v1054
    %v1215 = vsel %vm1084, %v1055, -inf
    %v1216 = vmax.f32 %v1214, %v1215
    %1217 = vmax.xlane.f32.xlu0 %v1216
    %v1218 = vpop.xlane.xlu0 %1217
    %v1219 = vmax.f32 %v1056, %v1057
    %v1220 = vsel %vm1084, %v1058, -inf
    %v1221 = vmax.f32 %v1219, %v1220
    %1222 = vmax.xlane.f32.xlu0 %v1221
    %v1223 = vpop.xlane.xlu0 %1222
    %v1224 = vmax.f32 %v1059, %v1060
    %v1225 = vsel %vm1084, %v1061, -inf
    %v1226 = vmax.f32 %v1224, %v1225
    %1227 = vmax.xlane.f32.xlu0 %v1226
    %v1228 = vpop.xlane.xlu0 %1227
    %v1229 = vmax.f32 %v1062, %v1063
    %v1230 = vsel %vm1084, %v1064, -inf
    %v1231 = vmax.f32 %v1229, %v1230
    %1232 = vmax.xlane.f32.xlu0 %v1231
    %v1233 = vpop.xlane.xlu0 %1232
    %v1234 = vmax.f32 %v1065, %v1066
    %v1235 = vsel %vm1084, %v1067, -inf
    %v1236 = vmax.f32 %v1234, %v1235
    %1237 = vmax.xlane.f32.xlu0 %v1236
    %v1238 = vpop.xlane.xlu0 %1237
    %v1239 = vmax.f32 %v1068, %v1069
    %v1240 = vsel %vm1084, %v1070, -inf
    %v1241 = vmax.f32 %v1239, %v1240
    %1242 = vmax.xlane.f32.xlu0 %v1241
    %v1243 = vpop.xlane.xlu0 %1242
    %v1244 = vmax.f32 %v1071, %v1072
    %v1245 = vsel %vm1084, %v1073, -inf
    %v1246 = vmax.f32 %v1244, %v1245
    %1247 = vmax.xlane.f32.xlu0 %v1246
    %v1248 = vpop.xlane.xlu0 %1247
    %v1249 = vmax.f32 %v1074, %v1075
    %v1250 = vsel %vm1084, %v1076, -inf
    %v1251 = vmax.f32 %v1249, %v1250
    %1252 = vmax.xlane.f32.xlu0 %v1251
    %v1253 = vpop.xlane.xlu0 %1252
    %v1254 = vmax.f32 %v1077, %v1078
    %v1255 = vsel %vm1084, %v1079, -inf
    %v1256 = vmax.f32 %v1254, %v1255
    %1257 = vmax.xlane.f32.xlu0 %v1256
    %v1258 = vpop.xlane.xlu0 %1257
    %v1259 = vmax.f32 %v1080, %v1081
    %v1260 = vsel %vm1084, %v1082, -inf
    %v1261 = vmax.f32 %v1259, %v1260
    %1262 = vmax.xlane.f32.xlu0 %v1261
    %v1263 = vpop.xlane.xlu0 %1262
    %v1264 = vsub.f32 %v975, %v1088
    %v1265 = vsub.f32 %v976, %v1088
    %v1266 = vsub.f32 %v977, %v1088
    %v1267 = vsub.f32 %v978, %v1093
    %v1268 = vsub.f32 %v979, %v1093
    %v1269 = vsub.f32 %v980, %v1093
    %v1270 = vsub.f32 %v981, %v1098
    %v1271 = vsub.f32 %v982, %v1098
    %v1272 = vsub.f32 %v983, %v1098
    %v1273 = vsub.f32 %v984, %v1103
    %v1274 = vsub.f32 %v985, %v1103
    %v1275 = vsub.f32 %v986, %v1103
    %v1276 = vsub.f32 %v987, %v1108
    %v1277 = vsub.f32 %v988, %v1108
    %v1278 = vsub.f32 %v989, %v1108
    %v1279 = vsub.f32 %v990, %v1113
    %v1280 = vsub.f32 %v991, %v1113
    %v1281 = vsub.f32 %v992, %v1113
    %v1282 = vsub.f32 %v993, %v1118
    %v1283 = vsub.f32 %v994, %v1118
    %v1284 = vsub.f32 %v995, %v1118
    %v1285 = vsub.f32 %v996, %v1123
    %v1286 = vsub.f32 %v997, %v1123
    %v1287 = vsub.f32 %v998, %v1123
    %v1288 = vsub.f32 %v999, %v1128
    %v1289 = vsub.f32 %v1000, %v1128
    %v1290 = vsub.f32 %v1001, %v1128
    %v1291 = vsub.f32 %v1002, %v1133
    %v1292 = vsub.f32 %v1003, %v1133
    %v1293 = vsub.f32 %v1004, %v1133
    %v1294 = vsub.f32 %v1005, %v1138
    %v1295 = vsub.f32 %v1006, %v1138
    %v1296 = vsub.f32 %v1007, %v1138
    %v1297 = vsub.f32 %v1008, %v1143
    %v1298 = vsub.f32 %v1009, %v1143
    %v1299 = vsub.f32 %v1010, %v1143
    %v1300 = vsub.f32 %v1011, %v1148
    %v1301 = vsub.f32 %v1012, %v1148
    %v1302 = vsub.f32 %v1013, %v1148
    %v1303 = vsub.f32 %v1014, %v1153
    %v1304 = vsub.f32 %v1015, %v1153
    %v1305 = vsub.f32 %v1016, %v1153
    %v1306 = vsub.f32 %v1017, %v1158
    %v1307 = vsub.f32 %v1018, %v1158
    %v1308 = vsub.f32 %v1019, %v1158
    %v1309 = vsub.f32 %v1020, %v1163
    %v1310 = vsub.f32 %v1021, %v1163
    %v1311 = vsub.f32 %v1022, %v1163
    %v1312 = vsub.f32 %v1023, %v1168
    %v1313 = vsub.f32 %v1024, %v1168
    %v1314 = vsub.f32 %v1025, %v1168
    %v1315 = vsub.f32 %v1026, %v1173
    %v1316 = vsub.f32 %v1027, %v1173
    %v1317 = vsub.f32 %v1028, %v1173
    %v1318 = vsub.f32 %v1029, %v1178
    %v1319 = vsub.f32 %v1030, %v1178
    %v1320 = vsub.f32 %v1031, %v1178
    %v1321 = vsub.f32 %v1032, %v1183
    %v1322 = vsub.f32 %v1033, %v1183
    %v1323 = vsub.f32 %v1034, %v1183
    %v1324 = vsub.f32 %v1035, %v1188
    %v1325 = vsub.f32 %v1036, %v1188
    %v1326 = vsub.f32 %v1037, %v1188
    %v1327 = vsub.f32 %v1038, %v1193
    %v1328 = vsub.f32 %v1039, %v1193
    %v1329 = vsub.f32 %v1040, %v1193
    %v1330 = vsub.f32 %v1041, %v1198
    %v1331 = vsub.f32 %v1042, %v1198
    %v1332 = vsub.f32 %v1043, %v1198
    %v1333 = vsub.f32 %v1044, %v1203
    %v1334 = vsub.f32 %v1045, %v1203
    %v1335 = vsub.f32 %v1046, %v1203
    %v1336 = vsub.f32 %v1047, %v1208
    %v1337 = vsub.f32 %v1048, %v1208
    %v1338 = vsub.f32 %v1049, %v1208
    %v1339 = vsub.f32 %v1050, %v1213
    %v1340 = vsub.f32 %v1051, %v1213
    %v1341 = vsub.f32 %v1052, %v1213
    %v1342 = vsub.f32 %v1053, %v1218
    %v1343 = vsub.f32 %v1054, %v1218
    %v1344 = vsub.f32 %v1055, %v1218
    %v1345 = vsub.f32 %v1056, %v1223
    %v1346 = vsub.f32 %v1057, %v1223
    %v1347 = vsub.f32 %v1058, %v1223
    %v1348 = vsub.f32 %v1059, %v1228
    %v1349 = vsub.f32 %v1060, %v1228
    %v1350 = vsub.f32 %v1061, %v1228
    %v1351 = vsub.f32 %v1062, %v1233
    %v1352 = vsub.f32 %v1063, %v1233
    %v1353 = vsub.f32 %v1064, %v1233
    %v1354 = vsub.f32 %v1065, %v1238
    %v1355 = vsub.f32 %v1066, %v1238
    %v1356 = vsub.f32 %v1067, %v1238
    %v1357 = vsub.f32 %v1068, %v1243
    %v1358 = vsub.f32 %v1069, %v1243
    %v1359 = vsub.f32 %v1070, %v1243
    %v1360 = vsub.f32 %v1071, %v1248
    %v1361 = vsub.f32 %v1072, %v1248
    %v1362 = vsub.f32 %v1073, %v1248
    %v1363 = vsub.f32 %v1074, %v1253
    %v1364 = vsub.f32 %v1075, %v1253
    %v1365 = vsub.f32 %v1076, %v1253
    %v1366 = vsub.f32 %v1077, %v1258
    %v1367 = vsub.f32 %v1078, %v1258
    %v1368 = vsub.f32 %v1079, %v1258
    %v1369 = vsub.f32 %v1080, %v1263
    %v1370 = vsub.f32 %v1081, %v1263
    %v1371 = vsub.f32 %v1082, %v1263
    %v1372 = vmul.f32 %v1264, 1.442695
    %v1373 = vpow.pop %v1372
    %v1374 = vmul.f32 %v1265, 1.442695
    %v1375 = vpow.pop %v1374
    %v1376 = vmul.f32 %v1266, 1.442695
    %v1377 = vpow.pop %v1376
    %v1378 = vmul.f32 %v1267, 1.442695
    %v1379 = vpow.pop %v1378
    %v1380 = vmul.f32 %v1268, 1.442695
    %v1381 = vpow.pop %v1380
    %v1382 = vmul.f32 %v1269, 1.442695
    %v1383 = vpow.pop %v1382
    %v1384 = vmul.f32 %v1270, 1.442695
    %v1385 = vpow.pop %v1384
    %v1386 = vmul.f32 %v1271, 1.442695
    %v1387 = vpow.pop %v1386
    %v1388 = vmul.f32 %v1272, 1.442695
    %v1389 = vpow.pop %v1388
    %v1390 = vmul.f32 %v1273, 1.442695
    %v1391 = vpow.pop %v1390
    %v1392 = vmul.f32 %v1274, 1.442695
    %v1393 = vpow.pop %v1392
    %v1394 = vmul.f32 %v1275, 1.442695
    %v1395 = vpow.pop %v1394
    %v1396 = vmul.f32 %v1276, 1.442695
    %v1397 = vpow.pop %v1396
    %v1398 = vmul.f32 %v1277, 1.442695
    %v1399 = vpow.pop %v1398
    %v1400 = vmul.f32 %v1278, 1.442695
    %v1401 = vpow.pop %v1400
    %v1402 = vmul.f32 %v1279, 1.442695
    %v1403 = vpow.pop %v1402
    %v1404 = vmul.f32 %v1280, 1.442695
    %v1405 = vpow.pop %v1404
    %v1406 = vmul.f32 %v1281, 1.442695
    %v1407 = vpow.pop %v1406
    %v1408 = vmul.f32 %v1282, 1.442695
    %v1409 = vpow.pop %v1408
    %v1410 = vmul.f32 %v1283, 1.442695
    %v1411 = vpow.pop %v1410
    %v1412 = vmul.f32 %v1284, 1.442695
    %v1413 = vpow.pop %v1412
    %v1414 = vmul.f32 %v1285, 1.442695
    %v1415 = vpow.pop %v1414
    %v1416 = vmul.f32 %v1286, 1.442695
    %v1417 = vpow.pop %v1416
    %v1418 = vmul.f32 %v1287, 1.442695
    %v1419 = vpow.pop %v1418
    %v1420 = vmul.f32 %v1288, 1.442695
    %v1421 = vpow.pop %v1420
    %v1422 = vmul.f32 %v1289, 1.442695
    %v1423 = vpow.pop %v1422
    %v1424 = vmul.f32 %v1290, 1.442695
    %v1425 = vpow.pop %v1424
    %v1426 = vmul.f32 %v1291, 1.442695
    %v1427 = vpow.pop %v1426
    %v1428 = vmul.f32 %v1292, 1.442695
    %v1429 = vpow.pop %v1428
    %v1430 = vmul.f32 %v1293, 1.442695
    %v1431 = vpow.pop %v1430
    %v1432 = vmul.f32 %v1294, 1.442695
    %v1433 = vpow.pop %v1432
    %v1434 = vmul.f32 %v1295, 1.442695
    %v1435 = vpow.pop %v1434
    %v1436 = vmul.f32 %v1296, 1.442695
    %v1437 = vpow.pop %v1436
    %v1438 = vmul.f32 %v1297, 1.442695
    %v1439 = vpow.pop %v1438
    %v1440 = vmul.f32 %v1298, 1.442695
    %v1441 = vpow.pop %v1440
    %v1442 = vmul.f32 %v1299, 1.442695
    %v1443 = vpow.pop %v1442
    %v1444 = vmul.f32 %v1300, 1.442695
    %v1445 = vpow.pop %v1444
    %v1446 = vmul.f32 %v1301, 1.442695
    %v1447 = vpow.pop %v1446
    %v1448 = vmul.f32 %v1302, 1.442695
    %v1449 = vpow.pop %v1448
    %v1450 = vmul.f32 %v1303, 1.442695
    %v1451 = vpow.pop %v1450
    %v1452 = vmul.f32 %v1304, 1.442695
    %v1453 = vpow.pop %v1452
    %v1454 = vmul.f32 %v1305, 1.442695
    %v1455 = vpow.pop %v1454
    %v1456 = vmul.f32 %v1306, 1.442695
    %v1457 = vpow.pop %v1456
    %v1458 = vmul.f32 %v1307, 1.442695
    %v1459 = vpow.pop %v1458
    %v1460 = vmul.f32 %v1308, 1.442695
    %v1461 = vpow.pop %v1460
    %v1462 = vmul.f32 %v1309, 1.442695
    %v1463 = vpow.pop %v1462
    %v1464 = vmul.f32 %v1310, 1.442695
    %v1465 = vpow.pop %v1464
    %v1466 = vmul.f32 %v1311, 1.442695
    %v1467 = vpow.pop %v1466
    %v1468 = vmul.f32 %v1312, 1.442695
    %v1469 = vpow.pop %v1468
    %v1470 = vmul.f32 %v1313, 1.442695
    %v1471 = vpow.pop %v1470
    %v1472 = vmul.f32 %v1314, 1.442695
    %v1473 = vpow.pop %v1472
    %v1474 = vmul.f32 %v1315, 1.442695
    %v1475 = vpow.pop %v1474
    %v1476 = vmul.f32 %v1316, 1.442695
    %v1477 = vpow.pop %v1476
    %v1478 = vmul.f32 %v1317, 1.442695
    %v1479 = vpow.pop %v1478
    %v1480 = vmul.f32 %v1318, 1.442695
    %v1481 = vpow.pop %v1480
    %v1482 = vmul.f32 %v1319, 1.442695
    %v1483 = vpow.pop %v1482
    %v1484 = vmul.f32 %v1320, 1.442695
    %v1485 = vpow.pop %v1484
    %v1486 = vmul.f32 %v1321, 1.442695
    %v1487 = vpow.pop %v1486
    %v1488 = vmul.f32 %v1322, 1.442695
    %v1489 = vpow.pop %v1488
    %v1490 = vmul.f32 %v1323, 1.442695
    %v1491 = vpow.pop %v1490
    %v1492 = vmul.f32 %v1324, 1.442695
    %v1493 = vpow.pop %v1492
    %v1494 = vmul.f32 %v1325, 1.442695
    %v1495 = vpow.pop %v1494
    %v1496 = vmul.f32 %v1326, 1.442695
    %v1497 = vpow.pop %v1496
    %v1498 = vmul.f32 %v1327, 1.442695
    %v1499 = vpow.pop %v1498
    %v1500 = vmul.f32 %v1328, 1.442695
    %v1501 = vpow.pop %v1500
    %v1502 = vmul.f32 %v1329, 1.442695
    %v1503 = vpow.pop %v1502
    %v1504 = vmul.f32 %v1330, 1.442695
    %v1505 = vpow.pop %v1504
    %v1506 = vmul.f32 %v1331, 1.442695
    %v1507 = vpow.pop %v1506
    %v1508 = vmul.f32 %v1332, 1.442695
    %v1509 = vpow.pop %v1508
    %v1510 = vmul.f32 %v1333, 1.442695
    %v1511 = vpow.pop %v1510
    %v1512 = vmul.f32 %v1334, 1.442695
    %v1513 = vpow.pop %v1512
    %v1514 = vmul.f32 %v1335, 1.442695
    %v1515 = vpow.pop %v1514
    %v1516 = vmul.f32 %v1336, 1.442695
    %v1517 = vpow.pop %v1516
    %v1518 = vmul.f32 %v1337, 1.442695
    %v1519 = vpow.pop %v1518
    %v1520 = vmul.f32 %v1338, 1.442695
    %v1521 = vpow.pop %v1520
    %v1522 = vmul.f32 %v1339, 1.442695
    %v1523 = vpow.pop %v1522
    %v1524 = vmul.f32 %v1340, 1.442695
    %v1525 = vpow.pop %v1524
    %v1526 = vmul.f32 %v1341, 1.442695
    %v1527 = vpow.pop %v1526
    %v1528 = vmul.f32 %v1342, 1.442695
    %v1529 = vpow.pop %v1528
    %v1530 = vmul.f32 %v1343, 1.442695
    %v1531 = vpow.pop %v1530
    %v1532 = vmul.f32 %v1344, 1.442695
    %v1533 = vpow.pop %v1532
    %v1534 = vmul.f32 %v1345, 1.442695
    %v1535 = vpow.pop %v1534
    %v1536 = vmul.f32 %v1346, 1.442695
    %v1537 = vpow.pop %v1536
    %v1538 = vmul.f32 %v1347, 1.442695
    %v1539 = vpow.pop %v1538
    %v1540 = vmul.f32 %v1348, 1.442695
    %v1541 = vpow.pop %v1540
    %v1542 = vmul.f32 %v1349, 1.442695
    %v1543 = vpow.pop %v1542
    %v1544 = vmul.f32 %v1350, 1.442695
    %v1545 = vpow.pop %v1544
    %v1546 = vmul.f32 %v1351, 1.442695
    %v1547 = vpow.pop %v1546
    %v1548 = vmul.f32 %v1352, 1.442695
    %v1549 = vpow.pop %v1548
    %v1550 = vmul.f32 %v1353, 1.442695
    %v1551 = vpow.pop %v1550
    %v1552 = vmul.f32 %v1354, 1.442695
    %v1553 = vpow.pop %v1552
    %v1554 = vmul.f32 %v1355, 1.442695
    %v1555 = vpow.pop %v1554
    %v1556 = vmul.f32 %v1356, 1.442695
    %v1557 = vpow.pop %v1556
    %v1558 = vmul.f32 %v1357, 1.442695
    %v1559 = vpow.pop %v1558
    %v1560 = vmul.f32 %v1358, 1.442695
    %v1561 = vpow.pop %v1560
    %v1562 = vmul.f32 %v1359, 1.442695
    %v1563 = vpow.pop %v1562
    %v1564 = vmul.f32 %v1360, 1.442695
    %v1565 = vpow.pop %v1564
    %v1566 = vmul.f32 %v1361, 1.442695
    %v1567 = vpow.pop %v1566
    %v1568 = vmul.f32 %v1362, 1.442695
    %v1569 = vpow.pop %v1568
    %v1570 = vmul.f32 %v1363, 1.442695
    %v1571 = vpow.pop %v1570
    %v1572 = vmul.f32 %v1364, 1.442695
    %v1573 = vpow.pop %v1572
    %v1574 = vmul.f32 %v1365, 1.442695
    %v1575 = vpow.pop %v1574
    %v1576 = vmul.f32 %v1366, 1.442695
    %v1577 = vpow.pop %v1576
    %v1578 = vmul.f32 %v1367, 1.442695
    %v1579 = vpow.pop %v1578
    %v1580 = vmul.f32 %v1368, 1.442695
    %v1581 = vpow.pop %v1580
    %v1582 = vmul.f32 %v1369, 1.442695
    %v1583 = vpow.pop %v1582
    %v1584 = vmul.f32 %v1370, 1.442695
    %v1585 = vpow.pop %v1584
    %v1586 = vmul.f32 %v1371, 1.442695
    %v1587 = vpow.pop %v1586
    %v1588 = vadd.f32 %v1373, %v1375
    %v1589 = vsel %vm1084, %v1377, 0.0
    %v1590 = vadd.f32 %v1588, %v1589
    %1591 = vadd.xlane.f32.xlu0 %v1590
    %v1592 = vpop.xlane.xlu0 %1591
    %v1593 = vadd.f32 %v1379, %v1381
    %v1594 = vsel %vm1084, %v1383, 0.0
    %v1595 = vadd.f32 %v1593, %v1594
    %1596 = vadd.xlane.f32.xlu0 %v1595
    %v1597 = vpop.xlane.xlu0 %1596
    %v1598 = vadd.f32 %v1385, %v1387
    %v1599 = vsel %vm1084, %v1389, 0.0
    %v1600 = vadd.f32 %v1598, %v1599
    %1601 = vadd.xlane.f32.xlu0 %v1600
    %v1602 = vpop.xlane.xlu0 %1601
    %v1603 = vadd.f32 %v1391, %v1393
    %v1604 = vsel %vm1084, %v1395, 0.0
    %v1605 = vadd.f32 %v1603, %v1604
    %1606 = vadd.xlane.f32.xlu0 %v1605
    %v1607 = vpop.xlane.xlu0 %1606
    %v1608 = vadd.f32 %v1397, %v1399
    %v1609 = vsel %vm1084, %v1401, 0.0
    %v1610 = vadd.f32 %v1608, %v1609
    %1611 = vadd.xlane.f32.xlu0 %v1610
    %v1612 = vpop.xlane.xlu0 %1611
    %v1613 = vadd.f32 %v1403, %v1405
    %v1614 = vsel %vm1084, %v1407, 0.0
    %v1615 = vadd.f32 %v1613, %v1614
    %1616 = vadd.xlane.f32.xlu0 %v1615
    %v1617 = vpop.xlane.xlu0 %1616
    %v1618 = vadd.f32 %v1409, %v1411
    %v1619 = vsel %vm1084, %v1413, 0.0
    %v1620 = vadd.f32 %v1618, %v1619
    %1621 = vadd.xlane.f32.xlu0 %v1620
    %v1622 = vpop.xlane.xlu0 %1621
    %v1623 = vadd.f32 %v1415, %v1417
    %v1624 = vsel %vm1084, %v1419, 0.0
    %v1625 = vadd.f32 %v1623, %v1624
    %1626 = vadd.xlane.f32.xlu0 %v1625
    %v1627 = vpop.xlane.xlu0 %1626
    %v1628 = vadd.f32 %v1421, %v1423
    %v1629 = vsel %vm1084, %v1425, 0.0
    %v1630 = vadd.f32 %v1628, %v1629
    %1631 = vadd.xlane.f32.xlu0 %v1630
    %v1632 = vpop.xlane.xlu0 %1631
    %v1633 = vadd.f32 %v1427, %v1429
    %v1634 = vsel %vm1084, %v1431, 0.0
    %v1635 = vadd.f32 %v1633, %v1634
    %1636 = vadd.xlane.f32.xlu0 %v1635
    %v1637 = vpop.xlane.xlu0 %1636
    %v1638 = vadd.f32 %v1433, %v1435
    %v1639 = vsel %vm1084, %v1437, 0.0
    %v1640 = vadd.f32 %v1638, %v1639
    %1641 = vadd.xlane.f32.xlu0 %v1640
    %v1642 = vpop.xlane.xlu0 %1641
    %v1643 = vadd.f32 %v1439, %v1441
    %v1644 = vsel %vm1084, %v1443, 0.0
    %v1645 = vadd.f32 %v1643, %v1644
    %1646 = vadd.xlane.f32.xlu0 %v1645
    %v1647 = vpop.xlane.xlu0 %1646
    %v1648 = vadd.f32 %v1445, %v1447
    %v1649 = vsel %vm1084, %v1449, 0.0
    %v1650 = vadd.f32 %v1648, %v1649
    %1651 = vadd.xlane.f32.xlu0 %v1650
    %v1652 = vpop.xlane.xlu0 %1651
    %v1653 = vadd.f32 %v1451, %v1453
    %v1654 = vsel %vm1084, %v1455, 0.0
    %v1655 = vadd.f32 %v1653, %v1654
    %1656 = vadd.xlane.f32.xlu0 %v1655
    %v1657 = vpop.xlane.xlu0 %1656
    %v1658 = vadd.f32 %v1457, %v1459
    %v1659 = vsel %vm1084, %v1461, 0.0
    %v1660 = vadd.f32 %v1658, %v1659
    %1661 = vadd.xlane.f32.xlu0 %v1660
    %v1662 = vpop.xlane.xlu0 %1661
    %v1663 = vadd.f32 %v1463, %v1465
    %v1664 = vsel %vm1084, %v1467, 0.0
    %v1665 = vadd.f32 %v1663, %v1664
    %1666 = vadd.xlane.f32.xlu0 %v1665
    %v1667 = vpop.xlane.xlu0 %1666
    %v1668 = vadd.f32 %v1469, %v1471
    %v1669 = vsel %vm1084, %v1473, 0.0
    %v1670 = vadd.f32 %v1668, %v1669
    %1671 = vadd.xlane.f32.xlu0 %v1670
    %v1672 = vpop.xlane.xlu0 %1671
    %v1673 = vadd.f32 %v1475, %v1477
    %v1674 = vsel %vm1084, %v1479, 0.0
    %v1675 = vadd.f32 %v1673, %v1674
    %1676 = vadd.xlane.f32.xlu0 %v1675
    %v1677 = vpop.xlane.xlu0 %1676
    %v1678 = vadd.f32 %v1481, %v1483
    %v1679 = vsel %vm1084, %v1485, 0.0
    %v1680 = vadd.f32 %v1678, %v1679
    %1681 = vadd.xlane.f32.xlu0 %v1680
    %v1682 = vpop.xlane.xlu0 %1681
    %v1683 = vadd.f32 %v1487, %v1489
    %v1684 = vsel %vm1084, %v1491, 0.0
    %v1685 = vadd.f32 %v1683, %v1684
    %1686 = vadd.xlane.f32.xlu0 %v1685
    %v1687 = vpop.xlane.xlu0 %1686
    %v1688 = vadd.f32 %v1493, %v1495
    %v1689 = vsel %vm1084, %v1497, 0.0
    %v1690 = vadd.f32 %v1688, %v1689
    %1691 = vadd.xlane.f32.xlu0 %v1690
    %v1692 = vpop.xlane.xlu0 %1691
    %v1693 = vadd.f32 %v1499, %v1501
    %v1694 = vsel %vm1084, %v1503, 0.0
    %v1695 = vadd.f32 %v1693, %v1694
    %1696 = vadd.xlane.f32.xlu0 %v1695
    %v1697 = vpop.xlane.xlu0 %1696
    %v1698 = vadd.f32 %v1505, %v1507
    %v1699 = vsel %vm1084, %v1509, 0.0
    %v1700 = vadd.f32 %v1698, %v1699
    %1701 = vadd.xlane.f32.xlu0 %v1700
    %v1702 = vpop.xlane.xlu0 %1701
    %v1703 = vadd.f32 %v1511, %v1513
    %v1704 = vsel %vm1084, %v1515, 0.0
    %v1705 = vadd.f32 %v1703, %v1704
    %1706 = vadd.xlane.f32.xlu0 %v1705
    %v1707 = vpop.xlane.xlu0 %1706
    %v1708 = vadd.f32 %v1517, %v1519
    %v1709 = vsel %vm1084, %v1521, 0.0
    %v1710 = vadd.f32 %v1708, %v1709
    %1711 = vadd.xlane.f32.xlu0 %v1710
    %v1712 = vpop.xlane.xlu0 %1711
    %v1713 = vadd.f32 %v1523, %v1525
    %v1714 = vsel %vm1084, %v1527, 0.0
    %v1715 = vadd.f32 %v1713, %v1714
    %1716 = vadd.xlane.f32.xlu0 %v1715
    %v1717 = vpop.xlane.xlu0 %1716
    %v1718 = vadd.f32 %v1529, %v1531
    %v1719 = vsel %vm1084, %v1533, 0.0
    %v1720 = vadd.f32 %v1718, %v1719
    %1721 = vadd.xlane.f32.xlu0 %v1720
    %v1722 = vpop.xlane.xlu0 %1721
    %v1723 = vadd.f32 %v1535, %v1537
    %v1724 = vsel %vm1084, %v1539, 0.0
    %v1725 = vadd.f32 %v1723, %v1724
    %1726 = vadd.xlane.f32.xlu0 %v1725
    %v1727 = vpop.xlane.xlu0 %1726
    %v1728 = vadd.f32 %v1541, %v1543
    %v1729 = vsel %vm1084, %v1545, 0.0
    %v1730 = vadd.f32 %v1728, %v1729
    %1731 = vadd.xlane.f32.xlu0 %v1730
    %v1732 = vpop.xlane.xlu0 %1731
    %v1733 = vadd.f32 %v1547, %v1549
    %v1734 = vsel %vm1084, %v1551, 0.0
    %v1735 = vadd.f32 %v1733, %v1734
    %1736 = vadd.xlane.f32.xlu0 %v1735
    %v1737 = vpop.xlane.xlu0 %1736
    %v1738 = vadd.f32 %v1553, %v1555
    %v1739 = vsel %vm1084, %v1557, 0.0
    %v1740 = vadd.f32 %v1738, %v1739
    %1741 = vadd.xlane.f32.xlu0 %v1740
    %v1742 = vpop.xlane.xlu0 %1741
    %v1743 = vadd.f32 %v1559, %v1561
    %v1744 = vsel %vm1084, %v1563, 0.0
    %v1745 = vadd.f32 %v1743, %v1744
    %1746 = vadd.xlane.f32.xlu0 %v1745
    %v1747 = vpop.xlane.xlu0 %1746
    %v1748 = vadd.f32 %v1565, %v1567
    %v1749 = vsel %vm1084, %v1569, 0.0
    %v1750 = vadd.f32 %v1748, %v1749
    %1751 = vadd.xlane.f32.xlu0 %v1750
    %v1752 = vpop.xlane.xlu0 %1751
    %v1753 = vadd.f32 %v1571, %v1573
    %v1754 = vsel %vm1084, %v1575, 0.0
    %v1755 = vadd.f32 %v1753, %v1754
    %1756 = vadd.xlane.f32.xlu0 %v1755
    %v1757 = vpop.xlane.xlu0 %1756
    %v1758 = vadd.f32 %v1577, %v1579
    %v1759 = vsel %vm1084, %v1581, 0.0
    %v1760 = vadd.f32 %v1758, %v1759
    %1761 = vadd.xlane.f32.xlu0 %v1760
    %v1762 = vpop.xlane.xlu0 %1761
    %v1763 = vadd.f32 %v1583, %v1585
    %v1764 = vsel %vm1084, %v1587, 0.0
    %v1765 = vadd.f32 %v1763, %v1764
    %1766 = vadd.xlane.f32.xlu0 %v1765
    %v1767 = vpop.xlane.xlu0 %1766
    %v1768 = vlog2.pop %v1592
    %v1769 = vmul.f32 %v1768, 0.6931472
    %v1770 = vlog2.pop %v1597
    %v1771 = vmul.f32 %v1770, 0.6931472
    %v1772 = vlog2.pop %v1602
    %v1773 = vmul.f32 %v1772, 0.6931472
    %v1774 = vlog2.pop %v1607
    %v1775 = vmul.f32 %v1774, 0.6931472
    %v1776 = vlog2.pop %v1612
    %v1777 = vmul.f32 %v1776, 0.6931472
    %v1778 = vlog2.pop %v1617
    %v1779 = vmul.f32 %v1778, 0.6931472
    %v1780 = vlog2.pop %v1622
    %v1781 = vmul.f32 %v1780, 0.6931472
    %v1782 = vlog2.pop %v1627
    %v1783 = vmul.f32 %v1782, 0.6931472
    %v1784 = vlog2.pop %v1632
    %v1785 = vmul.f32 %v1784, 0.6931472
    %v1786 = vlog2.pop %v1637
    %v1787 = vmul.f32 %v1786, 0.6931472
    %v1788 = vlog2.pop %v1642
    %v1789 = vmul.f32 %v1788, 0.6931472
    %v1790 = vlog2.pop %v1647
    %v1791 = vmul.f32 %v1790, 0.6931472
    %v1792 = vlog2.pop %v1652
    %v1793 = vmul.f32 %v1792, 0.6931472
    %v1794 = vlog2.pop %v1657
    %v1795 = vmul.f32 %v1794, 0.6931472
    %v1796 = vlog2.pop %v1662
    %v1797 = vmul.f32 %v1796, 0.6931472
    %v1798 = vlog2.pop %v1667
    %v1799 = vmul.f32 %v1798, 0.6931472
    %v1800 = vlog2.pop %v1672
    %v1801 = vmul.f32 %v1800, 0.6931472
    %v1802 = vlog2.pop %v1677
    %v1803 = vmul.f32 %v1802, 0.6931472
    %v1804 = vlog2.pop %v1682
    %v1805 = vmul.f32 %v1804, 0.6931472
    %v1806 = vlog2.pop %v1687
    %v1807 = vmul.f32 %v1806, 0.6931472
    %v1808 = vlog2.pop %v1692
    %v1809 = vmul.f32 %v1808, 0.6931472
    %v1810 = vlog2.pop %v1697
    %v1811 = vmul.f32 %v1810, 0.6931472
    %v1812 = vlog2.pop %v1702
    %v1813 = vmul.f32 %v1812, 0.6931472
    %v1814 = vlog2.pop %v1707
    %v1815 = vmul.f32 %v1814, 0.6931472
    %v1816 = vlog2.pop %v1712
    %v1817 = vmul.f32 %v1816, 0.6931472
    %v1818 = vlog2.pop %v1717
    %v1819 = vmul.f32 %v1818, 0.6931472
    %v1820 = vlog2.pop %v1722
    %v1821 = vmul.f32 %v1820, 0.6931472
    %v1822 = vlog2.pop %v1727
    %v1823 = vmul.f32 %v1822, 0.6931472
    %v1824 = vlog2.pop %v1732
    %v1825 = vmul.f32 %v1824, 0.6931472
    %v1826 = vlog2.pop %v1737
    %v1827 = vmul.f32 %v1826, 0.6931472
    %v1828 = vlog2.pop %v1742
    %v1829 = vmul.f32 %v1828, 0.6931472
    %v1830 = vlog2.pop %v1747
    %v1831 = vmul.f32 %v1830, 0.6931472
    %v1832 = vlog2.pop %v1752
    %v1833 = vmul.f32 %v1832, 0.6931472
    %v1834 = vlog2.pop %v1757
    %v1835 = vmul.f32 %v1834, 0.6931472
    %v1836 = vlog2.pop %v1762
    %v1837 = vmul.f32 %v1836, 0.6931472
    %v1838 = vlog2.pop %v1767
    %v1839 = vmul.f32 %v1838, 0.6931472
    %v1840 = vadd.f32 %v1088, %v1769
    %v1841 = vadd.f32 %v1093, %v1771
    %v1842 = vadd.f32 %v1098, %v1773
    %v1843 = vadd.f32 %v1103, %v1775
    %v1844 = vadd.f32 %v1108, %v1777
    %v1845 = vadd.f32 %v1113, %v1779
    %v1846 = vadd.f32 %v1118, %v1781
    %v1847 = vadd.f32 %v1123, %v1783
    %v1848 = vadd.f32 %v1128, %v1785
    %v1849 = vadd.f32 %v1133, %v1787
    %v1850 = vadd.f32 %v1138, %v1789
    %v1851 = vadd.f32 %v1143, %v1791
    %v1852 = vadd.f32 %v1148, %v1793
    %v1853 = vadd.f32 %v1153, %v1795
    %v1854 = vadd.f32 %v1158, %v1797
    %v1855 = vadd.f32 %v1163, %v1799
    %v1856 = vadd.f32 %v1168, %v1801
    %v1857 = vadd.f32 %v1173, %v1803
    %v1858 = vadd.f32 %v1178, %v1805
    %v1859 = vadd.f32 %v1183, %v1807
    %v1860 = vadd.f32 %v1188, %v1809
    %v1861 = vadd.f32 %v1193, %v1811
    %v1862 = vadd.f32 %v1198, %v1813
    %v1863 = vadd.f32 %v1203, %v1815
    %v1864 = vadd.f32 %v1208, %v1817
    %v1865 = vadd.f32 %v1213, %v1819
    %v1866 = vadd.f32 %v1218, %v1821
    %v1867 = vadd.f32 %v1223, %v1823
    %v1868 = vadd.f32 %v1228, %v1825
    %v1869 = vadd.f32 %v1233, %v1827
    %v1870 = vadd.f32 %v1238, %v1829
    %v1871 = vadd.f32 %v1243, %v1831
    %v1872 = vadd.f32 %v1248, %v1833
    %v1873 = vadd.f32 %v1253, %v1835
    %v1874 = vadd.f32 %v1258, %v1837
    %v1875 = vadd.f32 %v1263, %v1839
    %v1876 = vxor.u32 %v572, 8
    %v1877 = vxor.u32 %v573, 8
    %v1878 = vxor.u32 %v574, 8
    %v1879 = vxor.u32 %v575, 8
    %v1880 = vxor.u32 %v576, 8
    %v1881 = vxor.u32 %v577, 8
    %v1882 = vxor.u32 %v578, 8
    %v1883 = vxor.u32 %v579, 8
    %v1884 = vxor.u32 %v580, 8
    %v1885 = vxor.u32 %v581, 8
    %v1886 = vxor.u32 %v582, 8
    %v1887 = vxor.u32 %v583, 8
    %v1888 = vxor.u32 %v584, 8
    %v1889 = vxor.u32 %v585, 8
    %v1890 = vxor.u32 %v586, 8
    %v1891 = vxor.u32 %v587, 8
    %v1892 = vxor.u32 %v588, 8
    %v1893 = vxor.u32 %v589, 8
    %v1894 = vxor.u32 %v590, 8
    %v1895 = vxor.u32 %v591, 8
    %v1896 = vxor.u32 %v592, 8
    %v1897 = vxor.u32 %v593, 8
    %v1898 = vxor.u32 %v594, 8
    %v1899 = vxor.u32 %v595, 8
    %v1900 = vxor.u32 %v596, 8
    %v1901 = vxor.u32 %v597, 8
    %v1902 = vxor.u32 %v598, 8
    %v1903 = vxor.u32 %v599, 8
    %v1904 = vxor.u32 %v600, 8
    %v1905 = vxor.u32 %v601, 8
    %v1906 = vxor.u32 %v602, 8
    %v1907 = vxor.u32 %v603, 8
    %v1908 = vxor.u32 %v604, 8
    %v1909 = vxor.u32 %v605, 8
    %v1910 = vxor.u32 %v606, 8
    %v1911 = vxor.u32 %v607, 8
    %vm1912 = vcmp.eq.s32.totalorder %v609, %v1876
    %vm1913 = vcmp.eq.s32.totalorder %v610, %v1876
    %vm1914 = vcmp.eq.s32.totalorder %v611, %v1876
    %vm1915 = vcmp.eq.s32.totalorder %v609, %v1877
    %vm1916 = vcmp.eq.s32.totalorder %v610, %v1877
    %vm1917 = vcmp.eq.s32.totalorder %v611, %v1877
    %vm1918 = vcmp.eq.s32.totalorder %v609, %v1878
    %vm1919 = vcmp.eq.s32.totalorder %v610, %v1878
    %vm1920 = vcmp.eq.s32.totalorder %v611, %v1878
    %vm1921 = vcmp.eq.s32.totalorder %v609, %v1879
    %vm1922 = vcmp.eq.s32.totalorder %v610, %v1879
    %vm1923 = vcmp.eq.s32.totalorder %v611, %v1879
    %vm1924 = vcmp.eq.s32.totalorder %v609, %v1880
    %vm1925 = vcmp.eq.s32.totalorder %v610, %v1880
    %vm1926 = vcmp.eq.s32.totalorder %v611, %v1880
    %vm1927 = vcmp.eq.s32.totalorder %v609, %v1881
    %vm1928 = vcmp.eq.s32.totalorder %v610, %v1881
    %vm1929 = vcmp.eq.s32.totalorder %v611, %v1881
    %vm1930 = vcmp.eq.s32.totalorder %v609, %v1882
    %vm1931 = vcmp.eq.s32.totalorder %v610, %v1882
    %vm1932 = vcmp.eq.s32.totalorder %v611, %v1882
    %vm1933 = vcmp.eq.s32.totalorder %v609, %v1883
    %vm1934 = vcmp.eq.s32.totalorder %v610, %v1883
    %vm1935 = vcmp.eq.s32.totalorder %v611, %v1883
    %vm1936 = vcmp.eq.s32.totalorder %v609, %v1884
    %vm1937 = vcmp.eq.s32.totalorder %v610, %v1884
    %vm1938 = vcmp.eq.s32.totalorder %v611, %v1884
    %vm1939 = vcmp.eq.s32.totalorder %v609, %v1885
    %vm1940 = vcmp.eq.s32.totalorder %v610, %v1885
    %vm1941 = vcmp.eq.s32.totalorder %v611, %v1885
    %vm1942 = vcmp.eq.s32.totalorder %v609, %v1886
    %vm1943 = vcmp.eq.s32.totalorder %v610, %v1886
    %vm1944 = vcmp.eq.s32.totalorder %v611, %v1886
    %vm1945 = vcmp.eq.s32.totalorder %v609, %v1887
    %vm1946 = vcmp.eq.s32.totalorder %v610, %v1887
    %vm1947 = vcmp.eq.s32.totalorder %v611, %v1887
    %vm1948 = vcmp.eq.s32.totalorder %v609, %v1888
    %vm1949 = vcmp.eq.s32.totalorder %v610, %v1888
    %vm1950 = vcmp.eq.s32.totalorder %v611, %v1888
    %vm1951 = vcmp.eq.s32.totalorder %v609, %v1889
    %vm1952 = vcmp.eq.s32.totalorder %v610, %v1889
    %vm1953 = vcmp.eq.s32.totalorder %v611, %v1889
    %vm1954 = vcmp.eq.s32.totalorder %v609, %v1890
    %vm1955 = vcmp.eq.s32.totalorder %v610, %v1890
    %vm1956 = vcmp.eq.s32.totalorder %v611, %v1890
    %vm1957 = vcmp.eq.s32.totalorder %v609, %v1891
    %vm1958 = vcmp.eq.s32.totalorder %v610, %v1891
    %vm1959 = vcmp.eq.s32.totalorder %v611, %v1891
    %vm1960 = vcmp.eq.s32.totalorder %v609, %v1892
    %vm1961 = vcmp.eq.s32.totalorder %v610, %v1892
    %vm1962 = vcmp.eq.s32.totalorder %v611, %v1892
    %vm1963 = vcmp.eq.s32.totalorder %v609, %v1893
    %vm1964 = vcmp.eq.s32.totalorder %v610, %v1893
    %vm1965 = vcmp.eq.s32.totalorder %v611, %v1893
    %vm1966 = vcmp.eq.s32.totalorder %v609, %v1894
    %vm1967 = vcmp.eq.s32.totalorder %v610, %v1894
    %vm1968 = vcmp.eq.s32.totalorder %v611, %v1894
    %vm1969 = vcmp.eq.s32.totalorder %v609, %v1895
    %vm1970 = vcmp.eq.s32.totalorder %v610, %v1895
    %vm1971 = vcmp.eq.s32.totalorder %v611, %v1895
    %vm1972 = vcmp.eq.s32.totalorder %v609, %v1896
    %vm1973 = vcmp.eq.s32.totalorder %v610, %v1896
    %vm1974 = vcmp.eq.s32.totalorder %v611, %v1896
    %vm1975 = vcmp.eq.s32.totalorder %v609, %v1897
    %vm1976 = vcmp.eq.s32.totalorder %v610, %v1897
    %vm1977 = vcmp.eq.s32.totalorder %v611, %v1897
    %vm1978 = vcmp.eq.s32.totalorder %v609, %v1898
    %vm1979 = vcmp.eq.s32.totalorder %v610, %v1898
    %vm1980 = vcmp.eq.s32.totalorder %v611, %v1898
    %vm1981 = vcmp.eq.s32.totalorder %v609, %v1899
    %vm1982 = vcmp.eq.s32.totalorder %v610, %v1899
    %vm1983 = vcmp.eq.s32.totalorder %v611, %v1899
    %vm1984 = vcmp.eq.s32.totalorder %v609, %v1900
    %vm1985 = vcmp.eq.s32.totalorder %v610, %v1900
    %vm1986 = vcmp.eq.s32.totalorder %v611, %v1900
    %vm1987 = vcmp.eq.s32.totalorder %v609, %v1901
    %vm1988 = vcmp.eq.s32.totalorder %v610, %v1901
    %vm1989 = vcmp.eq.s32.totalorder %v611, %v1901
    %vm1990 = vcmp.eq.s32.totalorder %v609, %v1902
    %vm1991 = vcmp.eq.s32.totalorder %v610, %v1902
    %vm1992 = vcmp.eq.s32.totalorder %v611, %v1902
    %vm1993 = vcmp.eq.s32.totalorder %v609, %v1903
    %vm1994 = vcmp.eq.s32.totalorder %v610, %v1903
    %vm1995 = vcmp.eq.s32.totalorder %v611, %v1903
    %vm1996 = vcmp.eq.s32.totalorder %v609, %v1904
    %vm1997 = vcmp.eq.s32.totalorder %v610, %v1904
    %vm1998 = vcmp.eq.s32.totalorder %v611, %v1904
    %vm1999 = vcmp.eq.s32.totalorder %v609, %v1905
    %vm2000 = vcmp.eq.s32.totalorder %v610, %v1905
    %vm2001 = vcmp.eq.s32.totalorder %v611, %v1905
    %vm2002 = vcmp.eq.s32.totalorder %v609, %v1906
    %vm2003 = vcmp.eq.s32.totalorder %v610, %v1906
    %vm2004 = vcmp.eq.s32.totalorder %v611, %v1906
    %vm2005 = vcmp.eq.s32.totalorder %v609, %v1907
    %vm2006 = vcmp.eq.s32.totalorder %v610, %v1907
    %vm2007 = vcmp.eq.s32.totalorder %v611, %v1907
    %vm2008 = vcmp.eq.s32.totalorder %v609, %v1908
    %vm2009 = vcmp.eq.s32.totalorder %v610, %v1908
    %vm2010 = vcmp.eq.s32.totalorder %v611, %v1908
    %vm2011 = vcmp.eq.s32.totalorder %v609, %v1909
    %vm2012 = vcmp.eq.s32.totalorder %v610, %v1909
    %vm2013 = vcmp.eq.s32.totalorder %v611, %v1909
    %vm2014 = vcmp.eq.s32.totalorder %v609, %v1910
    %vm2015 = vcmp.eq.s32.totalorder %v610, %v1910
    %vm2016 = vcmp.eq.s32.totalorder %v611, %v1910
    %vm2017 = vcmp.eq.s32.totalorder %v609, %v1911
    %vm2018 = vcmp.eq.s32.totalorder %v610, %v1911
    %vm2019 = vcmp.eq.s32.totalorder %v611, %v1911
    %v2020 = vsel %vm1912, %v112, 0.0
    %v2021 = vsel %vm1913, %v114, 0.0
    %v2022 = vsel %vm1914, %v393, 0.0
    %v2023 = vsel %vm1915, %v118, 0.0
    %v2024 = vsel %vm1916, %v120, 0.0
    %v2025 = vsel %vm1917, %v398, 0.0
    %v2026 = vsel %vm1918, %v124, 0.0
    %v2027 = vsel %vm1919, %v126, 0.0
    %v2028 = vsel %vm1920, %v403, 0.0
    %v2029 = vsel %vm1921, %v130, 0.0
    %v2030 = vsel %vm1922, %v132, 0.0
    %v2031 = vsel %vm1923, %v408, 0.0
    %v2032 = vsel %vm1924, %v136, 0.0
    %v2033 = vsel %vm1925, %v138, 0.0
    %v2034 = vsel %vm1926, %v413, 0.0
    %v2035 = vsel %vm1927, %v142, 0.0
    %v2036 = vsel %vm1928, %v144, 0.0
    %v2037 = vsel %vm1929, %v418, 0.0
    %v2038 = vsel %vm1930, %v148, 0.0
    %v2039 = vsel %vm1931, %v150, 0.0
    %v2040 = vsel %vm1932, %v423, 0.0
    %v2041 = vsel %vm1933, %v154, 0.0
    %v2042 = vsel %vm1934, %v156, 0.0
    %v2043 = vsel %vm1935, %v428, 0.0
    %v2044 = vsel %vm1936, %v160, 0.0
    %v2045 = vsel %vm1937, %v162, 0.0
    %v2046 = vsel %vm1938, %v433, 0.0
    %v2047 = vsel %vm1939, %v166, 0.0
    %v2048 = vsel %vm1940, %v168, 0.0
    %v2049 = vsel %vm1941, %v438, 0.0
    %v2050 = vsel %vm1942, %v172, 0.0
    %v2051 = vsel %vm1943, %v174, 0.0
    %v2052 = vsel %vm1944, %v443, 0.0
    %v2053 = vsel %vm1945, %v178, 0.0
    %v2054 = vsel %vm1946, %v180, 0.0
    %v2055 = vsel %vm1947, %v448, 0.0
    %v2056 = vsel %vm1948, %v184, 0.0
    %v2057 = vsel %vm1949, %v186, 0.0
    %v2058 = vsel %vm1950, %v453, 0.0
    %v2059 = vsel %vm1951, %v190, 0.0
    %v2060 = vsel %vm1952, %v192, 0.0
    %v2061 = vsel %vm1953, %v458, 0.0
    %v2062 = vsel %vm1954, %v196, 0.0
    %v2063 = vsel %vm1955, %v198, 0.0
    %v2064 = vsel %vm1956, %v463, 0.0
    %v2065 = vsel %vm1957, %v202, 0.0
    %v2066 = vsel %vm1958, %v204, 0.0
    %v2067 = vsel %vm1959, %v468, 0.0
    %v2068 = vsel %vm1960, %v208, 0.0
    %v2069 = vsel %vm1961, %v210, 0.0
    %v2070 = vsel %vm1962, %v473, 0.0
    %v2071 = vsel %vm1963, %v214, 0.0
    %v2072 = vsel %vm1964, %v216, 0.0
    %v2073 = vsel %vm1965, %v478, 0.0
    %v2074 = vsel %vm1966, %v220, 0.0
    %v2075 = vsel %vm1967, %v222, 0.0
    %v2076 = vsel %vm1968, %v483, 0.0
    %v2077 = vsel %vm1969, %v226, 0.0
    %v2078 = vsel %vm1970, %v228, 0.0
    %v2079 = vsel %vm1971, %v488, 0.0
    %v2080 = vsel %vm1972, %v232, 0.0
    %v2081 = vsel %vm1973, %v234, 0.0
    %v2082 = vsel %vm1974, %v493, 0.0
    %v2083 = vsel %vm1975, %v238, 0.0
    %v2084 = vsel %vm1976, %v240, 0.0
    %v2085 = vsel %vm1977, %v498, 0.0
    %v2086 = vsel %vm1978, %v244, 0.0
    %v2087 = vsel %vm1979, %v246, 0.0
    %v2088 = vsel %vm1980, %v503, 0.0
    %v2089 = vsel %vm1981, %v250, 0.0
    %v2090 = vsel %vm1982, %v252, 0.0
    %v2091 = vsel %vm1983, %v508, 0.0
    %v2092 = vsel %vm1984, %v256, 0.0
    %v2093 = vsel %vm1985, %v258, 0.0
    %v2094 = vsel %vm1986, %v513, 0.0
    %v2095 = vsel %vm1987, %v262, 0.0
    %v2096 = vsel %vm1988, %v264, 0.0
    %v2097 = vsel %vm1989, %v518, 0.0
    %v2098 = vsel %vm1990, %v268, 0.0
    %v2099 = vsel %vm1991, %v270, 0.0
    %v2100 = vsel %vm1992, %v523, 0.0
    %v2101 = vsel %vm1993, %v274, 0.0
    %v2102 = vsel %vm1994, %v276, 0.0
    %v2103 = vsel %vm1995, %v528, 0.0
    %v2104 = vsel %vm1996, %v280, 0.0
    %v2105 = vsel %vm1997, %v282, 0.0
    %v2106 = vsel %vm1998, %v533, 0.0
    %v2107 = vsel %vm1999, %v286, 0.0
    %v2108 = vsel %vm2000, %v288, 0.0
    %v2109 = vsel %vm2001, %v538, 0.0
    %v2110 = vsel %vm2002, %v292, 0.0
    %v2111 = vsel %vm2003, %v294, 0.0
    %v2112 = vsel %vm2004, %v543, 0.0
    %v2113 = vsel %vm2005, %v298, 0.0
    %v2114 = vsel %vm2006, %v300, 0.0
    %v2115 = vsel %vm2007, %v548, 0.0
    %v2116 = vsel %vm2008, %v304, 0.0
    %v2117 = vsel %vm2009, %v306, 0.0
    %v2118 = vsel %vm2010, %v553, 0.0
    %v2119 = vsel %vm2011, %v310, 0.0
    %v2120 = vsel %vm2012, %v312, 0.0
    %v2121 = vsel %vm2013, %v558, 0.0
    %v2122 = vsel %vm2014, %v316, 0.0
    %v2123 = vsel %vm2015, %v318, 0.0
    %v2124 = vsel %vm2016, %v563, 0.0
    %v2125 = vsel %vm2017, %v322, 0.0
    %v2126 = vsel %vm2018, %v324, 0.0
    %v2127 = vsel %vm2019, %v568, 0.0
    %v2128 = vadd.f32 %v2020, %v2021
    %v2129 = vsel %vm1084, %v2022, 0.0
    %v2130 = vadd.f32 %v2128, %v2129
    %2131 = vadd.xlane.f32.xlu0 %v2130
    %v2132 = vpop.xlane.xlu0 %2131
    %v2133 = vadd.f32 %v2023, %v2024
    %v2134 = vsel %vm1084, %v2025, 0.0
    %v2135 = vadd.f32 %v2133, %v2134
    %2136 = vadd.xlane.f32.xlu0 %v2135
    %v2137 = vpop.xlane.xlu0 %2136
    %v2138 = vadd.f32 %v2026, %v2027
    %v2139 = vsel %vm1084, %v2028, 0.0
    %v2140 = vadd.f32 %v2138, %v2139
    %2141 = vadd.xlane.f32.xlu0 %v2140
    %v2142 = vpop.xlane.xlu0 %2141
    %v2143 = vadd.f32 %v2029, %v2030
    %v2144 = vsel %vm1084, %v2031, 0.0
    %v2145 = vadd.f32 %v2143, %v2144
    %2146 = vadd.xlane.f32.xlu0 %v2145
    %v2147 = vpop.xlane.xlu0 %2146
    %v2148 = vadd.f32 %v2032, %v2033
    %v2149 = vsel %vm1084, %v2034, 0.0
    %v2150 = vadd.f32 %v2148, %v2149
    %2151 = vadd.xlane.f32.xlu0 %v2150
    %v2152 = vpop.xlane.xlu0 %2151
    %v2153 = vadd.f32 %v2035, %v2036
    %v2154 = vsel %vm1084, %v2037, 0.0
    %v2155 = vadd.f32 %v2153, %v2154
    %2156 = vadd.xlane.f32.xlu0 %v2155
    %v2157 = vpop.xlane.xlu0 %2156
    %v2158 = vadd.f32 %v2038, %v2039
    %v2159 = vsel %vm1084, %v2040, 0.0
    %v2160 = vadd.f32 %v2158, %v2159
    %2161 = vadd.xlane.f32.xlu0 %v2160
    %v2162 = vpop.xlane.xlu0 %2161
    %v2163 = vadd.f32 %v2041, %v2042
    %v2164 = vsel %vm1084, %v2043, 0.0
    %v2165 = vadd.f32 %v2163, %v2164
    %2166 = vadd.xlane.f32.xlu0 %v2165
    %v2167 = vpop.xlane.xlu0 %2166
    %v2168 = vadd.f32 %v2044, %v2045
    %v2169 = vsel %vm1084, %v2046, 0.0
    %v2170 = vadd.f32 %v2168, %v2169
    %2171 = vadd.xlane.f32.xlu0 %v2170
    %v2172 = vpop.xlane.xlu0 %2171
    %v2173 = vadd.f32 %v2047, %v2048
    %v2174 = vsel %vm1084, %v2049, 0.0
    %v2175 = vadd.f32 %v2173, %v2174
    %2176 = vadd.xlane.f32.xlu0 %v2175
    %v2177 = vpop.xlane.xlu0 %2176
    %v2178 = vadd.f32 %v2050, %v2051
    %v2179 = vsel %vm1084, %v2052, 0.0
    %v2180 = vadd.f32 %v2178, %v2179
    %2181 = vadd.xlane.f32.xlu0 %v2180
    %v2182 = vpop.xlane.xlu0 %2181
    %v2183 = vadd.f32 %v2053, %v2054
    %v2184 = vsel %vm1084, %v2055, 0.0
    %v2185 = vadd.f32 %v2183, %v2184
    %2186 = vadd.xlane.f32.xlu0 %v2185
    %v2187 = vpop.xlane.xlu0 %2186
    %v2188 = vadd.f32 %v2056, %v2057
    %v2189 = vsel %vm1084, %v2058, 0.0
    %v2190 = vadd.f32 %v2188, %v2189
    %2191 = vadd.xlane.f32.xlu0 %v2190
    %v2192 = vpop.xlane.xlu0 %2191
    %v2193 = vadd.f32 %v2059, %v2060
    %v2194 = vsel %vm1084, %v2061, 0.0
    %v2195 = vadd.f32 %v2193, %v2194
    %2196 = vadd.xlane.f32.xlu0 %v2195
    %v2197 = vpop.xlane.xlu0 %2196
    %v2198 = vadd.f32 %v2062, %v2063
    %v2199 = vsel %vm1084, %v2064, 0.0
    %v2200 = vadd.f32 %v2198, %v2199
    %2201 = vadd.xlane.f32.xlu0 %v2200
    %v2202 = vpop.xlane.xlu0 %2201
    %v2203 = vadd.f32 %v2065, %v2066
    %v2204 = vsel %vm1084, %v2067, 0.0
    %v2205 = vadd.f32 %v2203, %v2204
    %2206 = vadd.xlane.f32.xlu0 %v2205
    %v2207 = vpop.xlane.xlu0 %2206
    %v2208 = vadd.f32 %v2068, %v2069
    %v2209 = vsel %vm1084, %v2070, 0.0
    %v2210 = vadd.f32 %v2208, %v2209
    %2211 = vadd.xlane.f32.xlu0 %v2210
    %v2212 = vpop.xlane.xlu0 %2211
    %v2213 = vadd.f32 %v2071, %v2072
    %v2214 = vsel %vm1084, %v2073, 0.0
    %v2215 = vadd.f32 %v2213, %v2214
    %2216 = vadd.xlane.f32.xlu0 %v2215
    %v2217 = vpop.xlane.xlu0 %2216
    %v2218 = vadd.f32 %v2074, %v2075
    %v2219 = vsel %vm1084, %v2076, 0.0
    %v2220 = vadd.f32 %v2218, %v2219
    %2221 = vadd.xlane.f32.xlu0 %v2220
    %v2222 = vpop.xlane.xlu0 %2221
    %v2223 = vadd.f32 %v2077, %v2078
    %v2224 = vsel %vm1084, %v2079, 0.0
    %v2225 = vadd.f32 %v2223, %v2224
    %2226 = vadd.xlane.f32.xlu0 %v2225
    %v2227 = vpop.xlane.xlu0 %2226
    %v2228 = vadd.f32 %v2080, %v2081
    %v2229 = vsel %vm1084, %v2082, 0.0
    %v2230 = vadd.f32 %v2228, %v2229
    %2231 = vadd.xlane.f32.xlu0 %v2230
    %v2232 = vpop.xlane.xlu0 %2231
    %v2233 = vadd.f32 %v2083, %v2084
    %v2234 = vsel %vm1084, %v2085, 0.0
    %v2235 = vadd.f32 %v2233, %v2234
    %2236 = vadd.xlane.f32.xlu0 %v2235
    %v2237 = vpop.xlane.xlu0 %2236
    %v2238 = vadd.f32 %v2086, %v2087
    %v2239 = vsel %vm1084, %v2088, 0.0
    %v2240 = vadd.f32 %v2238, %v2239
    %2241 = vadd.xlane.f32.xlu0 %v2240
    %v2242 = vpop.xlane.xlu0 %2241
    %v2243 = vadd.f32 %v2089, %v2090
    %v2244 = vsel %vm1084, %v2091, 0.0
    %v2245 = vadd.f32 %v2243, %v2244
    %2246 = vadd.xlane.f32.xlu0 %v2245
    %v2247 = vpop.xlane.xlu0 %2246
    %v2248 = vadd.f32 %v2092, %v2093
    %v2249 = vsel %vm1084, %v2094, 0.0
    %v2250 = vadd.f32 %v2248, %v2249
    %2251 = vadd.xlane.f32.xlu0 %v2250
    %v2252 = vpop.xlane.xlu0 %2251
    %v2253 = vadd.f32 %v2095, %v2096
    %v2254 = vsel %vm1084, %v2097, 0.0
    %v2255 = vadd.f32 %v2253, %v2254
    %2256 = vadd.xlane.f32.xlu0 %v2255
    %v2257 = vpop.xlane.xlu0 %2256
    %v2258 = vadd.f32 %v2098, %v2099
    %v2259 = vsel %vm1084, %v2100, 0.0
    %v2260 = vadd.f32 %v2258, %v2259
    %2261 = vadd.xlane.f32.xlu0 %v2260
    %v2262 = vpop.xlane.xlu0 %2261
    %v2263 = vadd.f32 %v2101, %v2102
    %v2264 = vsel %vm1084, %v2103, 0.0
    %v2265 = vadd.f32 %v2263, %v2264
    %2266 = vadd.xlane.f32.xlu0 %v2265
    %v2267 = vpop.xlane.xlu0 %2266
    %v2268 = vadd.f32 %v2104, %v2105
    %v2269 = vsel %vm1084, %v2106, 0.0
    %v2270 = vadd.f32 %v2268, %v2269
    %2271 = vadd.xlane.f32.xlu0 %v2270
    %v2272 = vpop.xlane.xlu0 %2271
    %v2273 = vadd.f32 %v2107, %v2108
    %v2274 = vsel %vm1084, %v2109, 0.0
    %v2275 = vadd.f32 %v2273, %v2274
    %2276 = vadd.xlane.f32.xlu0 %v2275
    %v2277 = vpop.xlane.xlu0 %2276
    %v2278 = vadd.f32 %v2110, %v2111
    %v2279 = vsel %vm1084, %v2112, 0.0
    %v2280 = vadd.f32 %v2278, %v2279
    %2281 = vadd.xlane.f32.xlu0 %v2280
    %v2282 = vpop.xlane.xlu0 %2281
    %v2283 = vadd.f32 %v2113, %v2114
    %v2284 = vsel %vm1084, %v2115, 0.0
    %v2285 = vadd.f32 %v2283, %v2284
    %2286 = vadd.xlane.f32.xlu0 %v2285
    %v2287 = vpop.xlane.xlu0 %2286
    %v2288 = vadd.f32 %v2116, %v2117
    %v2289 = vsel %vm1084, %v2118, 0.0
    %v2290 = vadd.f32 %v2288, %v2289
    %2291 = vadd.xlane.f32.xlu0 %v2290
    %v2292 = vpop.xlane.xlu0 %2291
    %v2293 = vadd.f32 %v2119, %v2120
    %v2294 = vsel %vm1084, %v2121, 0.0
    %v2295 = vadd.f32 %v2293, %v2294
    %2296 = vadd.xlane.f32.xlu0 %v2295
    %v2297 = vpop.xlane.xlu0 %2296
    %v2298 = vadd.f32 %v2122, %v2123
    %v2299 = vsel %vm1084, %v2124, 0.0
    %v2300 = vadd.f32 %v2298, %v2299
    %2301 = vadd.xlane.f32.xlu0 %v2300
    %v2302 = vpop.xlane.xlu0 %2301
    %v2303 = vadd.f32 %v2125, %v2126
    %v2304 = vsel %vm1084, %v2127, 0.0
    %v2305 = vadd.f32 %v2303, %v2304
    %2306 = vadd.xlane.f32.xlu0 %v2305
    %v2307 = vpop.xlane.xlu0 %2306
    %v2308 = vsub.f32 %v1840, %v2132
    %v2309 = vsub.f32 %v1841, %v2137
    %v2310 = vsub.f32 %v1842, %v2142
    %v2311 = vsub.f32 %v1843, %v2147
    %v2312 = vsub.f32 %v1844, %v2152
    %v2313 = vsub.f32 %v1845, %v2157
    %v2314 = vsub.f32 %v1846, %v2162
    %v2315 = vsub.f32 %v1847, %v2167
    %v2316 = vsub.f32 %v1848, %v2172
    %v2317 = vsub.f32 %v1849, %v2177
    %v2318 = vsub.f32 %v1850, %v2182
    %v2319 = vsub.f32 %v1851, %v2187
    %v2320 = vsub.f32 %v1852, %v2192
    %v2321 = vsub.f32 %v1853, %v2197
    %v2322 = vsub.f32 %v1854, %v2202
    %v2323 = vsub.f32 %v1855, %v2207
    %v2324 = vsub.f32 %v1856, %v2212
    %v2325 = vsub.f32 %v1857, %v2217
    %v2326 = vsub.f32 %v1858, %v2222
    %v2327 = vsub.f32 %v1859, %v2227
    %v2328 = vsub.f32 %v1860, %v2232
    %v2329 = vsub.f32 %v1861, %v2237
    %v2330 = vsub.f32 %v1862, %v2242
    %v2331 = vsub.f32 %v1863, %v2247
    %v2332 = vsub.f32 %v1864, %v2252
    %v2333 = vsub.f32 %v1865, %v2257
    %v2334 = vsub.f32 %v1866, %v2262
    %v2335 = vsub.f32 %v1867, %v2267
    %v2336 = vsub.f32 %v1868, %v2272
    %v2337 = vsub.f32 %v1869, %v2277
    %v2338 = vsub.f32 %v1870, %v2282
    %v2339 = vsub.f32 %v1871, %v2287
    %v2340 = vsub.f32 %v1872, %v2292
    %v2341 = vsub.f32 %v1873, %v2297
    %v2342 = vsub.f32 %v1874, %v2302
    %v2343 = vsub.f32 %v1875, %v2307
    %vm2344 = vcmask 7168
    %v2345 = vsel %vm2344, %v2308, 0.0
    %v2346 = vsel %vm2344, %v2309, 0.0
    %v2347 = vadd.f32 %v2345, %v2346
    %v2348 = vsel %vm2344, %v2310, 0.0
    %v2349 = vadd.f32 %v2347, %v2348
    %v2350 = vsel %vm2344, %v2311, 0.0
    %v2351 = vadd.f32 %v2349, %v2350
    %v2352 = vsel %vm2344, %v2312, 0.0
    %v2353 = vadd.f32 %v2351, %v2352
    %v2354 = vsel %vm2344, %v2313, 0.0
    %v2355 = vadd.f32 %v2353, %v2354
    %v2356 = vsel %vm2344, %v2314, 0.0
    %v2357 = vadd.f32 %v2355, %v2356
    %v2358 = vsel %vm2344, %v2315, 0.0
    %v2359 = vadd.f32 %v2357, %v2358
    %v2360 = vsel %vm2344, %v2316, 0.0
    %v2361 = vadd.f32 %v2359, %v2360
    %v2362 = vsel %vm2344, %v2317, 0.0
    %v2363 = vadd.f32 %v2361, %v2362
    %v2364 = vsel %vm2344, %v2318, 0.0
    %v2365 = vadd.f32 %v2363, %v2364
    %v2366 = vsel %vm2344, %v2319, 0.0
    %v2367 = vadd.f32 %v2365, %v2366
    %v2368 = vsel %vm2344, %v2320, 0.0
    %v2369 = vadd.f32 %v2367, %v2368
    %v2370 = vsel %vm2344, %v2321, 0.0
    %v2371 = vadd.f32 %v2369, %v2370
    %v2372 = vsel %vm2344, %v2322, 0.0
    %v2373 = vadd.f32 %v2371, %v2372
    %v2374 = vsel %vm2344, %v2323, 0.0
    %v2375 = vadd.f32 %v2373, %v2374
    %v2376 = vsel %vm2344, %v2324, 0.0
    %v2377 = vadd.f32 %v2375, %v2376
    %v2378 = vsel %vm2344, %v2325, 0.0
    %v2379 = vadd.f32 %v2377, %v2378
    %v2380 = vsel %vm2344, %v2326, 0.0
    %v2381 = vadd.f32 %v2379, %v2380
    %v2382 = vsel %vm2344, %v2327, 0.0
    %v2383 = vadd.f32 %v2381, %v2382
    %v2384 = vsel %vm2344, %v2328, 0.0
    %v2385 = vadd.f32 %v2383, %v2384
    %v2386 = vsel %vm2344, %v2329, 0.0
    %v2387 = vadd.f32 %v2385, %v2386
    %v2388 = vsel %vm2344, %v2330, 0.0
    %v2389 = vadd.f32 %v2387, %v2388
    %v2390 = vsel %vm2344, %v2331, 0.0
    %v2391 = vadd.f32 %v2389, %v2390
    %v2392 = vsel %vm2344, %v2332, 0.0
    %v2393 = vadd.f32 %v2391, %v2392
    %v2394 = vsel %vm2344, %v2333, 0.0
    %v2395 = vadd.f32 %v2393, %v2394
    %v2396 = vsel %vm2344, %v2334, 0.0
    %v2397 = vadd.f32 %v2395, %v2396
    %v2398 = vsel %vm2344, %v2335, 0.0
    %v2399 = vadd.f32 %v2397, %v2398
    %v2400 = vsel %vm2344, %v2336, 0.0
    %v2401 = vadd.f32 %v2399, %v2400
    %v2402 = vsel %vm2344, %v2337, 0.0
    %v2403 = vadd.f32 %v2401, %v2402
    %v2404 = vsel %vm2344, %v2338, 0.0
    %v2405 = vadd.f32 %v2403, %v2404
    %v2406 = vsel %vm2344, %v2339, 0.0
    %v2407 = vadd.f32 %v2405, %v2406
    %v2408 = vsel %vm2344, %v2340, 0.0
    %v2409 = vadd.f32 %v2407, %v2408
    %v2410 = vsel %vm2344, %v2341, 0.0
    %v2411 = vadd.f32 %v2409, %v2410
    %v2412 = vsel %vm2344, %v2342, 0.0
    %v2413 = vadd.f32 %v2411, %v2412
    %v2414 = vsel %vm2344, %v2343, 0.0
    %v2415 = vadd.f32 %v2413, %v2414
    %2416 = vadd.xlane.f32.xlu0 %v2415
    %v2417 = vpop.xlane.xlu0 %2416
    %v2418 = vrot.slane %v2417, 4
    %v2419 = vadd.f32 %v2417, %v2418
    %v2420 = vrot.slane %v2419, 2
    %v2421 = vadd.f32 %v2419, %v2420
    %v2422 = vrot.slane %v2421, 1
    %v2423 = vadd.f32 %v2421, %v2422
    %s2424 = vtos %v2423
    %v2425 = vrcp.pop 144.0
    %s2426 = vtos %v2425
    %s2427 = smul.f32 %s2424, %s2426
    %s2428 = scalar_lea.smem [#allocation2], 0
    %2429 = sst [smem:[%s2428]] %s2427
    // Predicated region
    $region6: #{_cost_forward.3} parent=1 // pred_check
      _
    $region7: #{_cost_forward.3} parent=1 // pred_check_branch
      %2431 = sbr.rel (0) target = $region9
    $region8: #{_cost_forward.3} parent=1 // pred_region
      %s2433 = ssub.s32 16, 16
      %2434 = vsyncadd [#allocation3], %s2433
      %2437 = dma.smem_to_hbm [#allocation2], 16, %s1, [#allocation3]
    $region9: #{_cost_forward.3} parent=1 // pred_fallthru
      _
    // Predicated region
    $region10: #{_cost_forward.3} parent=1 // pred_check
      _
    $region11: #{_cost_forward.3} parent=1 // pred_check_branch
      %2439 = sbr.rel (0) target = $region13
    $region12: #{_cost_forward.3} parent=1 // pred_region
      %2440 = dma.done [#allocation3], 16
    $region13: #{_cost_forward.3} parent=1 // pred_fallthru
      _
    %2441 = sfence
    %2442 = vsyncpa [#allocation3], 1

</llo_original>
